<compile_context>
chip_gen: v7x
topology: tpu7x:2x2x1
jax: 0.10.0
libtpu: 0.0.40
codegen_flags: <defaults>
</compile_context>

<pallas_src>
import functools

import jax
import jax.numpy as jnp
import numpy as np
from jax import lax
from jax.experimental import pallas as pl
from jax.experimental.pallas import tpu as pltpu


def _round_up(x, m):
    return ((x + m - 1) // m) * m


# ----------------------------------------------------------------------------
# Pallas kernels
# ----------------------------------------------------------------------------
def _matmul_bias_act_kernel(a_ref, b_ref, bias_ref, o_ref, *, apply_relu):
    """o = act(a @ b + bias).  Grid = (M tiles, N tiles, K tiles).

    The f32 output block is resident across the K axis and doubles as the
    accumulator (no scratch).  A/B tiles are bf16; the MXU accumulates in f32.
    """
    k = pl.program_id(2)

    @pl.when(k == 0)
    def _():
        o_ref[...] = jnp.zeros_like(o_ref)

    o_ref[...] += jnp.dot(a_ref[...], b_ref[...],
                          preferred_element_type=jnp.float32)

    @pl.when(k == pl.num_programs(2) - 1)
    def _():
        r = o_ref[...] + bias_ref[...]            # (1, tn) bias broadcasts
        if apply_relu:
            r = jnp.maximum(r, 0.0)
        o_ref[...] = r


def _avgpool_kernel(x_ref, o_ref):
    """Mean over the spatial axis: x block (B, S, Ct) -> o block (B, Ct)."""
    o_ref[...] = jnp.mean(x_ref[...], axis=1)


# ----------------------------------------------------------------------------
# Wrappers
# ----------------------------------------------------------------------------
def matmul_bias_act(a, w, bias, apply_relu):
    """a: (M, K), w: (K, N), bias: (N,) -> (M, N) float32 (bf16 MXU inputs)."""
    M, K = a.shape
    Kw, N = w.shape
    assert K == Kw

    # --- tile selection -------------------------------------------------
    tm = min(256, _round_up(M, 16))          # cap M tile; scales to big batches
    Mp = _round_up(M, tm)

    Np = _round_up(N, 128)
    tn = 256 if Np % 256 == 0 else 128

    if K % 128 == 0:
        Kp = K
        tk = next(t for t in (512, 256, 128) if Kp % t == 0)
    elif K <= 1024:
        Kp, tk = K, K                        # full-extent K block (conv1 K=48)
    else:
        Kp = _round_up(K, 128)
        tk = 128

    # --- pad only when needed; cast GEMM inputs to bf16 ------------------
    a_p = a.astype(jnp.bfloat16)
    if (Mp, Kp) != (M, K):
        a_p = jnp.pad(a_p, ((0, Mp - M), (0, Kp - K)))
    w_p = w.astype(jnp.bfloat16)
    if (Kp, Np) != (K, N):
        w_p = jnp.pad(w_p, ((0, Kp - K), (0, Np - N)))
    b_p = bias.astype(jnp.float32)
    if Np != N:
        b_p = jnp.pad(b_p, (0, Np - N))
    b_p = b_p.reshape(1, Np)

    grid = (Mp // tm, Np // tn, Kp // tk)

    out = pl.pallas_call(
        functools.partial(_matmul_bias_act_kernel, apply_relu=apply_relu),
        out_shape=jax.ShapeDtypeStruct((Mp, Np), jnp.float32),
        grid_spec=pltpu.PrefetchScalarGridSpec(
            num_scalar_prefetch=0,
            grid=grid,
            in_specs=[
                pl.BlockSpec((tm, tk), lambda i, j, k: (i, k)),
                pl.BlockSpec((tk, tn), lambda i, j, k: (k, j)),
                pl.BlockSpec((1, tn), lambda i, j, k: (0, j)),
            ],
            out_specs=pl.BlockSpec((tm, tn), lambda i, j, k: (i, j)),
        ),
        compiler_params=pltpu.CompilerParams(
            dimension_semantics=("parallel", "parallel", "arbitrary")),
    )(a_p, w_p, b_p)

    if (Mp, Np) != (M, N):
        out = out[:M, :N]
    return out


def _im2col_nhwc(x, kh, kw, stride):
    """x: NHWC -> patches (B*OH*OW, KH*KW*C) with (KH, KW, C)-major ordering."""
    B, H, W, C = x.shape
    oh = (H - kh) // stride + 1
    ow = (W - kw) // stride + 1
    cols = []
    for i in range(kh):
        for j in range(kw):
            cols.append(x[:, i:i + stride * oh:stride,
                          j:j + stride * ow:stride, :])
    p = jnp.stack(cols, axis=3)                  # (B, OH, OW, KH*KW, C)
    p = p.reshape(B * oh * ow, kh * kw * C)
    return p, oh, ow


def conv2d_nhwc(x, w, b, stride, apply_relu):
    """x: NHWC, w: (OC, IC, KH, KW) [PyTorch layout], b: (OC,) -> NHWC (f32)."""
    B, H, W, C = x.shape
    OC, IC, KH, KW = w.shape
    # Cast activations to bf16 *before* patch extraction: halves patch traffic.
    patches, oh, ow = _im2col_nhwc(x.astype(jnp.bfloat16), KH, KW, stride)
    # Re-flatten weights to (KH, KW, IC)-major K ordering to match the patches.
    w2d = w.transpose(2, 3, 1, 0).reshape(KH * KW * IC, OC)
    out = matmul_bias_act(patches, w2d, b, apply_relu)   # (B*OH*OW, OC) f32
    return out.reshape(B, oh, ow, OC)                    # no transpose needed


def adaptive_avg_pool_nhwc(x):
    """x: NHWC float32 -> (B, C) via a channel-tiled Pallas mean reduction."""
    B, H, W, C = x.shape
    S = H * W
    xs = x.reshape(B, S, C)
    tc = next((t for t in (512, 256, 128) if C % t == 0), C)
    return pl.pallas_call(
        _avgpool_kernel,
        out_shape=jax.ShapeDtypeStruct((B, C), jnp.float32),
        grid=(C // tc,),
        in_specs=[pl.BlockSpec((B, S, tc), lambda c: (0, 0, c))],
        out_specs=pl.BlockSpec((B, tc), lambda c: (0, c)),
    )(xs)


# ----------------------------------------------------------------------------
# Model
# ----------------------------------------------------------------------------
def init_params(key, num_class=100):
    ks = jax.random.split(key, 8)

    def conv_w(k, oc, ic, kh, kw):
        fan_in = ic * kh * kw
        return jax.random.normal(k, (oc, ic, kh, kw), jnp.float32) / np.sqrt(fan_in)

    return {
        "w1": conv_w(ks[0], 256, 3, 4, 4),
        "b1": 0.01 * jax.random.normal(ks[1], (256,), jnp.float32),
        "w2": conv_w(ks[2], 512, 256, 3, 3),
        "b2": 0.01 * jax.random.normal(ks[3], (512,), jnp.float32),
        "w3": conv_w(ks[4], 1024, 512, 3, 3),
        "b3": 0.01 * jax.random.normal(ks[5], (1024,), jnp.float32),
        "wl": jax.random.normal(ks[6], (num_class, 1024), jnp.float32) / np.sqrt(1024),
        "bl": 0.01 * jax.random.normal(ks[7], (num_class,), jnp.float32),
    }


def cnn_forward(params, x):
    """x: (B, 3, H, W) NCHW float32 -> logits (B, num_class)."""
    h = jnp.transpose(x, (0, 2, 3, 1))                       # NCHW -> NHWC once
    h = conv2d_nhwc(h, params["w1"], params["b1"], stride=2, apply_relu=True)
    h = conv2d_nhwc(h, params["w2"], params["b2"], stride=1, apply_relu=True)
    h = conv2d_nhwc(h, params["w3"], params["b3"], stride=1, apply_relu=True)
    pooled = adaptive_avg_pool_nhwc(h)                       # (B, 1024) f32
    logits = matmul_bias_act(pooled, params["wl"].T, params["bl"],
                             apply_relu=False)               # (B, num_class)
    return logits


# ----------------------------------------------------------------------------
# Pure-JAX reference (sanity check)
# ----------------------------------------------------------------------------
def cnn_reference(params, x):
    dn = ("NCHW", "OIHW", "NCHW")
    hp = lax.Precision.HIGHEST

    def conv(h, w, b, s):
        y = lax.conv_general_dilated(h, w, (s, s), "VALID",
                                     dimension_numbers=dn, precision=hp)
        return jnp.maximum(y + b[None, :, None, None], 0.0)

    h = conv(x, params["w1"], params["b1"], 2)
    h = conv(h, params["w2"], params["b2"], 1)
    h = conv(h, params["w3"], params["b3"], 1)
    pooled = jnp.mean(h, axis=(2, 3))
    return jnp.dot(pooled, params["wl"].T, precision=hp) + params["bl"]


# ----------------------------------------------------------------------------
if __name__ == "__main__":
    key = jax.random.PRNGKey(0)
    pkey, xkey = jax.random.split(key)

    num_class = 100
    params = init_params(pkey, num_class=num_class)

    # Small input consistent with the module: batch=2, 3 channels, 16x16.
    x = jax.random.normal(xkey, (2, 3, 16, 16), jnp.float32)

    fwd = jax.jit(cnn_forward)
    logits = jax.block_until_ready(fwd(params, x))
    assert logits.shape == (2, num_class), logits.shape

    ref = jax.block_until_ready(jax.jit(cnn_reference)(params, x))
    np.testing.assert_allclose(np.asarray(logits), np.asarray(ref),
                               rtol=5e-2, atol=5e-2)

    print("KERNEL_OK")
</pallas_src>

<mosaic_0001>
module attributes {stable_mosaic.version = 11 : i64} {
  func.func @_matmul_bias_act_kernel(%arg0: i32, %arg1: i32, %arg2: i32, %arg3: memref<112x48xbf16, #tpu.memory_space<vmem>>, %arg4: memref<48x256xbf16, #tpu.memory_space<vmem>>, %arg5: memref<1x256xf32, #tpu.memory_space<vmem>>, %arg6: memref<112x256xf32, #tpu.memory_space<vmem>>) attributes {dimension_semantics = [#tpu.dimension_semantics<parallel>, #tpu.dimension_semantics<parallel>, #tpu.dimension_semantics<arbitrary>], iteration_bounds = array<i64: 1, 1, 1>, scalar_prefetch = 0 : i64, scratch_operands = 0 : i64, tpu.core_type = #tpu.core_type<tc>, window_params = [{transform_indices = @transform_0, window_bounds = array<i64: 112, 48>}, {transform_indices = @transform_1, window_bounds = array<i64: 48, 256>}, {transform_indices = @transform_2, window_bounds = array<i64: 1, 256>}, {transform_indices = @transform_3, window_bounds = array<i64: 112, 256>}]} {
    %c0_i32 = arith.constant 0 : i32
    %0 = arith.cmpi eq, %arg2, %c0_i32 : i32
    %1 = arith.extui %0 : i1 to i32
    %c0_i32_0 = arith.constant 0 : i32
    %2 = arith.cmpi ne, %1, %c0_i32_0 : i32
    scf.if %2 {
      %cst_10 = arith.constant 0.000000e+00 : f32
      %12 = vector.broadcast %cst_10 : f32 to vector<112x256xf32>
      %c0_11 = arith.constant 0 : index
      %c0_12 = arith.constant 0 : index
      %13 = vector.load %arg6[%c0_11, %c0_12] : memref<112x256xf32, #tpu.memory_space<vmem>>, vector<112x256xf32>
      tpu.vector_store %arg6[%c0_11, %c0_12], %12 {strides = array<i32>} : memref<112x256xf32, #tpu.memory_space<vmem>>, vector<112x256xf32>,
    } else {
    }
    %c0 = arith.constant 0 : index
    %c0_1 = arith.constant 0 : index
    %3 = vector.load %arg6[%c0, %c0_1] : memref<112x256xf32, #tpu.memory_space<vmem>>, vector<112x256xf32>
    %c0_2 = arith.constant 0 : index
    %c0_3 = arith.constant 0 : index
    %4 = vector.load %arg3[%c0_2, %c0_3] : memref<112x48xbf16, #tpu.memory_space<vmem>>, vector<112x48xbf16>
    %c0_4 = arith.constant 0 : index
    %c0_5 = arith.constant 0 : index
    %5 = vector.load %arg4[%c0_4, %c0_5] : memref<48x256xbf16, #tpu.memory_space<vmem>>, vector<48x256xbf16>
    %cst = arith.constant dense<0.000000e+00> : vector<112x256xf32>
    %6 = tpu.matmul %4, %5, %cst {dimension_numbers = #tpu.dot_dimension_numbers<[1], [0], [0], [1], [0, 0, 1, 1], [], []>} : vector<112x48xbf16>, vector<48x256xbf16>, vector<112x256xf32> -> vector<112x256xf32>
    %7 = arith.addf %3, %6 : vector<112x256xf32>
    %c0_6 = arith.constant 0 : index
    %c0_7 = arith.constant 0 : index
    %8 = vector.load %arg6[%c0_6, %c0_7] : memref<112x256xf32, #tpu.memory_space<vmem>>, vector<112x256xf32>
    tpu.vector_store %arg6[%c0_6, %c0_7], %7 {strides = array<i32>} : memref<112x256xf32, #tpu.memory_space<vmem>>, vector<112x256xf32>,
    %c0_i32_8 = arith.constant 0 : i32
    %9 = arith.cmpi eq, %arg2, %c0_i32_8 : i32
    %10 = arith.extui %9 : i1 to i32
    %c0_i32_9 = arith.constant 0 : i32
    %11 = arith.cmpi ne, %10, %c0_i32_9 : i32
    scf.if %11 {
      %c0_10 = arith.constant 0 : index
      %c0_11 = arith.constant 0 : index
      %12 = vector.load %arg6[%c0_10, %c0_11] : memref<112x256xf32, #tpu.memory_space<vmem>>, vector<112x256xf32>
      %c0_12 = arith.constant 0 : index
      %c0_13 = arith.constant 0 : index
      %13 = vector.load %arg5[%c0_12, %c0_13] : memref<1x256xf32, #tpu.memory_space<vmem>>, vector<1x256xf32>
      %14 = vector.broadcast %13 : vector<1x256xf32> to vector<112x256xf32>
      %15 = arith.addf %12, %14 : vector<112x256xf32>
      %cst_14 = arith.constant 0.000000e+00 : f32
      %16 = vector.broadcast %cst_14 : f32 to vector<112x256xf32>
      %17 = arith.maximumf %15, %16 : vector<112x256xf32>
      %c0_15 = arith.constant 0 : index
      %c0_16 = arith.constant 0 : index
      %18 = vector.load %arg6[%c0_15, %c0_16] : memref<112x256xf32, #tpu.memory_space<vmem>>, vector<112x256xf32>
      tpu.vector_store %arg6[%c0_15, %c0_16], %17 {strides = array<i32>} : memref<112x256xf32, #tpu.memory_space<vmem>>, vector<112x256xf32>,
    } else {
    }
    return
  }
  func.func @transform_0(%arg0: i32, %arg1: i32, %arg2: i32) -> (i32, i32) {
    %c0_i32 = arith.constant 0 : i32
    return %arg0, %arg2 : i32, i32
  }
  func.func @transform_1(%arg0: i32, %arg1: i32, %arg2: i32) -> (i32, i32) {
    %c0_i32 = arith.constant 0 : i32
    return %arg2, %arg1 : i32, i32
  }
  func.func @transform_2(%arg0: i32, %arg1: i32, %arg2: i32) -> (i32, i32) {
    %c0_i32 = arith.constant 0 : i32
    %c0_i32_0 = arith.constant 0 : i32
    return %c0_i32, %arg1 : i32, i32
  }
  func.func @transform_3(%arg0: i32, %arg1: i32, %arg2: i32) -> (i32, i32) {
    %c0_i32 = arith.constant 0 : i32
    return %arg0, %arg1 : i32, i32
  }
}

module attributes {stable_mosaic.version = 11 : i64} {
  func.func @_matmul_bias_act_kernel(%arg0: i32, %arg1: i32, %arg2: i32, %arg3: memref<64x256xbf16, #tpu.memory_space<vmem>>, %arg4: memref<256x256xbf16, #tpu.memory_space<vmem>>, %arg5: memref<1x256xf32, #tpu.memory_space<vmem>>, %arg6: memref<64x256xf32, #tpu.memory_space<vmem>>) attributes {dimension_semantics = [#tpu.dimension_semantics<parallel>, #tpu.dimension_semantics<parallel>, #tpu.dimension_semantics<arbitrary>], iteration_bounds = array<i64: 1, 2, 9>, scalar_prefetch = 0 : i64, scratch_operands = 0 : i64, tpu.core_type = #tpu.core_type<tc>, window_params = [{transform_indices = @transform_0, window_bounds = array<i64: 64, 256>}, {transform_indices = @transform_1, window_bounds = array<i64: 256, 256>}, {transform_indices = @transform_2, window_bounds = array<i64: 1, 256>}, {transform_indices = @transform_3, window_bounds = array<i64: 64, 256>}]} {
    %c0_i32 = arith.constant 0 : i32
    %0 = arith.cmpi eq, %arg2, %c0_i32 : i32
    %1 = arith.extui %0 : i1 to i32
    %c0_i32_0 = arith.constant 0 : i32
    %2 = arith.cmpi ne, %1, %c0_i32_0 : i32
    scf.if %2 {
      %cst_9 = arith.constant 0.000000e+00 : f32
      %12 = vector.broadcast %cst_9 : f32 to vector<64x256xf32>
      %c0_10 = arith.constant 0 : index
      %c0_11 = arith.constant 0 : index
      %13 = vector.load %arg6[%c0_10, %c0_11] : memref<64x256xf32, #tpu.memory_space<vmem>>, vector<64x256xf32>
      tpu.vector_store %arg6[%c0_10, %c0_11], %12 {strides = array<i32>} : memref<64x256xf32, #tpu.memory_space<vmem>>, vector<64x256xf32>,
    } else {
    }
    %c0 = arith.constant 0 : index
    %c0_1 = arith.constant 0 : index
    %3 = vector.load %arg6[%c0, %c0_1] : memref<64x256xf32, #tpu.memory_space<vmem>>, vector<64x256xf32>
    %c0_2 = arith.constant 0 : index
    %c0_3 = arith.constant 0 : index
    %4 = vector.load %arg3[%c0_2, %c0_3] : memref<64x256xbf16, #tpu.memory_space<vmem>>, vector<64x256xbf16>
    %c0_4 = arith.constant 0 : index
    %c0_5 = arith.constant 0 : index
    %5 = vector.load %arg4[%c0_4, %c0_5] : memref<256x256xbf16, #tpu.memory_space<vmem>>, vector<256x256xbf16>
    %cst = arith.constant dense<0.000000e+00> : vector<64x256xf32>
    %6 = tpu.matmul %4, %5, %cst {dimension_numbers = #tpu.dot_dimension_numbers<[1], [0], [0], [1], [0, 0, 1, 1], [], []>} : vector<64x256xbf16>, vector<256x256xbf16>, vector<64x256xf32> -> vector<64x256xf32>
    %7 = arith.addf %3, %6 : vector<64x256xf32>
    %c0_6 = arith.constant 0 : index
    %c0_7 = arith.constant 0 : index
    %8 = vector.load %arg6[%c0_6, %c0_7] : memref<64x256xf32, #tpu.memory_space<vmem>>, vector<64x256xf32>
    tpu.vector_store %arg6[%c0_6, %c0_7], %7 {strides = array<i32>} : memref<64x256xf32, #tpu.memory_space<vmem>>, vector<64x256xf32>,
    %c8_i32 = arith.constant 8 : i32
    %9 = arith.cmpi eq, %arg2, %c8_i32 : i32
    %10 = arith.extui %9 : i1 to i32
    %c0_i32_8 = arith.constant 0 : i32
    %11 = arith.cmpi ne, %10, %c0_i32_8 : i32
    scf.if %11 {
      %c0_9 = arith.constant 0 : index
      %c0_10 = arith.constant 0 : index
      %12 = vector.load %arg6[%c0_9, %c0_10] : memref<64x256xf32, #tpu.memory_space<vmem>>, vector<64x256xf32>
      %c0_11 = arith.constant 0 : index
      %c0_12 = arith.constant 0 : index
      %13 = vector.load %arg5[%c0_11, %c0_12] : memref<1x256xf32, #tpu.memory_space<vmem>>, vector<1x256xf32>
      %14 = vector.broadcast %13 : vector<1x256xf32> to vector<64x256xf32>
      %15 = arith.addf %12, %14 : vector<64x256xf32>
      %cst_13 = arith.constant 0.000000e+00 : f32
      %16 = vector.broadcast %cst_13 : f32 to vector<64x256xf32>
      %17 = arith.maximumf %15, %16 : vector<64x256xf32>
      %c0_14 = arith.constant 0 : index
      %c0_15 = arith.constant 0 : index
      %18 = vector.load %arg6[%c0_14, %c0_15] : memref<64x256xf32, #tpu.memory_space<vmem>>, vector<64x256xf32>
      tpu.vector_store %arg6[%c0_14, %c0_15], %17 {strides = array<i32>} : memref<64x256xf32, #tpu.memory_space<vmem>>, vector<64x256xf32>,
    } else {
    }
    return
  }
  func.func @transform_0(%arg0: i32, %arg1: i32, %arg2: i32) -> (i32, i32) {
    %c0_i32 = arith.constant 0 : i32
    return %arg0, %arg2 : i32, i32
  }
  func.func @transform_1(%arg0: i32, %arg1: i32, %arg2: i32) -> (i32, i32) {
    %c0_i32 = arith.constant 0 : i32
    return %arg2, %arg1 : i32, i32
  }
  func.func @transform_2(%arg0: i32, %arg1: i32, %arg2: i32) -> (i32, i32) {
    %c0_i32 = arith.constant 0 : i32
    %c0_i32_0 = arith.constant 0 : i32
    return %c0_i32, %arg1 : i32, i32
  }
  func.func @transform_3(%arg0: i32, %arg1: i32, %arg2: i32) -> (i32, i32) {
    %c0_i32 = arith.constant 0 : i32
    return %arg0, %arg1 : i32, i32
  }
}

module attributes {stable_mosaic.version = 11 : i64} {
  func.func @_matmul_bias_act_kernel(%arg0: i32, %arg1: i32, %arg2: i32, %arg3: memref<32x512xbf16, #tpu.memory_space<vmem>>, %arg4: memref<512x256xbf16, #tpu.memory_space<vmem>>, %arg5: memref<1x256xf32, #tpu.memory_space<vmem>>, %arg6: memref<32x256xf32, #tpu.memory_space<vmem>>) attributes {dimension_semantics = [#tpu.dimension_semantics<parallel>, #tpu.dimension_semantics<parallel>, #tpu.dimension_semantics<arbitrary>], iteration_bounds = array<i64: 1, 4, 9>, scalar_prefetch = 0 : i64, scratch_operands = 0 : i64, tpu.core_type = #tpu.core_type<tc>, window_params = [{transform_indices = @transform_0, window_bounds = array<i64: 32, 512>}, {transform_indices = @transform_1, window_bounds = array<i64: 512, 256>}, {transform_indices = @transform_2, window_bounds = array<i64: 1, 256>}, {transform_indices = @transform_3, window_bounds = array<i64: 32, 256>}]} {
    %c0_i32 = arith.constant 0 : i32
    %0 = arith.cmpi eq, %arg2, %c0_i32 : i32
    %1 = arith.extui %0 : i1 to i32
    %c0_i32_0 = arith.constant 0 : i32
    %2 = arith.cmpi ne, %1, %c0_i32_0 : i32
    scf.if %2 {
      %cst_9 = arith.constant 0.000000e+00 : f32
      %12 = vector.broadcast %cst_9 : f32 to vector<32x256xf32>
      %c0_10 = arith.constant 0 : index
      %c0_11 = arith.constant 0 : index
      %13 = vector.load %arg6[%c0_10, %c0_11] : memref<32x256xf32, #tpu.memory_space<vmem>>, vector<32x256xf32>
      tpu.vector_store %arg6[%c0_10, %c0_11], %12 {strides = array<i32>} : memref<32x256xf32, #tpu.memory_space<vmem>>, vector<32x256xf32>,
    } else {
    }
    %c0 = arith.constant 0 : index
    %c0_1 = arith.constant 0 : index
    %3 = vector.load %arg6[%c0, %c0_1] : memref<32x256xf32, #tpu.memory_space<vmem>>, vector<32x256xf32>
    %c0_2 = arith.constant 0 : index
    %c0_3 = arith.constant 0 : index
    %4 = vector.load %arg3[%c0_2, %c0_3] : memref<32x512xbf16, #tpu.memory_space<vmem>>, vector<32x512xbf16>
    %c0_4 = arith.constant 0 : index
    %c0_5 = arith.constant 0 : index
    %5 = vector.load %arg4[%c0_4, %c0_5] : memref<512x256xbf16, #tpu.memory_space<vmem>>, vector<512x256xbf16>
    %cst = arith.constant dense<0.000000e+00> : vector<32x256xf32>
    %6 = tpu.matmul %4, %5, %cst {dimension_numbers = #tpu.dot_dimension_numbers<[1], [0], [0], [1], [0, 0, 1, 1], [], []>} : vector<32x512xbf16>, vector<512x256xbf16>, vector<32x256xf32> -> vector<32x256xf32>
    %7 = arith.addf %3, %6 : vector<32x256xf32>
    %c0_6 = arith.constant 0 : index
    %c0_7 = arith.constant 0 : index
    %8 = vector.load %arg6[%c0_6, %c0_7] : memref<32x256xf32, #tpu.memory_space<vmem>>, vector<32x256xf32>
    tpu.vector_store %arg6[%c0_6, %c0_7], %7 {strides = array<i32>} : memref<32x256xf32, #tpu.memory_space<vmem>>, vector<32x256xf32>,
    %c8_i32 = arith.constant 8 : i32
    %9 = arith.cmpi eq, %arg2, %c8_i32 : i32
    %10 = arith.extui %9 : i1 to i32
    %c0_i32_8 = arith.constant 0 : i32
    %11 = arith.cmpi ne, %10, %c0_i32_8 : i32
    scf.if %11 {
      %c0_9 = arith.constant 0 : index
      %c0_10 = arith.constant 0 : index
      %12 = vector.load %arg6[%c0_9, %c0_10] : memref<32x256xf32, #tpu.memory_space<vmem>>, vector<32x256xf32>
      %c0_11 = arith.constant 0 : index
      %c0_12 = arith.constant 0 : index
      %13 = vector.load %arg5[%c0_11, %c0_12] : memref<1x256xf32, #tpu.memory_space<vmem>>, vector<1x256xf32>
      %14 = vector.broadcast %13 : vector<1x256xf32> to vector<32x256xf32>
      %15 = arith.addf %12, %14 : vector<32x256xf32>
      %cst_13 = arith.constant 0.000000e+00 : f32
      %16 = vector.broadcast %cst_13 : f32 to vector<32x256xf32>
      %17 = arith.maximumf %15, %16 : vector<32x256xf32>
      %c0_14 = arith.constant 0 : index
      %c0_15 = arith.constant 0 : index
      %18 = vector.load %arg6[%c0_14, %c0_15] : memref<32x256xf32, #tpu.memory_space<vmem>>, vector<32x256xf32>
      tpu.vector_store %arg6[%c0_14, %c0_15], %17 {strides = array<i32>} : memref<32x256xf32, #tpu.memory_space<vmem>>, vector<32x256xf32>,
    } else {
    }
    return
  }
  func.func @transform_0(%arg0: i32, %arg1: i32, %arg2: i32) -> (i32, i32) {
    %c0_i32 = arith.constant 0 : i32
    return %arg0, %arg2 : i32, i32
  }
  func.func @transform_1(%arg0: i32, %arg1: i32, %arg2: i32) -> (i32, i32) {
    %c0_i32 = arith.constant 0 : i32
    return %arg2, %arg1 : i32, i32
  }
  func.func @transform_2(%arg0: i32, %arg1: i32, %arg2: i32) -> (i32, i32) {
    %c0_i32 = arith.constant 0 : i32
    %c0_i32_0 = arith.constant 0 : i32
    return %c0_i32, %arg1 : i32, i32
  }
  func.func @transform_3(%arg0: i32, %arg1: i32, %arg2: i32) -> (i32, i32) {
    %c0_i32 = arith.constant 0 : i32
    return %arg0, %arg1 : i32, i32
  }
}

module attributes {stable_mosaic.version = 11 : i64} {
  func.func @_avgpool_kernel(%arg0: i32, %arg1: memref<2x9x512xf32, #tpu.memory_space<vmem>>, %arg2: memref<2x512xf32, #tpu.memory_space<vmem>>) attributes {dimension_semantics = [#tpu.dimension_semantics<arbitrary>], iteration_bounds = array<i64: 2>, scalar_prefetch = 0 : i64, scratch_operands = 0 : i64, tpu.core_type = #tpu.core_type<tc>, window_params = [{transform_indices = @transform_0, window_bounds = array<i64: 2, 9, 512>}, {transform_indices = @transform_1, window_bounds = array<i64: 2, 512>}]} {
    %c0 = arith.constant 0 : index
    %c0_0 = arith.constant 0 : index
    %c0_1 = arith.constant 0 : index
    %0 = vector.load %arg1[%c0, %c0_0, %c0_1] : memref<2x9x512xf32, #tpu.memory_space<vmem>>, vector<2x9x512xf32>
    %cst = arith.constant dense<0.000000e+00> : vector<2x512xf32>
    %1 = vector.multi_reduction <add>, %0, %cst [1] : vector<2x9x512xf32> to vector<2x512xf32>
    %cst_2 = arith.constant 9.000000e+00 : f32
    %2 = vector.broadcast %cst_2 : f32 to vector<2x512xf32>
    %3 = arith.divf %1, %2 : vector<2x512xf32>
    %c0_3 = arith.constant 0 : index
    %c0_4 = arith.constant 0 : index
    %4 = vector.load %arg2[%c0_3, %c0_4] : memref<2x512xf32, #tpu.memory_space<vmem>>, vector<2x512xf32>
    tpu.vector_store %arg2[%c0_3, %c0_4], %3 {strides = array<i32>} : memref<2x512xf32, #tpu.memory_space<vmem>>, vector<2x512xf32>,
    return
  }
  func.func @transform_0(%arg0: i32) -> (i32, i32, i32) {
    %c0_i32 = arith.constant 0 : i32
    %c0_i32_0 = arith.constant 0 : i32
    %c0_i32_1 = arith.constant 0 : i32
    return %c0_i32, %c0_i32_0, %arg0 : i32, i32, i32
  }
  func.func @transform_1(%arg0: i32) -> (i32, i32) {
    %c0_i32 = arith.constant 0 : i32
    %c0_i32_0 = arith.constant 0 : i32
    return %c0_i32, %arg0 : i32, i32
  }
}

module attributes {stable_mosaic.version = 11 : i64} {
  func.func @_matmul_bias_act_kernel(%arg0: i32, %arg1: i32, %arg2: i32, %arg3: memref<16x512xbf16, #tpu.memory_space<vmem>>, %arg4: memref<512x128xbf16, #tpu.memory_space<vmem>>, %arg5: memref<1x128xf32, #tpu.memory_space<vmem>>, %arg6: memref<16x128xf32, #tpu.memory_space<vmem>>) attributes {dimension_semantics = [#tpu.dimension_semantics<parallel>, #tpu.dimension_semantics<parallel>, #tpu.dimension_semantics<arbitrary>], iteration_bounds = array<i64: 1, 1, 2>, scalar_prefetch = 0 : i64, scratch_operands = 0 : i64, tpu.core_type = #tpu.core_type<tc>, window_params = [{transform_indices = @transform_0, window_bounds = array<i64: 16, 512>}, {transform_indices = @transform_1, window_bounds = array<i64: 512, 128>}, {transform_indices = @transform_2, window_bounds = array<i64: 1, 128>}, {transform_indices = @transform_3, window_bounds = array<i64: 16, 128>}]} {
    %c0_i32 = arith.constant 0 : i32
    %0 = arith.cmpi eq, %arg2, %c0_i32 : i32
    %1 = arith.extui %0 : i1 to i32
    %c0_i32_0 = arith.constant 0 : i32
    %2 = arith.cmpi ne, %1, %c0_i32_0 : i32
    scf.if %2 {
      %cst_9 = arith.constant 0.000000e+00 : f32
      %12 = vector.broadcast %cst_9 : f32 to vector<16x128xf32>
      %c0_10 = arith.constant 0 : index
      %c0_11 = arith.constant 0 : index
      %13 = vector.load %arg6[%c0_10, %c0_11] : memref<16x128xf32, #tpu.memory_space<vmem>>, vector<16x128xf32>
      tpu.vector_store %arg6[%c0_10, %c0_11], %12 {strides = array<i32>} : memref<16x128xf32, #tpu.memory_space<vmem>>, vector<16x128xf32>,
    } else {
    }
    %c0 = arith.constant 0 : index
    %c0_1 = arith.constant 0 : index
    %3 = vector.load %arg6[%c0, %c0_1] : memref<16x128xf32, #tpu.memory_space<vmem>>, vector<16x128xf32>
    %c0_2 = arith.constant 0 : index
    %c0_3 = arith.constant 0 : index
    %4 = vector.load %arg3[%c0_2, %c0_3] : memref<16x512xbf16, #tpu.memory_space<vmem>>, vector<16x512xbf16>
    %c0_4 = arith.constant 0 : index
    %c0_5 = arith.constant 0 : index
    %5 = vector.load %arg4[%c0_4, %c0_5] : memref<512x128xbf16, #tpu.memory_space<vmem>>, vector<512x128xbf16>
    %cst = arith.constant dense<0.000000e+00> : vector<16x128xf32>
    %6 = tpu.matmul %4, %5, %cst {dimension_numbers = #tpu.dot_dimension_numbers<[1], [0], [0], [1], [0, 0, 1, 1], [], []>} : vector<16x512xbf16>, vector<512x128xbf16>, vector<16x128xf32> -> vector<16x128xf32>
    %7 = arith.addf %3, %6 : vector<16x128xf32>
    %c0_6 = arith.constant 0 : index
    %c0_7 = arith.constant 0 : index
    %8 = vector.load %arg6[%c0_6, %c0_7] : memref<16x128xf32, #tpu.memory_space<vmem>>, vector<16x128xf32>
    tpu.vector_store %arg6[%c0_6, %c0_7], %7 {strides = array<i32>} : memref<16x128xf32, #tpu.memory_space<vmem>>, vector<16x128xf32>,
    %c1_i32 = arith.constant 1 : i32
    %9 = arith.cmpi eq, %arg2, %c1_i32 : i32
    %10 = arith.extui %9 : i1 to i32
    %c0_i32_8 = arith.constant 0 : i32
    %11 = arith.cmpi ne, %10, %c0_i32_8 : i32
    scf.if %11 {
      %c0_9 = arith.constant 0 : index
      %c0_10 = arith.constant 0 : index
      %12 = vector.load %arg6[%c0_9, %c0_10] : memref<16x128xf32, #tpu.memory_space<vmem>>, vector<16x128xf32>
      %c0_11 = arith.constant 0 : index
      %c0_12 = arith.constant 0 : index
      %13 = vector.load %arg5[%c0_11, %c0_12] : memref<1x128xf32, #tpu.memory_space<vmem>>, vector<1x128xf32>
      %14 = vector.broadcast %13 : vector<1x128xf32> to vector<16x128xf32>
      %15 = arith.addf %12, %14 : vector<16x128xf32>
      %c0_13 = arith.constant 0 : index
      %c0_14 = arith.constant 0 : index
      %16 = vector.load %arg6[%c0_13, %c0_14] : memref<16x128xf32, #tpu.memory_space<vmem>>, vector<16x128xf32>
      tpu.vector_store %arg6[%c0_13, %c0_14], %15 {strides = array<i32>} : memref<16x128xf32, #tpu.memory_space<vmem>>, vector<16x128xf32>,
    } else {
    }
    return
  }
  func.func @transform_0(%arg0: i32, %arg1: i32, %arg2: i32) -> (i32, i32) {
    %c0_i32 = arith.constant 0 : i32
    return %arg0, %arg2 : i32, i32
  }
  func.func @transform_1(%arg0: i32, %arg1: i32, %arg2: i32) -> (i32, i32) {
    %c0_i32 = arith.constant 0 : i32
    return %arg2, %arg1 : i32, i32
  }
  func.func @transform_2(%arg0: i32, %arg1: i32, %arg2: i32) -> (i32, i32) {
    %c0_i32 = arith.constant 0 : i32
    %c0_i32_0 = arith.constant 0 : i32
    return %c0_i32, %arg1 : i32, i32
  }
  func.func @transform_3(%arg0: i32, %arg1: i32, %arg2: i32) -> (i32, i32) {
    %c0_i32 = arith.constant 0 : i32
    return %arg0, %arg1 : i32, i32
  }
}

</mosaic_0001>

<llo_original>
// kernel: cnn_forward.5
$region0: #{cnn_forward.5}
  #allocation0 [shape = 'u32[]', space=smem, size = 0x4, offset = 0x4, fixed_abs, tag = 'smem constant byte address 0x4 - core index']
  #allocation1 [shape = 'u32[144,128]{1,0:T(1,128)}', space=vmem, size = 0x12000, scoped, tag = 'internal scratch']
  %s0 = inlined_call_operand.vmem [shape: bf16[112,48], index: 0, kind: input, shape index: {}]
  %s1 = inlined_call_operand.vmem [shape: bf16[48,256], index: 1, kind: input, shape index: {}]
  %s2 = inlined_call_operand.hbm [shape: f32[1,256], index: 2, kind: input, shape index: {}]
  %s3 = inlined_call_operand.vmem [shape: f32[112,256], index: 3, kind: output, shape index: {}]
  %s4 = sld [smem:[#allocation0]]
  $region34: #{cnn_forward.5} parent=0
    _
  %s6 = ssub.s32 1, %s4
  %s7 = scalar_select 0, %s6, %s4
  $region1: #{cnn_forward.5} parent=0
    #allocation2 [shape = 'u8[1024]{0}', space=vmem, size = 0x400, scoped, tag = 'input window, operand 2, single buffered']
    #allocation3 [shape = 's32[1]{0}', space=sflag, size = 0x4, scoped, tag = 'scoped memory for cnn_forward.5']
    %8 = vsyncpa [#allocation3], 0
    // Predicated region
    $region2: #{cnn_forward.5} parent=1 // pred_check
      _
    $region3: #{cnn_forward.5} parent=1 // pred_check_branch
      %10 = sbr.rel (0) target = $region5
    $region4: #{cnn_forward.5} parent=1 // pred_region
      _
    $region5: #{cnn_forward.5} parent=1 // pred_fallthru
      _
    // Predicated region
    $region6: #{cnn_forward.5} parent=1 // pred_check
      _
    $region7: #{cnn_forward.5} parent=1 // pred_check_branch
      %12 = sbr.rel (0) target = $region9
    $region8: #{cnn_forward.5} parent=1 // pred_region
      _
    $region9: #{cnn_forward.5} parent=1 // pred_fallthru
      _
    // Predicated region
    $region10: #{cnn_forward.5} parent=1 // pred_check
      _
    $region11: #{cnn_forward.5} parent=1 // pred_check_branch
      %14 = sbr.rel (0) target = $region13
    $region12: #{cnn_forward.5} parent=1 // pred_region
      %s16 = ssub.s32 32, 32
      %17 = vsyncadd [#allocation3], %s16
      %s19 = sshll.u32 [#allocation2], 4
      %s20 = int_to_ptr.vmem [resolvable:$true] %s19
      %22 = dma.hbm_to_vmem [thread:$0]  %s2, 32, %s20, [#allocation3]
    $region13: #{cnn_forward.5} parent=1 // pred_fallthru
      _
    // Predicated region
    $region14: #{cnn_forward.5} parent=1 // pred_check
      _
    $region15: #{cnn_forward.5} parent=1 // pred_check_branch
      %24 = sbr.rel (0) target = $region17
    $region16: #{cnn_forward.5} parent=1 // pred_region
      %25 = dma.done [#allocation3], 32
    $region17: #{cnn_forward.5} parent=1 // pred_fallthru
      _
    %p27 = scmp.eq.s32.totalorder 0, 0
    // Predicated region
    $region18: #{cnn_forward.5} parent=1 // pred_check
      %p28 = pneg %p27
    $region19: #{cnn_forward.5} parent=1 // pred_check_branch
      %30 = sbr.rel (%p28) target = $region21
    $region20: #{cnn_forward.5} parent=1 // pred_region
      %31 = vst [vmem:[%s3] sm:$0xff] 0.0
      %32 = vst [vmem:[%s3 + $0x8] sm:$0xff] 0.0
      %33 = vst [vmem:[%s3 + $0x10] sm:$0xff] 0.0
      %34 = vst [vmem:[%s3 + $0x18] sm:$0xff] 0.0
      %35 = vst [vmem:[%s3 + $0x20] sm:$0xff] 0.0
      %36 = vst [vmem:[%s3 + $0x28] sm:$0xff] 0.0
      %37 = vst [vmem:[%s3 + $0x30] sm:$0xff] 0.0
      %38 = vst [vmem:[%s3 + $0x38] sm:$0xff] 0.0
      %39 = vst [vmem:[%s3 + $0x40] sm:$0xff] 0.0
      %40 = vst [vmem:[%s3 + $0x48] sm:$0xff] 0.0
      %41 = vst [vmem:[%s3 + $0x50] sm:$0xff] 0.0
      %42 = vst [vmem:[%s3 + $0x58] sm:$0xff] 0.0
      %43 = vst [vmem:[%s3 + $0x60] sm:$0xff] 0.0
      %44 = vst [vmem:[%s3 + $0x68] sm:$0xff] 0.0
      %45 = vst [vmem:[%s3 + $0x70] sm:$0xff] 0.0
      %46 = vst [vmem:[%s3 + $0x78] sm:$0xff] 0.0
      %47 = vst [vmem:[%s3 + $0x80] sm:$0xff] 0.0
      %48 = vst [vmem:[%s3 + $0x88] sm:$0xff] 0.0
      %49 = vst [vmem:[%s3 + $0x90] sm:$0xff] 0.0
      %50 = vst [vmem:[%s3 + $0x98] sm:$0xff] 0.0
      %51 = vst [vmem:[%s3 + $0xa0] sm:$0xff] 0.0
      %52 = vst [vmem:[%s3 + $0xa8] sm:$0xff] 0.0
      %53 = vst [vmem:[%s3 + $0xb0] sm:$0xff] 0.0
      %54 = vst [vmem:[%s3 + $0xb8] sm:$0xff] 0.0
      %55 = vst [vmem:[%s3 + $0xc0] sm:$0xff] 0.0
      %56 = vst [vmem:[%s3 + $0xc8] sm:$0xff] 0.0
      %57 = vst [vmem:[%s3 + $0xd0] sm:$0xff] 0.0
      %58 = vst [vmem:[%s3 + $0xd8] sm:$0xff] 0.0
    $region21: #{cnn_forward.5} parent=1 // pred_fallthru
      _
    %v59 = vld [vmem:[%s3] sm:$0xff]
    %v60 = vld [vmem:[%s3 + $0x8] sm:$0xff]
    %v61 = vld [vmem:[%s3 + $0x10] sm:$0xff]
    %v62 = vld [vmem:[%s3 + $0x18] sm:$0xff]
    %v63 = vld [vmem:[%s3 + $0x20] sm:$0xff]
    %v64 = vld [vmem:[%s3 + $0x28] sm:$0xff]
    %v65 = vld [vmem:[%s3 + $0x30] sm:$0xff]
    %v66 = vld [vmem:[%s3 + $0x38] sm:$0xff]
    %v67 = vld [vmem:[%s3 + $0x40] sm:$0xff]
    %v68 = vld [vmem:[%s3 + $0x48] sm:$0xff]
    %v69 = vld [vmem:[%s3 + $0x50] sm:$0xff]
    %v70 = vld [vmem:[%s3 + $0x58] sm:$0xff]
    %v71 = vld [vmem:[%s3 + $0x60] sm:$0xff]
    %v72 = vld [vmem:[%s3 + $0x68] sm:$0xff]
    %v73 = vld [vmem:[%s3 + $0x70] sm:$0xff]
    %v74 = vld [vmem:[%s3 + $0x78] sm:$0xff]
    %v75 = vld [vmem:[%s3 + $0x80] sm:$0xff]
    %v76 = vld [vmem:[%s3 + $0x88] sm:$0xff]
    %v77 = vld [vmem:[%s3 + $0x90] sm:$0xff]
    %v78 = vld [vmem:[%s3 + $0x98] sm:$0xff]
    %v79 = vld [vmem:[%s3 + $0xa0] sm:$0xff]
    %v80 = vld [vmem:[%s3 + $0xa8] sm:$0xff]
    %v81 = vld [vmem:[%s3 + $0xb0] sm:$0xff]
    %v82 = vld [vmem:[%s3 + $0xb8] sm:$0xff]
    %v83 = vld [vmem:[%s3 + $0xc0] sm:$0xff]
    %v84 = vld [vmem:[%s3 + $0xc8] sm:$0xff]
    %v85 = vld [vmem:[%s3 + $0xd0] sm:$0xff]
    %v86 = vld [vmem:[%s3 + $0xd8] sm:$0xff]
    %v87 = vld [vmem:[%s0] sm:$0xf]
    %v88 = vld [vmem:[%s0 + $0x4] sm:$0xf]
    %v89 = vld [vmem:[%s0 + $0x8] sm:$0xf]
    %v90 = vld [vmem:[%s0 + $0xc] sm:$0xf]
    %v91 = vld [vmem:[%s0 + $0x10] sm:$0xf]
    %v92 = vld [vmem:[%s0 + $0x14] sm:$0xf]
    %v93 = vld [vmem:[%s0 + $0x18] sm:$0xf]
    %v94 = vld [vmem:[%s0 + $0x1c] sm:$0xf]
    %v95 = vld [vmem:[%s0 + $0x20] sm:$0xf]
    %v96 = vld [vmem:[%s0 + $0x24] sm:$0xf]
    %v97 = vld [vmem:[%s0 + $0x28] sm:$0xf]
    %v98 = vld [vmem:[%s0 + $0x2c] sm:$0xf]
    %v99 = vld [vmem:[%s0 + $0x30] sm:$0xf]
    %v100 = vld [vmem:[%s0 + $0x34] sm:$0xf]
    %v101 = vld [vmem:[%s1] sm:$0xff]
    %v102 = vld [vmem:[%s1 + $0x8] sm:$0xff]
    %v103 = vld [vmem:[%s1 + $0x10] sm:$0xff]
    %v104 = vld [vmem:[%s1 + $0x18] sm:$0xff]
    %v105 = vld [vmem:[%s1 + $0x20] sm:$0xff]
    %v106 = vld [vmem:[%s1 + $0x28] sm:$0xff]
    %v121 = vunpack.c.l.b16 %v87
    %v122 = vunpack.c.l.b16 %v88
    %v123 = vunpack.c.l.b16 %v89
    %v124 = vunpack.c.l.b16 %v90
    %v125 = vunpack.c.l.b16 %v91
    %v126 = vunpack.c.l.b16 %v92
    %v127 = vunpack.c.l.b16 %v93
    %v128 = vunpack.c.l.b16 %v94
    %v129 = vunpack.c.l.b16 %v95
    %v130 = vunpack.c.l.b16 %v96
    %v131 = vunpack.c.l.b16 %v97
    %v132 = vunpack.c.l.b16 %v98
    %v133 = vunpack.c.l.b16 %v99
    %v134 = vunpack.c.l.b16 %v100
    %v135 = vpack.c.b16 %v122, %v121
    %v136 = vpack.c.b16 %v124, %v123
    %v137 = vpack.c.b16 %v126, %v125
    %v138 = vpack.c.b16 %v128, %v127
    %v139 = vpack.c.b16 %v130, %v129
    %v140 = vpack.c.b16 %v132, %v131
    %v141 = vpack.c.b16 %v134, %v133
    %v148 = vunpack.c.l.b16 %v101
    %v149 = vunpack.c.h.b16 %v101
    %v150 = vunpack.c.l.b16 %v102
    %v151 = vunpack.c.h.b16 %v102
    %v152 = vunpack.c.l.b16 %v103
    %v153 = vunpack.c.h.b16 %v103
    %v154 = vunpack.c.l.b16 %v104
    %v155 = vunpack.c.h.b16 %v104
    %v156 = vunpack.c.l.b16 %v105
    %v157 = vunpack.c.h.b16 %v105
    %v158 = vunpack.c.l.b16 %v106
    %v159 = vunpack.c.h.b16 %v106
    %v160 = vpack.c.b16 %v150, %v148
    %v161 = vpack.c.b16 %v151, %v149
    %v162 = vpack.c.b16 %v154, %v152
    %v163 = vpack.c.b16 %v155, %v153
    %v164 = vpack.c.b16 %v158, %v156
    %v165 = vpack.c.b16 %v159, %v157
    %vm172 = vcmask 392192
    %v174 = vsel %vm172, %v135, 0
    %v177 = vsel %vm172, %v136, 0
    %v180 = vsel %vm172, %v137, 0
    %v183 = vsel %vm172, %v138, 0
    %v186 = vsel %vm172, %v139, 0
    %v189 = vsel %vm172, %v140, 0
    %v192 = vsel %vm172, %v141, 0
    %194 = vmatprep.subr.bf16.mxu0 %v161
    %195 = vmatpush1.bf16.msra.mxu0 %v160
    %196 = vmatprep.subr.bf16.mxu0 %v163
    %197 = vmatpush1.bf16.msra.mxu0 %v162
    %198 = vmatprep.subr.bf16.mxu0 %v165
    %199 = vmatpush1.bf16.msra.mxu0 %v164
    %200 = vmatprep.subr.bf16.mxu0 0
    %201 = vmatpush1.bf16.msra.mxu0 0
    %202 = vmatprep.subr.bf16.mxu0 0
    %203 = vmatpush1.bf16.msra.mxu0 0
    %204 = vmatprep.subr.bf16.mxu0 0
    %205 = vmatpush1.bf16.msra.mxu0 0
    %206 = vmatprep.subr.bf16.mxu0 0
    %207 = vmatpush1.bf16.msra.mxu0 0
    %208 = vmatprep.subr.bf16.mxu0 0
    %209 = vmatpush1.bf16.msra.mxu0 0
    %210 = vmatprep.subr.bf16.mxu0 0
    %211 = vmatpush1.bf16.msra.mxu0 0
    %212 = vmatprep.subr.bf16.mxu0 0
    %213 = vmatpush1.bf16.msra.mxu0 0
    %214 = vmatprep.subr.bf16.mxu0 0
    %215 = vmatpush1.bf16.msra.mxu0 0
    %216 = vmatprep.subr.bf16.mxu0 0
    %217 = vmatpush1.bf16.msra.mxu0 0
    %218 = vmatprep.subr.bf16.mxu0 0
    %219 = vmatpush1.bf16.msra.mxu0 0
    %220 = vmatprep.subr.bf16.mxu0 0
    %221 = vmatpush1.bf16.msra.mxu0 0
    %222 = vmatprep.subr.bf16.mxu0 0
    %223 = vmatpush1.bf16.msra.mxu0 0
    %224 = vmatprep.subr.bf16.mxu0 0
    %225 = vmatpush1.bf16.msra.mxu0 0
    %226 = vmatprep.mubr.bf16.mxu0 0
    %227 = vmatmul.mubr.bf16.gmra.mrb[0].mxu0 %v174
    %v228 = vpop.f32.mrb[0].mxu0
    %v229 = vadd.f32 0.0, %v228
    %v230 = vpop.f32.mrb[0].mxu0
    %v231 = vadd.f32 0.0, %v230
    %v232 = vpop.f32.mrb[0].mxu0
    %v233 = vadd.f32 0.0, %v232
    %v234 = vpop.f32.mrb[0].mxu0
    %v235 = vadd.f32 0.0, %v234
    %236 = vmatprep.mubr.bf16.mxu0 0
    %237 = vmatmul.mubr.bf16.gmra.mrb[0].mxu0 %v177
    %v238 = vpop.f32.mrb[0].mxu0
    %v239 = vadd.f32 0.0, %v238
    %v240 = vpop.f32.mrb[0].mxu0
    %v241 = vadd.f32 0.0, %v240
    %v242 = vpop.f32.mrb[0].mxu0
    %v243 = vadd.f32 0.0, %v242
    %v244 = vpop.f32.mrb[0].mxu0
    %v245 = vadd.f32 0.0, %v244
    %246 = vmatprep.mubr.bf16.mxu0 0
    %247 = vmatmul.mubr.bf16.gmra.mrb[0].mxu0 %v180
    %v248 = vpop.f32.mrb[0].mxu0
    %v249 = vadd.f32 0.0, %v248
    %v250 = vpop.f32.mrb[0].mxu0
    %v251 = vadd.f32 0.0, %v250
    %v252 = vpop.f32.mrb[0].mxu0
    %v253 = vadd.f32 0.0, %v252
    %v254 = vpop.f32.mrb[0].mxu0
    %v255 = vadd.f32 0.0, %v254
    %256 = vmatprep.mubr.bf16.mxu0 0
    %257 = vmatmul.mubr.bf16.gmra.mrb[0].mxu0 %v183
    %v258 = vpop.f32.mrb[0].mxu0
    %v259 = vadd.f32 0.0, %v258
    %v260 = vpop.f32.mrb[0].mxu0
    %v261 = vadd.f32 0.0, %v260
    %v262 = vpop.f32.mrb[0].mxu0
    %v263 = vadd.f32 0.0, %v262
    %v264 = vpop.f32.mrb[0].mxu0
    %v265 = vadd.f32 0.0, %v264
    %266 = vmatprep.mubr.bf16.mxu0 0
    %267 = vmatmul.mubr.bf16.gmra.mrb[0].mxu0 %v186
    %v268 = vpop.f32.mrb[0].mxu0
    %v269 = vadd.f32 0.0, %v268
    %v270 = vpop.f32.mrb[0].mxu0
    %v271 = vadd.f32 0.0, %v270
    %v272 = vpop.f32.mrb[0].mxu0
    %v273 = vadd.f32 0.0, %v272
    %v274 = vpop.f32.mrb[0].mxu0
    %v275 = vadd.f32 0.0, %v274
    %276 = vmatprep.mubr.bf16.mxu0 0
    %277 = vmatmul.mubr.bf16.gmra.mrb[0].mxu0 %v189
    %v278 = vpop.f32.mrb[0].mxu0
    %v279 = vadd.f32 0.0, %v278
    %v280 = vpop.f32.mrb[0].mxu0
    %v281 = vadd.f32 0.0, %v280
    %v282 = vpop.f32.mrb[0].mxu0
    %v283 = vadd.f32 0.0, %v282
    %v284 = vpop.f32.mrb[0].mxu0
    %v285 = vadd.f32 0.0, %v284
    %286 = vmatprep.mubr.bf16.mxu0 0
    %287 = vmatmul.mubr.bf16.gmra.mrb[0].mxu0 %v192
    %v288 = vpop.f32.mrb[0].mxu0
    %v289 = vadd.f32 0.0, %v288
    %v290 = vpop.f32.mrb[0].mxu0
    %v291 = vadd.f32 0.0, %v290
    %v292 = vpop.f32.mrb[0].mxu0
    %v293 = vadd.f32 0.0, %v292
    %v294 = vpop.f32.mrb[0].mxu0
    %v295 = vadd.f32 0.0, %v294
    %296 = vdwg.mxu0
    %v297 = vadd.f32 %v59, %v229
    %v298 = vadd.f32 %v60, %v231
    %v299 = vadd.f32 %v61, %v233
    %v300 = vadd.f32 %v62, %v235
    %v301 = vadd.f32 %v63, %v239
    %v302 = vadd.f32 %v64, %v241
    %v303 = vadd.f32 %v65, %v243
    %v304 = vadd.f32 %v66, %v245
    %v305 = vadd.f32 %v67, %v249
    %v306 = vadd.f32 %v68, %v251
    %v307 = vadd.f32 %v69, %v253
    %v308 = vadd.f32 %v70, %v255
    %v309 = vadd.f32 %v71, %v259
    %v310 = vadd.f32 %v72, %v261
    %v311 = vadd.f32 %v73, %v263
    %v312 = vadd.f32 %v74, %v265
    %v313 = vadd.f32 %v75, %v269
    %v314 = vadd.f32 %v76, %v271
    %v315 = vadd.f32 %v77, %v273
    %v316 = vadd.f32 %v78, %v275
    %v317 = vadd.f32 %v79, %v279
    %v318 = vadd.f32 %v80, %v281
    %v319 = vadd.f32 %v81, %v283
    %v320 = vadd.f32 %v82, %v285
    %v321 = vadd.f32 %v83, %v289
    %v322 = vadd.f32 %v84, %v291
    %v323 = vadd.f32 %v85, %v293
    %v324 = vadd.f32 %v86, %v295
    %325 = vst [vmem:[%s3] sm:$0xff] %v297
    %326 = vst [vmem:[%s3 + $0x8] sm:$0xff] %v298
    %327 = vst [vmem:[%s3 + $0x10] sm:$0xff] %v299
    %328 = vst [vmem:[%s3 + $0x18] sm:$0xff] %v300
    %329 = vst [vmem:[%s3 + $0x20] sm:$0xff] %v301
    %330 = vst [vmem:[%s3 + $0x28] sm:$0xff] %v302
    %331 = vst [vmem:[%s3 + $0x30] sm:$0xff] %v303
    %332 = vst [vmem:[%s3 + $0x38] sm:$0xff] %v304
    %333 = vst [vmem:[%s3 + $0x40] sm:$0xff] %v305
    %334 = vst [vmem:[%s3 + $0x48] sm:$0xff] %v306
    %335 = vst [vmem:[%s3 + $0x50] sm:$0xff] %v307
    %336 = vst [vmem:[%s3 + $0x58] sm:$0xff] %v308
    %337 = vst [vmem:[%s3 + $0x60] sm:$0xff] %v309
    %338 = vst [vmem:[%s3 + $0x68] sm:$0xff] %v310
    %339 = vst [vmem:[%s3 + $0x70] sm:$0xff] %v311
    %340 = vst [vmem:[%s3 + $0x78] sm:$0xff] %v312
    %341 = vst [vmem:[%s3 + $0x80] sm:$0xff] %v313
    %342 = vst [vmem:[%s3 + $0x88] sm:$0xff] %v314
    %343 = vst [vmem:[%s3 + $0x90] sm:$0xff] %v315
    %344 = vst [vmem:[%s3 + $0x98] sm:$0xff] %v316
    %345 = vst [vmem:[%s3 + $0xa0] sm:$0xff] %v317
    %346 = vst [vmem:[%s3 + $0xa8] sm:$0xff] %v318
    %347 = vst [vmem:[%s3 + $0xb0] sm:$0xff] %v319
    %348 = vst [vmem:[%s3 + $0xb8] sm:$0xff] %v320
    %349 = vst [vmem:[%s3 + $0xc0] sm:$0xff] %v321
    %350 = vst [vmem:[%s3 + $0xc8] sm:$0xff] %v322
    %351 = vst [vmem:[%s3 + $0xd0] sm:$0xff] %v323
    %352 = vst [vmem:[%s3 + $0xd8] sm:$0xff] %v324
    // Predicated region
    $region22: #{cnn_forward.5} parent=1 // pred_check
      %p353 = pneg %p27
    $region23: #{cnn_forward.5} parent=1 // pred_check_branch
      %355 = sbr.rel (%p353) target = $region25
    $region24: #{cnn_forward.5} parent=1 // pred_region
      %v356 = vld [vmem:[%s3] sm:$0xff]
      %v357 = vld [vmem:[%s3 + $0x8] sm:$0xff]
      %v358 = vld [vmem:[%s3 + $0x10] sm:$0xff]
      %v359 = vld [vmem:[%s3 + $0x18] sm:$0xff]
      %v360 = vld [vmem:[%s3 + $0x20] sm:$0xff]
      %v361 = vld [vmem:[%s3 + $0x28] sm:$0xff]
      %v362 = vld [vmem:[%s3 + $0x30] sm:$0xff]
      %v363 = vld [vmem:[%s3 + $0x38] sm:$0xff]
      %v364 = vld [vmem:[%s3 + $0x40] sm:$0xff]
      %v365 = vld [vmem:[%s3 + $0x48] sm:$0xff]
      %v366 = vld [vmem:[%s3 + $0x50] sm:$0xff]
      %v367 = vld [vmem:[%s3 + $0x58] sm:$0xff]
      %v368 = vld [vmem:[%s3 + $0x60] sm:$0xff]
      %v369 = vld [vmem:[%s3 + $0x68] sm:$0xff]
      %v370 = vld [vmem:[%s3 + $0x70] sm:$0xff]
      %v371 = vld [vmem:[%s3 + $0x78] sm:$0xff]
      %v372 = vld [vmem:[%s3 + $0x80] sm:$0xff]
      %v373 = vld [vmem:[%s3 + $0x88] sm:$0xff]
      %v374 = vld [vmem:[%s3 + $0x90] sm:$0xff]
      %v375 = vld [vmem:[%s3 + $0x98] sm:$0xff]
      %v376 = vld [vmem:[%s3 + $0xa0] sm:$0xff]
      %v377 = vld [vmem:[%s3 + $0xa8] sm:$0xff]
      %v378 = vld [vmem:[%s3 + $0xb0] sm:$0xff]
      %v379 = vld [vmem:[%s3 + $0xb8] sm:$0xff]
      %v380 = vld [vmem:[%s3 + $0xc0] sm:$0xff]
      %v381 = vld [vmem:[%s3 + $0xc8] sm:$0xff]
      %v382 = vld [vmem:[%s3 + $0xd0] sm:$0xff]
      %v383 = vld [vmem:[%s3 + $0xd8] sm:$0xff]
      %v384 = vld [vmem:[#allocation2] sm:$0x3]
      %v386 = vlaneseq
      %v387 = vshrl.u32 %v386, 7
      %v388 = vsub.s32 0, %v387
      %v389 = vrot.slane %v384, %v388
      %v390 = vlaneseq
      %v391 = vshrl.u32 %v390, 7
      %v392 = vsub.s32 1, %v391
      %v393 = vrot.slane %v384, %v392
      %v396 = vadd.f32 %v356, %v389
      %v397 = vadd.f32 %v357, %v393
      %v398 = vadd.f32 %v358, %v389
      %v399 = vadd.f32 %v359, %v393
      %v400 = vadd.f32 %v360, %v389
      %v401 = vadd.f32 %v361, %v393
      %v402 = vadd.f32 %v362, %v389
      %v403 = vadd.f32 %v363, %v393
      %v404 = vadd.f32 %v364, %v389
      %v405 = vadd.f32 %v365, %v393
      %v406 = vadd.f32 %v366, %v389
      %v407 = vadd.f32 %v367, %v393
      %v408 = vadd.f32 %v368, %v389
      %v409 = vadd.f32 %v369, %v393
      %v410 = vadd.f32 %v370, %v389
      %v411 = vadd.f32 %v371, %v393
      %v412 = vadd.f32 %v372, %v389
      %v413 = vadd.f32 %v373, %v393
      %v414 = vadd.f32 %v374, %v389
      %v415 = vadd.f32 %v375, %v393
      %v416 = vadd.f32 %v376, %v389
      %v417 = vadd.f32 %v377, %v393
      %v418 = vadd.f32 %v378, %v389
      %v419 = vadd.f32 %v379, %v393
      %v420 = vadd.f32 %v380, %v389
      %v421 = vadd.f32 %v381, %v393
      %v422 = vadd.f32 %v382, %v389
      %v423 = vadd.f32 %v383, %v393
      %v424 = vmax.f32 %v396, 0.0
      %v425 = vmax.f32 %v397, 0.0
      %v426 = vmax.f32 %v398, 0.0
      %v427 = vmax.f32 %v399, 0.0
      %v428 = vmax.f32 %v400, 0.0
      %v429 = vmax.f32 %v401, 0.0
      %v430 = vmax.f32 %v402, 0.0
      %v431 = vmax.f32 %v403, 0.0
      %v432 = vmax.f32 %v404, 0.0
      %v433 = vmax.f32 %v405, 0.0
      %v434 = vmax.f32 %v406, 0.0
      %v435 = vmax.f32 %v407, 0.0
      %v436 = vmax.f32 %v408, 0.0
      %v437 = vmax.f32 %v409, 0.0
      %v438 = vmax.f32 %v410, 0.0
      %v439 = vmax.f32 %v411, 0.0
      %v440 = vmax.f32 %v412, 0.0
      %v441 = vmax.f32 %v413, 0.0
      %v442 = vmax.f32 %v414, 0.0
      %v443 = vmax.f32 %v415, 0.0
      %v444 = vmax.f32 %v416, 0.0
      %v445 = vmax.f32 %v417, 0.0
      %v446 = vmax.f32 %v418, 0.0
      %v447 = vmax.f32 %v419, 0.0
      %v448 = vmax.f32 %v420, 0.0
      %v449 = vmax.f32 %v421, 0.0
      %v450 = vmax.f32 %v422, 0.0
      %v451 = vmax.f32 %v423, 0.0
      %452 = vst [vmem:[%s3] sm:$0xff] %v424
      %453 = vst [vmem:[%s3 + $0x8] sm:$0xff] %v425
      %454 = vst [vmem:[%s3 + $0x10] sm:$0xff] %v426
      %455 = vst [vmem:[%s3 + $0x18] sm:$0xff] %v427
      %456 = vst [vmem:[%s3 + $0x20] sm:$0xff] %v428
      %457 = vst [vmem:[%s3 + $0x28] sm:$0xff] %v429
      %458 = vst [vmem:[%s3 + $0x30] sm:$0xff] %v430
      %459 = vst [vmem:[%s3 + $0x38] sm:$0xff] %v431
      %460 = vst [vmem:[%s3 + $0x40] sm:$0xff] %v432
      %461 = vst [vmem:[%s3 + $0x48] sm:$0xff] %v433
      %462 = vst [vmem:[%s3 + $0x50] sm:$0xff] %v434
      %463 = vst [vmem:[%s3 + $0x58] sm:$0xff] %v435
      %464 = vst [vmem:[%s3 + $0x60] sm:$0xff] %v436
      %465 = vst [vmem:[%s3 + $0x68] sm:$0xff] %v437
      %466 = vst [vmem:[%s3 + $0x70] sm:$0xff] %v438
      %467 = vst [vmem:[%s3 + $0x78] sm:$0xff] %v439
      %468 = vst [vmem:[%s3 + $0x80] sm:$0xff] %v440
      %469 = vst [vmem:[%s3 + $0x88] sm:$0xff] %v441
      %470 = vst [vmem:[%s3 + $0x90] sm:$0xff] %v442
      %471 = vst [vmem:[%s3 + $0x98] sm:$0xff] %v443
      %472 = vst [vmem:[%s3 + $0xa0] sm:$0xff] %v444
      %473 = vst [vmem:[%s3 + $0xa8] sm:$0xff] %v445
      %474 = vst [vmem:[%s3 + $0xb0] sm:$0xff] %v446
      %475 = vst [vmem:[%s3 + $0xb8] sm:$0xff] %v447
      %476 = vst [vmem:[%s3 + $0xc0] sm:$0xff] %v448
      %477 = vst [vmem:[%s3 + $0xc8] sm:$0xff] %v449
      %478 = vst [vmem:[%s3 + $0xd0] sm:$0xff] %v450
      %479 = vst [vmem:[%s3 + $0xd8] sm:$0xff] %v451
    $region25: #{cnn_forward.5} parent=1 // pred_fallthru
      _
    // Predicated region
    $region26: #{cnn_forward.5} parent=1 // pred_check
      _
    $region27: #{cnn_forward.5} parent=1 // pred_check_branch
      %481 = sbr.rel (0) target = $region29
    $region28: #{cnn_forward.5} parent=1 // pred_region
      _
    $region29: #{cnn_forward.5} parent=1 // pred_fallthru
      _
    // Predicated region
    $region30: #{cnn_forward.5} parent=1 // pred_check
      _
    $region31: #{cnn_forward.5} parent=1 // pred_check_branch
      %483 = sbr.rel (0) target = $region33
    $region32: #{cnn_forward.5} parent=1 // pred_region
      _
    $region33: #{cnn_forward.5} parent=1 // pred_fallthru
      _
    %484 = vsyncpa [#allocation3], 1

// kernel: cnn_forward.6
$region0: #{cnn_forward.6}
  #allocation0 [shape = 'u32[]', space=smem, size = 0x4, offset = 0x4, fixed_abs, tag = 'smem constant byte address 0x4 - core index']
  #allocation1 [shape = 'u32[144,128]{1,0:T(1,128)}', space=vmem, size = 0x12000, scoped, tag = 'internal scratch']
  %s0 = inlined_call_operand.vmem [shape: bf16[64,2304], index: 0, kind: input, shape index: {}]
  %s1 = inlined_call_operand.vmem [shape: bf16[2304,512], index: 1, kind: input, shape index: {}]
  %s2 = inlined_call_operand.vmem [shape: f32[1,512], index: 2, kind: input, shape index: {}]
  %s3 = inlined_call_operand.vmem [shape: f32[64,512], index: 3, kind: output, shape index: {}]
  %s4 = sld [smem:[#allocation0]]
  $region148: #{cnn_forward.6} parent=0
    _
  %s6 = ssub.s32 1, %s4
  %s7 = scalar_select 0, %s6, %s4
  $region1: #{cnn_forward.6} parent=0
    #allocation2 [shape = 'u8[65536]{0}', space=vmem, size = 0x10000, scoped, tag = 'input window, operand 0']
    #allocation3 [shape = 'u8[262144]{0}', space=vmem, size = 0x40000, scoped, tag = 'input window, operand 1']
    #allocation4 [shape = 'u8[131072]{0}', space=vmem, size = 0x20000, scoped, tag = 'output window, operand 0']
    loop: start=0, step=1, limit=20
    $region2: #{cnn_forward.6} parent=1 // loop_pre_header
      _
    $region3: #{cnn_forward.6} parent=1 // loop_header
      %s9 = sphi 0, %s13
      %p10 = scmp.ge.s32.totalorder %s9, 20
      %s16 = sphi 0, %s35
      %s17 = sphi 0, %s31
      %s18 = sphi 0, %s27
      %s19 = sphi 0, %s16
      %s20 = sphi 0, %s17
      %s21 = sphi 0, %s18
      %s22 = sphi 0, %s19
      %s23 = sphi 0, %s20
      %s24 = sphi 0, %s21
      %s40 = sphi 0, %s42
      %s43 = sphi 0, %s40
      %s44 = sphi 0, %s43
      %s60 = sphi 0, %s44
      %s68 = sphi 0, %s70
      %s71 = sphi 0, %s68
      %s72 = sphi 0, %s71
      %s88 = sphi 0, %s72
      %s94 = sphi 0, %s96
      %s97 = sphi 0, %s94
      %s98 = sphi 0, %s97
      %s114 = sphi 0, %s98
      %s122 = sphi 0, %s124
      %s125 = sphi 0, %s122
      %s126 = sphi 0, %s125
      %s142 = sphi 0, %s126
    $region4: #{cnn_forward.6} parent=1 // loop_header_branch
      %12 = sbr.rel (%p10) target = $region8
    $region5: #{cnn_forward.6} parent=1 // loop_body
      %s14 = ssub.s32 %s9, 1
      %s15 = ssub.s32 %s9, 2
      %s25 = sadd.s32 1, %s18
      %p26 = scmp.ge.s32.totalorder %s25, 9
      %s27 = scalar_select %p26, 0, %s25
      %s28 = sadd.s32 1, %s17
      %s29 = scalar_select %p26, %s28, %s17
      %p30 = scmp.ge.s32.totalorder %s29, 2
      %s31 = scalar_select %p30, 0, %s29
      %s32 = sadd.s32 1, %s16
      %s33 = scalar_select %p30, %s32, %s16
      %p34 = scmp.ge.s32.totalorder %s33, 1
      %s35 = scalar_select %p34, 0, %s33
      %s36 = ssub.s32 %s16, %s35
      %s37 = ssub.s32 %s18, %s27
      %s38 = sor.u32 %s36, %s37
      %p39 = scmp.eq.s32.totalorder %s38, 0
      %s41 = sadd.s32 %s40, 1
      %s42 = scalar_select %p39, %s40, %s41
      %p45 = pneg %p39
      %p46 = scmp.eq.s32.totalorder %s9, 17
      %p47 = por %p45, %p46
      %p48 = scmp.ne.s32.totalorder %s40, %s43
      %p49 = scmp.eq.s32.totalorder %s9, 0
      %p50 = por %p48, %p49
      %p51 = scmp.ne.s32.totalorder %s40, %s43
      %p52 = scmp.eq.s32.totalorder %s14, 17
      %p53 = por %p51, %p52
      %p54 = scmp.ne.s32.totalorder %s43, %s44
      %p55 = scmp.eq.s32.totalorder %s14, 0
      %p56 = por %p54, %p55
      %p57 = scmp.ne.s32.totalorder %s43, %s44
      %p58 = scmp.eq.s32.totalorder %s15, 17
      %p59 = por %p57, %p58
      %p61 = scmp.ne.s32.totalorder %s44, %s60
      %p62 = scmp.eq.s32.totalorder %s15, 0
      %p63 = por %p61, %p62
      %s64 = ssub.s32 %s18, %s27
      %s65 = ssub.s32 %s17, %s31
      %s66 = sor.u32 %s64, %s65
      %p67 = scmp.eq.s32.totalorder %s66, 0
      %s69 = sadd.s32 %s68, 1
      %s70 = scalar_select %p67, %s68, %s69
      %p73 = pneg %p67
      %p74 = scmp.eq.s32.totalorder %s9, 17
      %p75 = por %p73, %p74
      %p76 = scmp.ne.s32.totalorder %s68, %s71
      %p77 = scmp.eq.s32.totalorder %s9, 0
      %p78 = por %p76, %p77
      %p79 = scmp.ne.s32.totalorder %s68, %s71
      %p80 = scmp.eq.s32.totalorder %s14, 17
      %p81 = por %p79, %p80
      %p82 = scmp.ne.s32.totalorder %s71, %s72
      %p83 = scmp.eq.s32.totalorder %s14, 0
      %p84 = por %p82, %p83
      %p85 = scmp.ne.s32.totalorder %s71, %s72
      %p86 = scmp.eq.s32.totalorder %s15, 17
      %p87 = por %p85, %p86
      %p89 = scmp.ne.s32.totalorder %s72, %s88
      %p90 = scmp.eq.s32.totalorder %s15, 0
      %p91 = por %p89, %p90
      %s92 = ssub.s32 %s17, %s31
      %p93 = scmp.eq.s32.totalorder %s92, 0
      %s95 = sadd.s32 %s94, 1
      %s96 = scalar_select %p93, %s94, %s95
      %p99 = pneg %p93
      %p100 = scmp.eq.s32.totalorder %s9, 17
      %p101 = por %p99, %p100
      %p102 = scmp.ne.s32.totalorder %s94, %s97
      %p103 = scmp.eq.s32.totalorder %s9, 0
      %p104 = por %p102, %p103
      %p105 = scmp.ne.s32.totalorder %s94, %s97
      %p106 = scmp.eq.s32.totalorder %s14, 17
      %p107 = por %p105, %p106
      %p108 = scmp.ne.s32.totalorder %s97, %s98
      %p109 = scmp.eq.s32.totalorder %s14, 0
      %p110 = por %p108, %p109
      %p111 = scmp.ne.s32.totalorder %s97, %s98
      %p112 = scmp.eq.s32.totalorder %s15, 17
      %p113 = por %p111, %p112
      %p115 = scmp.ne.s32.totalorder %s98, %s114
      %p116 = scmp.eq.s32.totalorder %s15, 0
      %p117 = por %p115, %p116
      %s118 = ssub.s32 %s16, %s35
      %s119 = ssub.s32 %s17, %s31
      %s120 = sor.u32 %s118, %s119
      %p121 = scmp.eq.s32.totalorder %s120, 0
      %s123 = sadd.s32 %s122, 1
      %s124 = scalar_select %p121, %s122, %s123
      %p127 = pneg %p121
      %p128 = scmp.eq.s32.totalorder %s9, 17
      %p129 = por %p127, %p128
      %p130 = scmp.ne.s32.totalorder %s122, %s125
      %p131 = scmp.eq.s32.totalorder %s9, 0
      %p132 = por %p130, %p131
      %p133 = scmp.ne.s32.totalorder %s122, %s125
      %p134 = scmp.eq.s32.totalorder %s14, 17
      %p135 = por %p133, %p134
      %p136 = scmp.ne.s32.totalorder %s125, %s126
      %p137 = scmp.eq.s32.totalorder %s14, 0
      %p138 = por %p136, %p137
      %p139 = scmp.ne.s32.totalorder %s125, %s126
      %p140 = scmp.eq.s32.totalorder %s15, 17
      %p141 = por %p139, %p140
      %p143 = scmp.ne.s32.totalorder %s126, %s142
      %p144 = scmp.eq.s32.totalorder %s15, 0
      %p145 = por %p143, %p144
      %p146 = scmp.le.s32.totalorder 1, %s9
      %p147 = scmp.lt.s32.totalorder %s9, 19
      %p148 = pnand %p146, %p147
      %p149 = pneg %p148
      // Predicated region
      $region9: #{cnn_forward.6} parent=5 // pred_check
        _
      $region10: #{cnn_forward.6} parent=5 // pred_check_branch
        %151 = sbr.rel (%p148) target = $region12
      $region11: #{cnn_forward.6} parent=5 // pred_region
        %s152 = ssub.s32 %s9, 1
      $region12: #{cnn_forward.6} parent=5 // pred_fallthru
        _
      %p153 = scmp.lt.s32.totalorder %s9, 18
      // Predicated region
      $region13: #{cnn_forward.6} parent=5 // pred_check
        %p154 = pneg %p153
      $region14: #{cnn_forward.6} parent=5 // pred_check_branch
        %156 = sbr.rel (%p154) target = $region16
      $region15: #{cnn_forward.6} parent=5 // pred_region
        // Predicated region
        $region17: #{cnn_forward.6} parent=15 // pred_check
          %p157 = pneg %p50
        $region18: #{cnn_forward.6} parent=15 // pred_check_branch
          %159 = sbr.rel (%p157) target = $region20
        $region19: #{cnn_forward.6} parent=15 // pred_region
          %s160 = sand.u32 %s40, 1
          %s161 = sand.u32 %s40, 1
          %s162 = smul.addr %s161, 64
          %s163 = scalar_lea.vmem [#allocation2], %s162
          %s164 = smul.u32 8, %s16
          %s165 = smul.u32 2, %s18
          %s166 = smul.addr %s164, 18
          %s167 = sadd.s32 %s165, %s166
          %s168 = smul.addr %s167, 4
          %s169 = scalar_lea.vmem %s0, %s168
          // Predicated region
          $region21: #{cnn_forward.6} parent=19 // pred_check
            _
          $region22: #{cnn_forward.6} parent=19 // pred_check_branch
            %171 = sbr.rel (0) target = $region24
          $region23: #{cnn_forward.6} parent=19 // pred_region
            // Predicated region
            $region25: #{cnn_forward.6} parent=23 // pred_check
              _
            $region26: #{cnn_forward.6} parent=23 // pred_check_branch
              %173 = sbr.rel (0) target = $region28
            $region27: #{cnn_forward.6} parent=23 // pred_region
              // Predicated region
              $region40: #{cnn_forward.6} parent=27 // pred_check
                _
              $region41: #{cnn_forward.6} parent=27 // pred_check_branch
                %202 = sbr.rel (0) target = $region43
              $region42: #{cnn_forward.6} parent=27 // pred_region
                loop: start=0, step=1, limit=1
                $region44: #{cnn_forward.6} parent=42 // loop_pre_header
                  _
                $region45: #{cnn_forward.6} parent=42 // loop_header
                  %s204 = sphi 0, %s208
                  %p205 = scmp.ge.s32.totalorder %s204, 1
                  %s209 = sphi %s169, %s169
                  %s210 = sphi %s163, %s163
                $region46: #{cnn_forward.6} parent=42 // loop_header_branch
                  %207 = sbr.rel (%p205) target = $region50
                $region47: #{cnn_forward.6} parent=42 // loop_body
                  %v211 = vld [vmem:[%s209] sm:$0xff]
                  %212 = vst [vmem:[%s210] sm:$0xff] %v211
                  %v213 = vld [vmem:[%s209 + $0x48] sm:$0xff]
                  %214 = vst [vmem:[%s210 + $0x8] sm:$0xff] %v213
                  %v215 = vld [vmem:[%s209 + $0x90] sm:$0xff]
                  %216 = vst [vmem:[%s210 + $0x10] sm:$0xff] %v215
                  %v217 = vld [vmem:[%s209 + $0xd8] sm:$0xff]
                  %218 = vst [vmem:[%s210 + $0x18] sm:$0xff] %v217
                  %v219 = vld [vmem:[%s209 + $0x120] sm:$0xff]
                  %220 = vst [vmem:[%s210 + $0x20] sm:$0xff] %v219
                  %v221 = vld [vmem:[%s209 + $0x168] sm:$0xff]
                  %222 = vst [vmem:[%s210 + $0x28] sm:$0xff] %v221
                  %v223 = vld [vmem:[%s209 + $0x1b0] sm:$0xff]
                  %224 = vst [vmem:[%s210 + $0x30] sm:$0xff] %v223
                  %v225 = vld [vmem:[%s209 + $0x1f8] sm:$0xff]
                  %226 = vst [vmem:[%s210 + $0x38] sm:$0xff] %v225
                $region48: #{cnn_forward.6} parent=42 // loop_footer
                  %s208 = sadd.s32 1, %s204
                $region49: #{cnn_forward.6} parent=42 // loop_footer_branch
                  %203 = sbr.rel target = $region45
                $region50: #{cnn_forward.6} parent=42 // loop_exit
                  _
              $region43: #{cnn_forward.6} parent=27 // pred_fallthru
                _
              // Predicated region
              $region51: #{cnn_forward.6} parent=27 // pred_check
                _
              $region52: #{cnn_forward.6} parent=27 // pred_check_branch
                %228 = sbr.rel target = $region54
              $region53: #{cnn_forward.6} parent=27 // pred_region
                _
              $region54: #{cnn_forward.6} parent=27 // pred_fallthru
                _
            $region28: #{cnn_forward.6} parent=23 // pred_fallthru
              _
            // Predicated region
            $region29: #{cnn_forward.6} parent=23 // pred_check
              _
            $region30: #{cnn_forward.6} parent=23 // pred_check_branch
              %175 = sbr.rel target = $region32
            $region31: #{cnn_forward.6} parent=23 // pred_region
              loop: start=0, step=1, limit=1
              $region33: #{cnn_forward.6} parent=31 // loop_pre_header
                _
              $region34: #{cnn_forward.6} parent=31 // loop_header
                %s178 = sphi 0, %s182
                %p179 = scmp.ge.s32.totalorder %s178, 1
                %s183 = sphi %s169, %s169
                %s184 = sphi %s163, %s163
              $region35: #{cnn_forward.6} parent=31 // loop_header_branch
                %181 = sbr.rel (%p179) target = $region39
              $region36: #{cnn_forward.6} parent=31 // loop_body
                %v185 = vld [vmem:[%s183] sm:$0xff]
                %186 = vst [vmem:[%s184] sm:$0xff] %v185
                %v187 = vld [vmem:[%s183 + $0x48] sm:$0xff]
                %188 = vst [vmem:[%s184 + $0x8] sm:$0xff] %v187
                %v189 = vld [vmem:[%s183 + $0x90] sm:$0xff]
                %190 = vst [vmem:[%s184 + $0x10] sm:$0xff] %v189
                %v191 = vld [vmem:[%s183 + $0xd8] sm:$0xff]
                %192 = vst [vmem:[%s184 + $0x18] sm:$0xff] %v191
                %v193 = vld [vmem:[%s183 + $0x120] sm:$0xff]
                %194 = vst [vmem:[%s184 + $0x20] sm:$0xff] %v193
                %v195 = vld [vmem:[%s183 + $0x168] sm:$0xff]
                %196 = vst [vmem:[%s184 + $0x28] sm:$0xff] %v195
                %v197 = vld [vmem:[%s183 + $0x1b0] sm:$0xff]
                %198 = vst [vmem:[%s184 + $0x30] sm:$0xff] %v197
                %v199 = vld [vmem:[%s183 + $0x1f8] sm:$0xff]
                %200 = vst [vmem:[%s184 + $0x38] sm:$0xff] %v199
              $region37: #{cnn_forward.6} parent=31 // loop_footer
                %s182 = sadd.s32 1, %s178
              $region38: #{cnn_forward.6} parent=31 // loop_footer_branch
                %177 = sbr.rel target = $region34
              $region39: #{cnn_forward.6} parent=31 // loop_exit
                _
            $region32: #{cnn_forward.6} parent=23 // pred_fallthru
              _
          $region24: #{cnn_forward.6} parent=19 // pred_fallthru
            _
          %229 = vnop
        $region20: #{cnn_forward.6} parent=15 // pred_fallthru
          _
        // Predicated region
        $region55: #{cnn_forward.6} parent=15 // pred_check
          %p230 = pneg %p78
        $region56: #{cnn_forward.6} parent=15 // pred_check_branch
          %232 = sbr.rel (%p230) target = $region58
        $region57: #{cnn_forward.6} parent=15 // pred_region
          %s233 = sand.u32 %s68, 1
          %s234 = sand.u32 %s68, 1
          %s235 = smul.addr %s234, 256
          %s236 = scalar_lea.vmem [#allocation3], %s235
          %s237 = smul.u32 32, %s18
          %s238 = smul.u32 2, %s17
          %s239 = smul.addr %s237, 4
          %s240 = sadd.s32 %s238, %s239
          %s241 = smul.addr %s240, 4
          %s242 = scalar_lea.vmem %s1, %s241
          // Predicated region
          $region59: #{cnn_forward.6} parent=57 // pred_check
            _
          $region60: #{cnn_forward.6} parent=57 // pred_check_branch
            %244 = sbr.rel (0) target = $region62
          $region61: #{cnn_forward.6} parent=57 // pred_region
            // Predicated region
            $region63: #{cnn_forward.6} parent=61 // pred_check
              _
            $region64: #{cnn_forward.6} parent=61 // pred_check_branch
              %246 = sbr.rel (0) target = $region66
            $region65: #{cnn_forward.6} parent=61 // pred_region
              // Predicated region
              $region78: #{cnn_forward.6} parent=65 // pred_check
                _
              $region79: #{cnn_forward.6} parent=65 // pred_check_branch
                %323 = sbr.rel (0) target = $region81
              $region80: #{cnn_forward.6} parent=65 // pred_region
                loop: start=0, step=1, limit=1
                $region82: #{cnn_forward.6} parent=80 // loop_pre_header
                  _
                $region83: #{cnn_forward.6} parent=80 // loop_header
                  %s325 = sphi 0, %s329
                  %p326 = scmp.ge.s32.totalorder %s325, 1
                  %s330 = sphi %s242, %s242
                  %s331 = sphi %s236, %s236
                $region84: #{cnn_forward.6} parent=80 // loop_header_branch
                  %328 = sbr.rel (%p326) target = $region88
                $region85: #{cnn_forward.6} parent=80 // loop_body
                  %v332 = vld [vmem:[%s330] sm:$0xff]
                  %333 = vst [vmem:[%s331] sm:$0xff] %v332
                  %v334 = vld [vmem:[%s330 + $0x10] sm:$0xff]
                  %335 = vst [vmem:[%s331 + $0x8] sm:$0xff] %v334
                  %v336 = vld [vmem:[%s330 + $0x20] sm:$0xff]
                  %337 = vst [vmem:[%s331 + $0x10] sm:$0xff] %v336
                  %v338 = vld [vmem:[%s330 + $0x30] sm:$0xff]
                  %339 = vst [vmem:[%s331 + $0x18] sm:$0xff] %v338
                  %v340 = vld [vmem:[%s330 + $0x40] sm:$0xff]
                  %341 = vst [vmem:[%s331 + $0x20] sm:$0xff] %v340
                  %v342 = vld [vmem:[%s330 + $0x50] sm:$0xff]
                  %343 = vst [vmem:[%s331 + $0x28] sm:$0xff] %v342
                  %v344 = vld [vmem:[%s330 + $0x60] sm:$0xff]
                  %345 = vst [vmem:[%s331 + $0x30] sm:$0xff] %v344
                  %v346 = vld [vmem:[%s330 + $0x70] sm:$0xff]
                  %347 = vst [vmem:[%s331 + $0x38] sm:$0xff] %v346
                  %v348 = vld [vmem:[%s330 + $0x80] sm:$0xff]
                  %349 = vst [vmem:[%s331 + $0x40] sm:$0xff] %v348
                  %v350 = vld [vmem:[%s330 + $0x90] sm:$0xff]
                  %351 = vst [vmem:[%s331 + $0x48] sm:$0xff] %v350
                  %v352 = vld [vmem:[%s330 + $0xa0] sm:$0xff]
                  %353 = vst [vmem:[%s331 + $0x50] sm:$0xff] %v352
                  %v354 = vld [vmem:[%s330 + $0xb0] sm:$0xff]
                  %355 = vst [vmem:[%s331 + $0x58] sm:$0xff] %v354
                  %v356 = vld [vmem:[%s330 + $0xc0] sm:$0xff]
                  %357 = vst [vmem:[%s331 + $0x60] sm:$0xff] %v356
                  %v358 = vld [vmem:[%s330 + $0xd0] sm:$0xff]
                  %359 = vst [vmem:[%s331 + $0x68] sm:$0xff] %v358
                  %v360 = vld [vmem:[%s330 + $0xe0] sm:$0xff]
                  %361 = vst [vmem:[%s331 + $0x70] sm:$0xff] %v360
                  %v362 = vld [vmem:[%s330 + $0xf0] sm:$0xff]
                  %363 = vst [vmem:[%s331 + $0x78] sm:$0xff] %v362
                  %v364 = vld [vmem:[%s330 + $0x100] sm:$0xff]
                  %365 = vst [vmem:[%s331 + $0x80] sm:$0xff] %v364
                  %v366 = vld [vmem:[%s330 + $0x110] sm:$0xff]
                  %367 = vst [vmem:[%s331 + $0x88] sm:$0xff] %v366
                  %v368 = vld [vmem:[%s330 + $0x120] sm:$0xff]
                  %369 = vst [vmem:[%s331 + $0x90] sm:$0xff] %v368
                  %v370 = vld [vmem:[%s330 + $0x130] sm:$0xff]
                  %371 = vst [vmem:[%s331 + $0x98] sm:$0xff] %v370
                  %v372 = vld [vmem:[%s330 + $0x140] sm:$0xff]
                  %373 = vst [vmem:[%s331 + $0xa0] sm:$0xff] %v372
                  %v374 = vld [vmem:[%s330 + $0x150] sm:$0xff]
                  %375 = vst [vmem:[%s331 + $0xa8] sm:$0xff] %v374
                  %v376 = vld [vmem:[%s330 + $0x160] sm:$0xff]
                  %377 = vst [vmem:[%s331 + $0xb0] sm:$0xff] %v376
                  %v378 = vld [vmem:[%s330 + $0x170] sm:$0xff]
                  %379 = vst [vmem:[%s331 + $0xb8] sm:$0xff] %v378
                  %v380 = vld [vmem:[%s330 + $0x180] sm:$0xff]
                  %381 = vst [vmem:[%s331 + $0xc0] sm:$0xff] %v380
                  %v382 = vld [vmem:[%s330 + $0x190] sm:$0xff]
                  %383 = vst [vmem:[%s331 + $0xc8] sm:$0xff] %v382
                  %v384 = vld [vmem:[%s330 + $0x1a0] sm:$0xff]
                  %385 = vst [vmem:[%s331 + $0xd0] sm:$0xff] %v384
                  %v386 = vld [vmem:[%s330 + $0x1b0] sm:$0xff]
                  %387 = vst [vmem:[%s331 + $0xd8] sm:$0xff] %v386
                  %v388 = vld [vmem:[%s330 + $0x1c0] sm:$0xff]
                  %389 = vst [vmem:[%s331 + $0xe0] sm:$0xff] %v388
                  %v390 = vld [vmem:[%s330 + $0x1d0] sm:$0xff]
                  %391 = vst [vmem:[%s331 + $0xe8] sm:$0xff] %v390
                  %v392 = vld [vmem:[%s330 + $0x1e0] sm:$0xff]
                  %393 = vst [vmem:[%s331 + $0xf0] sm:$0xff] %v392
                  %v394 = vld [vmem:[%s330 + $0x1f0] sm:$0xff]
                  %395 = vst [vmem:[%s331 + $0xf8] sm:$0xff] %v394
                $region86: #{cnn_forward.6} parent=80 // loop_footer
                  %s329 = sadd.s32 1, %s325
                $region87: #{cnn_forward.6} parent=80 // loop_footer_branch
                  %324 = sbr.rel target = $region83
                $region88: #{cnn_forward.6} parent=80 // loop_exit
                  _
              $region81: #{cnn_forward.6} parent=65 // pred_fallthru
                _
              // Predicated region
              $region89: #{cnn_forward.6} parent=65 // pred_check
                _
              $region90: #{cnn_forward.6} parent=65 // pred_check_branch
                %397 = sbr.rel target = $region92
              $region91: #{cnn_forward.6} parent=65 // pred_region
                _
              $region92: #{cnn_forward.6} parent=65 // pred_fallthru
                _
            $region66: #{cnn_forward.6} parent=61 // pred_fallthru
              _
            // Predicated region
            $region67: #{cnn_forward.6} parent=61 // pred_check
              _
            $region68: #{cnn_forward.6} parent=61 // pred_check_branch
              %248 = sbr.rel target = $region70
            $region69: #{cnn_forward.6} parent=61 // pred_region
              loop: start=0, step=1, limit=1
              $region71: #{cnn_forward.6} parent=69 // loop_pre_header
                _
              $region72: #{cnn_forward.6} parent=69 // loop_header
                %s251 = sphi 0, %s255
                %p252 = scmp.ge.s32.totalorder %s251, 1
                %s256 = sphi %s242, %s242
                %s257 = sphi %s236, %s236
              $region73: #{cnn_forward.6} parent=69 // loop_header_branch
                %254 = sbr.rel (%p252) target = $region77
              $region74: #{cnn_forward.6} parent=69 // loop_body
                %v258 = vld [vmem:[%s256] sm:$0xff]
                %259 = vst [vmem:[%s257] sm:$0xff] %v258
                %v260 = vld [vmem:[%s256 + $0x10] sm:$0xff]
                %261 = vst [vmem:[%s257 + $0x8] sm:$0xff] %v260
                %v262 = vld [vmem:[%s256 + $0x20] sm:$0xff]
                %263 = vst [vmem:[%s257 + $0x10] sm:$0xff] %v262
                %v264 = vld [vmem:[%s256 + $0x30] sm:$0xff]
                %265 = vst [vmem:[%s257 + $0x18] sm:$0xff] %v264
                %v266 = vld [vmem:[%s256 + $0x40] sm:$0xff]
                %267 = vst [vmem:[%s257 + $0x20] sm:$0xff] %v266
                %v268 = vld [vmem:[%s256 + $0x50] sm:$0xff]
                %269 = vst [vmem:[%s257 + $0x28] sm:$0xff] %v268
                %v270 = vld [vmem:[%s256 + $0x60] sm:$0xff]
                %271 = vst [vmem:[%s257 + $0x30] sm:$0xff] %v270
                %v272 = vld [vmem:[%s256 + $0x70] sm:$0xff]
                %273 = vst [vmem:[%s257 + $0x38] sm:$0xff] %v272
                %v274 = vld [vmem:[%s256 + $0x80] sm:$0xff]
                %275 = vst [vmem:[%s257 + $0x40] sm:$0xff] %v274
                %v276 = vld [vmem:[%s256 + $0x90] sm:$0xff]
                %277 = vst [vmem:[%s257 + $0x48] sm:$0xff] %v276
                %v278 = vld [vmem:[%s256 + $0xa0] sm:$0xff]
                %279 = vst [vmem:[%s257 + $0x50] sm:$0xff] %v278
                %v280 = vld [vmem:[%s256 + $0xb0] sm:$0xff]
                %281 = vst [vmem:[%s257 + $0x58] sm:$0xff] %v280
                %v282 = vld [vmem:[%s256 + $0xc0] sm:$0xff]
                %283 = vst [vmem:[%s257 + $0x60] sm:$0xff] %v282
                %v284 = vld [vmem:[%s256 + $0xd0] sm:$0xff]
                %285 = vst [vmem:[%s257 + $0x68] sm:$0xff] %v284
                %v286 = vld [vmem:[%s256 + $0xe0] sm:$0xff]
                %287 = vst [vmem:[%s257 + $0x70] sm:$0xff] %v286
                %v288 = vld [vmem:[%s256 + $0xf0] sm:$0xff]
                %289 = vst [vmem:[%s257 + $0x78] sm:$0xff] %v288
                %v290 = vld [vmem:[%s256 + $0x100] sm:$0xff]
                %291 = vst [vmem:[%s257 + $0x80] sm:$0xff] %v290
                %v292 = vld [vmem:[%s256 + $0x110] sm:$0xff]
                %293 = vst [vmem:[%s257 + $0x88] sm:$0xff] %v292
                %v294 = vld [vmem:[%s256 + $0x120] sm:$0xff]
                %295 = vst [vmem:[%s257 + $0x90] sm:$0xff] %v294
                %v296 = vld [vmem:[%s256 + $0x130] sm:$0xff]
                %297 = vst [vmem:[%s257 + $0x98] sm:$0xff] %v296
                %v298 = vld [vmem:[%s256 + $0x140] sm:$0xff]
                %299 = vst [vmem:[%s257 + $0xa0] sm:$0xff] %v298
                %v300 = vld [vmem:[%s256 + $0x150] sm:$0xff]
                %301 = vst [vmem:[%s257 + $0xa8] sm:$0xff] %v300
                %v302 = vld [vmem:[%s256 + $0x160] sm:$0xff]
                %303 = vst [vmem:[%s257 + $0xb0] sm:$0xff] %v302
                %v304 = vld [vmem:[%s256 + $0x170] sm:$0xff]
                %305 = vst [vmem:[%s257 + $0xb8] sm:$0xff] %v304
                %v306 = vld [vmem:[%s256 + $0x180] sm:$0xff]
                %307 = vst [vmem:[%s257 + $0xc0] sm:$0xff] %v306
                %v308 = vld [vmem:[%s256 + $0x190] sm:$0xff]
                %309 = vst [vmem:[%s257 + $0xc8] sm:$0xff] %v308
                %v310 = vld [vmem:[%s256 + $0x1a0] sm:$0xff]
                %311 = vst [vmem:[%s257 + $0xd0] sm:$0xff] %v310
                %v312 = vld [vmem:[%s256 + $0x1b0] sm:$0xff]
                %313 = vst [vmem:[%s257 + $0xd8] sm:$0xff] %v312
                %v314 = vld [vmem:[%s256 + $0x1c0] sm:$0xff]
                %315 = vst [vmem:[%s257 + $0xe0] sm:$0xff] %v314
                %v316 = vld [vmem:[%s256 + $0x1d0] sm:$0xff]
                %317 = vst [vmem:[%s257 + $0xe8] sm:$0xff] %v316
                %v318 = vld [vmem:[%s256 + $0x1e0] sm:$0xff]
                %319 = vst [vmem:[%s257 + $0xf0] sm:$0xff] %v318
                %v320 = vld [vmem:[%s256 + $0x1f0] sm:$0xff]
                %321 = vst [vmem:[%s257 + $0xf8] sm:$0xff] %v320
              $region75: #{cnn_forward.6} parent=69 // loop_footer
                %s255 = sadd.s32 1, %s251
              $region76: #{cnn_forward.6} parent=69 // loop_footer_branch
                %250 = sbr.rel target = $region72
              $region77: #{cnn_forward.6} parent=69 // loop_exit
                _
            $region70: #{cnn_forward.6} parent=61 // pred_fallthru
              _
          $region62: #{cnn_forward.6} parent=57 // pred_fallthru
            _
          %398 = vnop
        $region58: #{cnn_forward.6} parent=15 // pred_fallthru
          _
        // Predicated region
        $region93: #{cnn_forward.6} parent=15 // pred_check
          %p399 = pneg %p104
        $region94: #{cnn_forward.6} parent=15 // pred_check_branch
          %401 = sbr.rel (%p399) target = $region96
        $region95: #{cnn_forward.6} parent=15 // pred_region
          %s402 = smul.u32 2, %s17
          %p403 = scmp.lt.s32.totalorder %s402, 3
          %s404 = scalar_select %p403, %s402, 3
          %s405 = scalar_lea.vmem %s2, %s404
          %s406 = smul.u32 2, %s17
        $region96: #{cnn_forward.6} parent=15 // pred_fallthru
          _
      $region16: #{cnn_forward.6} parent=5 // pred_fallthru
        _
      %p407 = scmp.le.s32.totalorder 1, %s9
      %p408 = scmp.lt.s32.totalorder %s9, 19
      %p409 = pnand %p407, %p408
      %p410 = pneg %p409
      // Predicated region
      $region97: #{cnn_forward.6} parent=5 // pred_check
        _
      $region98: #{cnn_forward.6} parent=5 // pred_check_branch
        %412 = sbr.rel (%p409) target = $region100
      $region99: #{cnn_forward.6} parent=5 // pred_region
        %s413 = ssub.s32 %s9, 1
        %s414 = sand.u32 %s43, 1
        %s415 = sand.u32 %s43, 1
        %s416 = smul.addr %s415, 64
        %s417 = scalar_lea.vmem [#allocation2], %s416
        // Predicated region
        $region101: #{cnn_forward.6} parent=99 // pred_check
          %p418 = pneg %p56
        $region102: #{cnn_forward.6} parent=99 // pred_check_branch
          %420 = sbr.rel (%p418) target = $region104
        $region103: #{cnn_forward.6} parent=99 // pred_region
          _
        $region104: #{cnn_forward.6} parent=99 // pred_fallthru
          _
        %s421 = sand.u32 %s71, 1
        %s422 = sand.u32 %s71, 1
        %s423 = smul.addr %s422, 256
        %s424 = scalar_lea.vmem [#allocation3], %s423
        // Predicated region
        $region105: #{cnn_forward.6} parent=99 // pred_check
          %p425 = pneg %p84
        $region106: #{cnn_forward.6} parent=99 // pred_check_branch
          %427 = sbr.rel (%p425) target = $region108
        $region107: #{cnn_forward.6} parent=99 // pred_region
          _
        $region108: #{cnn_forward.6} parent=99 // pred_fallthru
          _
        %s428 = sand.u32 %s43, 1
        %s429 = sand.u32 %s43, 1
        %s430 = smul.addr %s429, 64
        %s431 = scalar_lea.vmem [#allocation2], %s430
        %p432 = pneg %p56
        %p433 = pneg %p53
        %s434 = sand.u32 %s71, 1
        %s435 = sand.u32 %s71, 1
        %s436 = smul.addr %s435, 256
        %s437 = scalar_lea.vmem [#allocation3], %s436
        %p438 = pneg %p84
        %p439 = pneg %p81
        %s440 = smul.u32 2, %s20
        %p441 = scmp.lt.s32.totalorder %s440, 3
        %s442 = scalar_select %p441, %s440, 3
        %s443 = scalar_lea.vmem %s2, %s442
        %p444 = pneg %p110
        %p445 = pneg %p107
        %p446 = pneg %p138
        %p447 = pneg %p135
        %s448 = sand.u32 %s125, 1
        %s449 = sand.u32 %s125, 1
        %s450 = smul.addr %s449, 128
        %s451 = scalar_lea.vmem [#allocation4], %s450
        %s452 = smul.u32 8, %s19
        %s453 = smul.u32 2, %s21
        %s454 = smul.u32 32, %s21
        %s455 = smul.u32 2, %s20
        %s456 = smul.u32 2, %s20
        %p457 = scmp.lt.s32.totalorder %s456, 3
        %s458 = scalar_select %p457, %s456, 3
        %s459 = scalar_lea.vmem %s2, %s458
        %s460 = smul.u32 2, %s20
        %s461 = smul.u32 8, %s19
        %s462 = smul.u32 2, %s20
        %p463 = scmp.eq.s32.totalorder %s21, 0
        // Predicated region
        $region109: #{cnn_forward.6} parent=99 // pred_check
          %p464 = pneg %p463
        $region110: #{cnn_forward.6} parent=99 // pred_check_branch
          %466 = sbr.rel (%p464) target = $region112
        $region111: #{cnn_forward.6} parent=99 // pred_region
          %467 = vst [vmem:[%s451] sm:$0xff] 0.0
          %468 = vst [vmem:[%s451 + $0x8] sm:$0xff] 0.0
          %469 = vst [vmem:[%s451 + $0x10] sm:$0xff] 0.0
          %470 = vst [vmem:[%s451 + $0x18] sm:$0xff] 0.0
          %471 = vst [vmem:[%s451 + $0x20] sm:$0xff] 0.0
          %472 = vst [vmem:[%s451 + $0x28] sm:$0xff] 0.0
          %473 = vst [vmem:[%s451 + $0x30] sm:$0xff] 0.0
          %474 = vst [vmem:[%s451 + $0x38] sm:$0xff] 0.0
          %475 = vst [vmem:[%s451 + $0x40] sm:$0xff] 0.0
          %476 = vst [vmem:[%s451 + $0x48] sm:$0xff] 0.0
          %477 = vst [vmem:[%s451 + $0x50] sm:$0xff] 0.0
          %478 = vst [vmem:[%s451 + $0x58] sm:$0xff] 0.0
          %479 = vst [vmem:[%s451 + $0x60] sm:$0xff] 0.0
          %480 = vst [vmem:[%s451 + $0x68] sm:$0xff] 0.0
          %481 = vst [vmem:[%s451 + $0x70] sm:$0xff] 0.0
          %482 = vst [vmem:[%s451 + $0x78] sm:$0xff] 0.0
        $region112: #{cnn_forward.6} parent=99 // pred_fallthru
          _
        %v483 = vld [vmem:[%s451] sm:$0xff]
        %v484 = vld [vmem:[%s451 + $0x8] sm:$0xff]
        %v485 = vld [vmem:[%s451 + $0x10] sm:$0xff]
        %v486 = vld [vmem:[%s451 + $0x18] sm:$0xff]
        %v487 = vld [vmem:[%s451 + $0x20] sm:$0xff]
        %v488 = vld [vmem:[%s451 + $0x28] sm:$0xff]
        %v489 = vld [vmem:[%s451 + $0x30] sm:$0xff]
        %v490 = vld [vmem:[%s451 + $0x38] sm:$0xff]
        %v491 = vld [vmem:[%s451 + $0x40] sm:$0xff]
        %v492 = vld [vmem:[%s451 + $0x48] sm:$0xff]
        %v493 = vld [vmem:[%s451 + $0x50] sm:$0xff]
        %v494 = vld [vmem:[%s451 + $0x58] sm:$0xff]
        %v495 = vld [vmem:[%s451 + $0x60] sm:$0xff]
        %v496 = vld [vmem:[%s451 + $0x68] sm:$0xff]
        %v497 = vld [vmem:[%s451 + $0x70] sm:$0xff]
        %v498 = vld [vmem:[%s451 + $0x78] sm:$0xff]
        %v499 = vld [vmem:[%s417] sm:$0xff]
        %v500 = vld [vmem:[%s417 + $0x8] sm:$0xff]
        %v501 = vld [vmem:[%s417 + $0x10] sm:$0xff]
        %v502 = vld [vmem:[%s417 + $0x18] sm:$0xff]
        %v503 = vld [vmem:[%s417 + $0x20] sm:$0xff]
        %v504 = vld [vmem:[%s417 + $0x28] sm:$0xff]
        %v505 = vld [vmem:[%s417 + $0x30] sm:$0xff]
        %v506 = vld [vmem:[%s417 + $0x38] sm:$0xff]
        %v507 = vld [vmem:[%s424] sm:$0xff]
        %v508 = vld [vmem:[%s424 + $0x8] sm:$0xff]
        %v509 = vld [vmem:[%s424 + $0x10] sm:$0xff]
        %v510 = vld [vmem:[%s424 + $0x18] sm:$0xff]
        %v511 = vld [vmem:[%s424 + $0x20] sm:$0xff]
        %v512 = vld [vmem:[%s424 + $0x28] sm:$0xff]
        %v513 = vld [vmem:[%s424 + $0x30] sm:$0xff]
        %v514 = vld [vmem:[%s424 + $0x38] sm:$0xff]
        %v515 = vld [vmem:[%s424 + $0x40] sm:$0xff]
        %v516 = vld [vmem:[%s424 + $0x48] sm:$0xff]
        %v517 = vld [vmem:[%s424 + $0x50] sm:$0xff]
        %v518 = vld [vmem:[%s424 + $0x58] sm:$0xff]
        %v519 = vld [vmem:[%s424 + $0x60] sm:$0xff]
        %v520 = vld [vmem:[%s424 + $0x68] sm:$0xff]
        %v521 = vld [vmem:[%s424 + $0x70] sm:$0xff]
        %v522 = vld [vmem:[%s424 + $0x78] sm:$0xff]
        %v523 = vld [vmem:[%s424 + $0x80] sm:$0xff]
        %v524 = vld [vmem:[%s424 + $0x88] sm:$0xff]
        %v525 = vld [vmem:[%s424 + $0x90] sm:$0xff]
        %v526 = vld [vmem:[%s424 + $0x98] sm:$0xff]
        %v527 = vld [vmem:[%s424 + $0xa0] sm:$0xff]
        %v528 = vld [vmem:[%s424 + $0xa8] sm:$0xff]
        %v529 = vld [vmem:[%s424 + $0xb0] sm:$0xff]
        %v530 = vld [vmem:[%s424 + $0xb8] sm:$0xff]
        %v531 = vld [vmem:[%s424 + $0xc0] sm:$0xff]
        %v532 = vld [vmem:[%s424 + $0xc8] sm:$0xff]
        %v533 = vld [vmem:[%s424 + $0xd0] sm:$0xff]
        %v534 = vld [vmem:[%s424 + $0xd8] sm:$0xff]
        %v535 = vld [vmem:[%s424 + $0xe0] sm:$0xff]
        %v536 = vld [vmem:[%s424 + $0xe8] sm:$0xff]
        %v537 = vld [vmem:[%s424 + $0xf0] sm:$0xff]
        %v538 = vld [vmem:[%s424 + $0xf8] sm:$0xff]
        %v547 = vunpack.c.l.b16 %v499
        %v548 = vunpack.c.h.b16 %v499
        %v549 = vunpack.c.l.b16 %v500
        %v550 = vunpack.c.h.b16 %v500
        %v551 = vunpack.c.l.b16 %v501
        %v552 = vunpack.c.h.b16 %v501
        %v553 = vunpack.c.l.b16 %v502
        %v554 = vunpack.c.h.b16 %v502
        %v555 = vunpack.c.l.b16 %v503
        %v556 = vunpack.c.h.b16 %v503
        %v557 = vunpack.c.l.b16 %v504
        %v558 = vunpack.c.h.b16 %v504
        %v559 = vunpack.c.l.b16 %v505
        %v560 = vunpack.c.h.b16 %v505
        %v561 = vunpack.c.l.b16 %v506
        %v562 = vunpack.c.h.b16 %v506
        %v563 = vpack.c.b16 %v549, %v547
        %v564 = vpack.c.b16 %v550, %v548
        %v565 = vpack.c.b16 %v553, %v551
        %v566 = vpack.c.b16 %v554, %v552
        %v567 = vpack.c.b16 %v557, %v555
        %v568 = vpack.c.b16 %v558, %v556
        %v569 = vpack.c.b16 %v561, %v559
        %v570 = vpack.c.b16 %v562, %v560
        %v611 = vunpack.c.l.b16 %v507
        %v612 = vunpack.c.h.b16 %v507
        %v613 = vunpack.c.l.b16 %v508
        %v614 = vunpack.c.h.b16 %v508
        %v615 = vunpack.c.l.b16 %v509
        %v616 = vunpack.c.h.b16 %v509
        %v617 = vunpack.c.l.b16 %v510
        %v618 = vunpack.c.h.b16 %v510
        %v619 = vunpack.c.l.b16 %v511
        %v620 = vunpack.c.h.b16 %v511
        %v621 = vunpack.c.l.b16 %v512
        %v622 = vunpack.c.h.b16 %v512
        %v623 = vunpack.c.l.b16 %v513
        %v624 = vunpack.c.h.b16 %v513
        %v625 = vunpack.c.l.b16 %v514
        %v626 = vunpack.c.h.b16 %v514
        %v627 = vunpack.c.l.b16 %v515
        %v628 = vunpack.c.h.b16 %v515
        %v629 = vunpack.c.l.b16 %v516
        %v630 = vunpack.c.h.b16 %v516
        %v631 = vunpack.c.l.b16 %v517
        %v632 = vunpack.c.h.b16 %v517
        %v633 = vunpack.c.l.b16 %v518
        %v634 = vunpack.c.h.b16 %v518
        %v635 = vunpack.c.l.b16 %v519
        %v636 = vunpack.c.h.b16 %v519
        %v637 = vunpack.c.l.b16 %v520
        %v638 = vunpack.c.h.b16 %v520
        %v639 = vunpack.c.l.b16 %v521
        %v640 = vunpack.c.h.b16 %v521
        %v641 = vunpack.c.l.b16 %v522
        %v642 = vunpack.c.h.b16 %v522
        %v643 = vunpack.c.l.b16 %v523
        %v644 = vunpack.c.h.b16 %v523
        %v645 = vunpack.c.l.b16 %v524
        %v646 = vunpack.c.h.b16 %v524
        %v647 = vunpack.c.l.b16 %v525
        %v648 = vunpack.c.h.b16 %v525
        %v649 = vunpack.c.l.b16 %v526
        %v650 = vunpack.c.h.b16 %v526
        %v651 = vunpack.c.l.b16 %v527
        %v652 = vunpack.c.h.b16 %v527
        %v653 = vunpack.c.l.b16 %v528
        %v654 = vunpack.c.h.b16 %v528
        %v655 = vunpack.c.l.b16 %v529
        %v656 = vunpack.c.h.b16 %v529
        %v657 = vunpack.c.l.b16 %v530
        %v658 = vunpack.c.h.b16 %v530
        %v659 = vunpack.c.l.b16 %v531
        %v660 = vunpack.c.h.b16 %v531
        %v661 = vunpack.c.l.b16 %v532
        %v662 = vunpack.c.h.b16 %v532
        %v663 = vunpack.c.l.b16 %v533
        %v664 = vunpack.c.h.b16 %v533
        %v665 = vunpack.c.l.b16 %v534
        %v666 = vunpack.c.h.b16 %v534
        %v667 = vunpack.c.l.b16 %v535
        %v668 = vunpack.c.h.b16 %v535
        %v669 = vunpack.c.l.b16 %v536
        %v670 = vunpack.c.h.b16 %v536
        %v671 = vunpack.c.l.b16 %v537
        %v672 = vunpack.c.h.b16 %v537
        %v673 = vunpack.c.l.b16 %v538
        %v674 = vunpack.c.h.b16 %v538
        %v675 = vpack.c.b16 %v613, %v611
        %v676 = vpack.c.b16 %v614, %v612
        %v677 = vpack.c.b16 %v617, %v615
        %v678 = vpack.c.b16 %v618, %v616
        %v679 = vpack.c.b16 %v621, %v619
        %v680 = vpack.c.b16 %v622, %v620
        %v681 = vpack.c.b16 %v625, %v623
        %v682 = vpack.c.b16 %v626, %v624
        %v683 = vpack.c.b16 %v629, %v627
        %v684 = vpack.c.b16 %v630, %v628
        %v685 = vpack.c.b16 %v633, %v631
        %v686 = vpack.c.b16 %v634, %v632
        %v687 = vpack.c.b16 %v637, %v635
        %v688 = vpack.c.b16 %v638, %v636
        %v689 = vpack.c.b16 %v641, %v639
        %v690 = vpack.c.b16 %v642, %v640
        %v691 = vpack.c.b16 %v645, %v643
        %v692 = vpack.c.b16 %v646, %v644
        %v693 = vpack.c.b16 %v649, %v647
        %v694 = vpack.c.b16 %v650, %v648
        %v695 = vpack.c.b16 %v653, %v651
        %v696 = vpack.c.b16 %v654, %v652
        %v697 = vpack.c.b16 %v657, %v655
        %v698 = vpack.c.b16 %v658, %v656
        %v699 = vpack.c.b16 %v661, %v659
        %v700 = vpack.c.b16 %v662, %v660
        %v701 = vpack.c.b16 %v665, %v663
        %v702 = vpack.c.b16 %v666, %v664
        %v703 = vpack.c.b16 %v669, %v667
        %v704 = vpack.c.b16 %v670, %v668
        %v705 = vpack.c.b16 %v673, %v671
        %v706 = vpack.c.b16 %v674, %v672
        %739 = vmatprep.subr.bf16.mxu0 %v676
        %740 = vmatpush1.bf16.msra.mxu0 %v675
        %741 = vmatprep.subr.bf16.mxu0 %v678
        %742 = vmatpush1.bf16.msra.mxu0 %v677
        %743 = vmatprep.subr.bf16.mxu0 %v680
        %744 = vmatpush1.bf16.msra.mxu0 %v679
        %745 = vmatprep.subr.bf16.mxu0 %v682
        %746 = vmatpush1.bf16.msra.mxu0 %v681
        %747 = vmatprep.subr.bf16.mxu0 %v684
        %748 = vmatpush1.bf16.msra.mxu0 %v683
        %749 = vmatprep.subr.bf16.mxu0 %v686
        %750 = vmatpush1.bf16.msra.mxu0 %v685
        %751 = vmatprep.subr.bf16.mxu0 %v688
        %752 = vmatpush1.bf16.msra.mxu0 %v687
        %753 = vmatprep.subr.bf16.mxu0 %v690
        %754 = vmatpush1.bf16.msra.mxu0 %v689
        %755 = vmatprep.subr.bf16.mxu0 %v692
        %756 = vmatpush1.bf16.msra.mxu0 %v691
        %757 = vmatprep.subr.bf16.mxu0 %v694
        %758 = vmatpush1.bf16.msra.mxu0 %v693
        %759 = vmatprep.subr.bf16.mxu0 %v696
        %760 = vmatpush1.bf16.msra.mxu0 %v695
        %761 = vmatprep.subr.bf16.mxu0 %v698
        %762 = vmatpush1.bf16.msra.mxu0 %v697
        %763 = vmatprep.subr.bf16.mxu0 %v700
        %764 = vmatpush1.bf16.msra.mxu0 %v699
        %765 = vmatprep.subr.bf16.mxu0 %v702
        %766 = vmatpush1.bf16.msra.mxu0 %v701
        %767 = vmatprep.subr.bf16.mxu0 %v704
        %768 = vmatpush1.bf16.msra.mxu0 %v703
        %769 = vmatprep.subr.bf16.mxu0 %v706
        %770 = vmatpush1.bf16.msra.mxu0 %v705
        %771 = vmatprep.mubr.bf16.mxu0 %v564
        %772 = vmatmul.mubr.bf16.gmra.mrb[0].mxu0 %v563
        %v773 = vpop.f32.mrb[0].mxu0
        %v774 = vadd.f32 0.0, %v773
        %v775 = vpop.f32.mrb[0].mxu0
        %v776 = vadd.f32 0.0, %v775
        %v777 = vpop.f32.mrb[0].mxu0
        %v778 = vadd.f32 0.0, %v777
        %v779 = vpop.f32.mrb[0].mxu0
        %v780 = vadd.f32 0.0, %v779
        %781 = vmatprep.mubr.bf16.mxu0 %v566
        %782 = vmatmul.mubr.bf16.gmra.mrb[0].mxu0 %v565
        %v783 = vpop.f32.mrb[0].mxu0
        %v784 = vadd.f32 0.0, %v783
        %v785 = vpop.f32.mrb[0].mxu0
        %v786 = vadd.f32 0.0, %v785
        %v787 = vpop.f32.mrb[0].mxu0
        %v788 = vadd.f32 0.0, %v787
        %v789 = vpop.f32.mrb[0].mxu0
        %v790 = vadd.f32 0.0, %v789
        %791 = vmatprep.mubr.bf16.mxu0 %v568
        %792 = vmatmul.mubr.bf16.gmra.mrb[0].mxu0 %v567
        %v793 = vpop.f32.mrb[0].mxu0
        %v794 = vadd.f32 0.0, %v793
        %v795 = vpop.f32.mrb[0].mxu0
        %v796 = vadd.f32 0.0, %v795
        %v797 = vpop.f32.mrb[0].mxu0
        %v798 = vadd.f32 0.0, %v797
        %v799 = vpop.f32.mrb[0].mxu0
        %v800 = vadd.f32 0.0, %v799
        %801 = vmatprep.mubr.bf16.mxu0 %v570
        %802 = vmatmul.mubr.bf16.gmra.mrb[0].mxu0 %v569
        %v803 = vpop.f32.mrb[0].mxu0
        %v804 = vadd.f32 0.0, %v803
        %v805 = vpop.f32.mrb[0].mxu0
        %v806 = vadd.f32 0.0, %v805
        %v807 = vpop.f32.mrb[0].mxu0
        %v808 = vadd.f32 0.0, %v807
        %v809 = vpop.f32.mrb[0].mxu0
        %v810 = vadd.f32 0.0, %v809
        %811 = vdwg.mxu0
        %v812 = vadd.f32 %v483, %v774
        %v813 = vadd.f32 %v484, %v776
        %v814 = vadd.f32 %v485, %v778
        %v815 = vadd.f32 %v486, %v780
        %v816 = vadd.f32 %v487, %v784
        %v817 = vadd.f32 %v488, %v786
        %v818 = vadd.f32 %v489, %v788
        %v819 = vadd.f32 %v490, %v790
        %v820 = vadd.f32 %v491, %v794
        %v821 = vadd.f32 %v492, %v796
        %v822 = vadd.f32 %v493, %v798
        %v823 = vadd.f32 %v494, %v800
        %v824 = vadd.f32 %v495, %v804
        %v825 = vadd.f32 %v496, %v806
        %v826 = vadd.f32 %v497, %v808
        %v827 = vadd.f32 %v498, %v810
        %828 = vst [vmem:[%s451] sm:$0xff] %v812
        %829 = vst [vmem:[%s451 + $0x8] sm:$0xff] %v813
        %830 = vst [vmem:[%s451 + $0x10] sm:$0xff] %v814
        %831 = vst [vmem:[%s451 + $0x18] sm:$0xff] %v815
        %832 = vst [vmem:[%s451 + $0x20] sm:$0xff] %v816
        %833 = vst [vmem:[%s451 + $0x28] sm:$0xff] %v817
        %834 = vst [vmem:[%s451 + $0x30] sm:$0xff] %v818
        %835 = vst [vmem:[%s451 + $0x38] sm:$0xff] %v819
        %836 = vst [vmem:[%s451 + $0x40] sm:$0xff] %v820
        %837 = vst [vmem:[%s451 + $0x48] sm:$0xff] %v821
        %838 = vst [vmem:[%s451 + $0x50] sm:$0xff] %v822
        %839 = vst [vmem:[%s451 + $0x58] sm:$0xff] %v823
        %840 = vst [vmem:[%s451 + $0x60] sm:$0xff] %v824
        %841 = vst [vmem:[%s451 + $0x68] sm:$0xff] %v825
        %842 = vst [vmem:[%s451 + $0x70] sm:$0xff] %v826
        %843 = vst [vmem:[%s451 + $0x78] sm:$0xff] %v827
        %p844 = scmp.eq.s32.totalorder %s21, 8
        // Predicated region
        $region113: #{cnn_forward.6} parent=99 // pred_check
          %p845 = pneg %p844
        $region114: #{cnn_forward.6} parent=99 // pred_check_branch
          %847 = sbr.rel (%p845) target = $region116
        $region115: #{cnn_forward.6} parent=99 // pred_region
          %v848 = vld [vmem:[%s451] sm:$0xff]
          %v849 = vld [vmem:[%s451 + $0x8] sm:$0xff]
          %v850 = vld [vmem:[%s451 + $0x10] sm:$0xff]
          %v851 = vld [vmem:[%s451 + $0x18] sm:$0xff]
          %v852 = vld [vmem:[%s451 + $0x20] sm:$0xff]
          %v853 = vld [vmem:[%s451 + $0x28] sm:$0xff]
          %v854 = vld [vmem:[%s451 + $0x30] sm:$0xff]
          %v855 = vld [vmem:[%s451 + $0x38] sm:$0xff]
          %v856 = vld [vmem:[%s451 + $0x40] sm:$0xff]
          %v857 = vld [vmem:[%s451 + $0x48] sm:$0xff]
          %v858 = vld [vmem:[%s451 + $0x50] sm:$0xff]
          %v859 = vld [vmem:[%s451 + $0x58] sm:$0xff]
          %v860 = vld [vmem:[%s451 + $0x60] sm:$0xff]
          %v861 = vld [vmem:[%s451 + $0x68] sm:$0xff]
          %v862 = vld [vmem:[%s451 + $0x70] sm:$0xff]
          %v863 = vld [vmem:[%s451 + $0x78] sm:$0xff]
          %v864 = vld [vmem:[%s459] sm:$0x3]
          %v866 = vlaneseq
          %v867 = vshrl.u32 %v866, 7
          %v868 = vsub.s32 0, %v867
          %v869 = vrot.slane %v864, %v868
          %v870 = vlaneseq
          %v871 = vshrl.u32 %v870, 7
          %v872 = vsub.s32 1, %v871
          %v873 = vrot.slane %v864, %v872
          %v876 = vadd.f32 %v848, %v869
          %v877 = vadd.f32 %v849, %v873
          %v878 = vadd.f32 %v850, %v869
          %v879 = vadd.f32 %v851, %v873
          %v880 = vadd.f32 %v852, %v869
          %v881 = vadd.f32 %v853, %v873
          %v882 = vadd.f32 %v854, %v869
          %v883 = vadd.f32 %v855, %v873
          %v884 = vadd.f32 %v856, %v869
          %v885 = vadd.f32 %v857, %v873
          %v886 = vadd.f32 %v858, %v869
          %v887 = vadd.f32 %v859, %v873
          %v888 = vadd.f32 %v860, %v869
          %v889 = vadd.f32 %v861, %v873
          %v890 = vadd.f32 %v862, %v869
          %v891 = vadd.f32 %v863, %v873
          %v892 = vmax.f32 %v876, 0.0
          %v893 = vmax.f32 %v877, 0.0
          %v894 = vmax.f32 %v878, 0.0
          %v895 = vmax.f32 %v879, 0.0
          %v896 = vmax.f32 %v880, 0.0
          %v897 = vmax.f32 %v881, 0.0
          %v898 = vmax.f32 %v882, 0.0
          %v899 = vmax.f32 %v883, 0.0
          %v900 = vmax.f32 %v884, 0.0
          %v901 = vmax.f32 %v885, 0.0
          %v902 = vmax.f32 %v886, 0.0
          %v903 = vmax.f32 %v887, 0.0
          %v904 = vmax.f32 %v888, 0.0
          %v905 = vmax.f32 %v889, 0.0
          %v906 = vmax.f32 %v890, 0.0
          %v907 = vmax.f32 %v891, 0.0
          %908 = vst [vmem:[%s451] sm:$0xff] %v892
          %909 = vst [vmem:[%s451 + $0x8] sm:$0xff] %v893
          %910 = vst [vmem:[%s451 + $0x10] sm:$0xff] %v894
          %911 = vst [vmem:[%s451 + $0x18] sm:$0xff] %v895
          %912 = vst [vmem:[%s451 + $0x20] sm:$0xff] %v896
          %913 = vst [vmem:[%s451 + $0x28] sm:$0xff] %v897
          %914 = vst [vmem:[%s451 + $0x30] sm:$0xff] %v898
          %915 = vst [vmem:[%s451 + $0x38] sm:$0xff] %v899
          %916 = vst [vmem:[%s451 + $0x40] sm:$0xff] %v900
          %917 = vst [vmem:[%s451 + $0x48] sm:$0xff] %v901
          %918 = vst [vmem:[%s451 + $0x50] sm:$0xff] %v902
          %919 = vst [vmem:[%s451 + $0x58] sm:$0xff] %v903
          %920 = vst [vmem:[%s451 + $0x60] sm:$0xff] %v904
          %921 = vst [vmem:[%s451 + $0x68] sm:$0xff] %v905
          %922 = vst [vmem:[%s451 + $0x70] sm:$0xff] %v906
          %923 = vst [vmem:[%s451 + $0x78] sm:$0xff] %v907
        $region116: #{cnn_forward.6} parent=99 // pred_fallthru
          _
        %s924 = sand.u32 %s125, 1
        %s925 = sand.u32 %s125, 1
        %s926 = smul.addr %s925, 128
        %s927 = scalar_lea.vmem [#allocation4], %s926
        // Predicated region
        $region117: #{cnn_forward.6} parent=99 // pred_check
          %p928 = pneg %p135
        $region118: #{cnn_forward.6} parent=99 // pred_check_branch
          %930 = sbr.rel (%p928) target = $region120
        $region119: #{cnn_forward.6} parent=99 // pred_region
          %s931 = smul.u32 8, %s19
          %s932 = smul.u32 2, %s20
          %s933 = smul.addr %s931, 4
          %s934 = sadd.s32 %s932, %s933
          %s935 = smul.addr %s934, 8
          %s936 = scalar_lea.vmem %s3, %s935
          // Predicated region
          $region121: #{cnn_forward.6} parent=119 // pred_check
            _
          $region122: #{cnn_forward.6} parent=119 // pred_check_branch
            %938 = sbr.rel (0) target = $region124
          $region123: #{cnn_forward.6} parent=119 // pred_region
            // Predicated region
            $region125: #{cnn_forward.6} parent=123 // pred_check
              _
            $region126: #{cnn_forward.6} parent=123 // pred_check_branch
              %940 = sbr.rel (0) target = $region128
            $region127: #{cnn_forward.6} parent=123 // pred_region
              loop: start=0, step=1, limit=1
              $region129: #{cnn_forward.6} parent=127 // loop_pre_header
                _
              $region130: #{cnn_forward.6} parent=127 // loop_header
                %s942 = sphi 0, %s946
                %p943 = scmp.ge.s32.totalorder %s942, 1
                %s947 = sphi %s927, %s927
                %s948 = sphi %s936, %s936
              $region131: #{cnn_forward.6} parent=127 // loop_header_branch
                %945 = sbr.rel (%p943) target = $region135
              $region132: #{cnn_forward.6} parent=127 // loop_body
                %v949 = vld [vmem:[%s947] sm:$0xff]
                %950 = vst [vmem:[%s948] sm:$0xff] %v949
                %v951 = vld [vmem:[%s947 + $0x8] sm:$0xff]
                %952 = vst [vmem:[%s948 + $0x8] sm:$0xff] %v951
                %v953 = vld [vmem:[%s947 + $0x10] sm:$0xff]
                %954 = vst [vmem:[%s948 + $0x20] sm:$0xff] %v953
                %v955 = vld [vmem:[%s947 + $0x18] sm:$0xff]
                %956 = vst [vmem:[%s948 + $0x28] sm:$0xff] %v955
                %v957 = vld [vmem:[%s947 + $0x20] sm:$0xff]
                %958 = vst [vmem:[%s948 + $0x40] sm:$0xff] %v957
                %v959 = vld [vmem:[%s947 + $0x28] sm:$0xff]
                %960 = vst [vmem:[%s948 + $0x48] sm:$0xff] %v959
                %v961 = vld [vmem:[%s947 + $0x30] sm:$0xff]
                %962 = vst [vmem:[%s948 + $0x60] sm:$0xff] %v961
                %v963 = vld [vmem:[%s947 + $0x38] sm:$0xff]
                %964 = vst [vmem:[%s948 + $0x68] sm:$0xff] %v963
                %v965 = vld [vmem:[%s947 + $0x40] sm:$0xff]
                %966 = vst [vmem:[%s948 + $0x80] sm:$0xff] %v965
                %v967 = vld [vmem:[%s947 + $0x48] sm:$0xff]
                %968 = vst [vmem:[%s948 + $0x88] sm:$0xff] %v967
                %v969 = vld [vmem:[%s947 + $0x50] sm:$0xff]
                %970 = vst [vmem:[%s948 + $0xa0] sm:$0xff] %v969
                %v971 = vld [vmem:[%s947 + $0x58] sm:$0xff]
                %972 = vst [vmem:[%s948 + $0xa8] sm:$0xff] %v971
                %v973 = vld [vmem:[%s947 + $0x60] sm:$0xff]
                %974 = vst [vmem:[%s948 + $0xc0] sm:$0xff] %v973
                %v975 = vld [vmem:[%s947 + $0x68] sm:$0xff]
                %976 = vst [vmem:[%s948 + $0xc8] sm:$0xff] %v975
                %v977 = vld [vmem:[%s947 + $0x70] sm:$0xff]
                %978 = vst [vmem:[%s948 + $0xe0] sm:$0xff] %v977
                %v979 = vld [vmem:[%s947 + $0x78] sm:$0xff]
                %980 = vst [vmem:[%s948 + $0xe8] sm:$0xff] %v979
              $region133: #{cnn_forward.6} parent=127 // loop_footer
                %s946 = sadd.s32 1, %s942
              $region134: #{cnn_forward.6} parent=127 // loop_footer_branch
                %941 = sbr.rel target = $region130
              $region135: #{cnn_forward.6} parent=127 // loop_exit
                _
            $region128: #{cnn_forward.6} parent=123 // pred_fallthru
              _
            // Predicated region
            $region136: #{cnn_forward.6} parent=123 // pred_check
              _
            $region137: #{cnn_forward.6} parent=123 // pred_check_branch
              %982 = sbr.rel target = $region139
            $region138: #{cnn_forward.6} parent=123 // pred_region
              _
            $region139: #{cnn_forward.6} parent=123 // pred_fallthru
              _
          $region124: #{cnn_forward.6} parent=119 // pred_fallthru
            _
          %983 = vnop
        $region120: #{cnn_forward.6} parent=99 // pred_fallthru
          _
      $region100: #{cnn_forward.6} parent=5 // pred_fallthru
        _
      %p984 = scmp.le.s32.totalorder 2, %s9
      // Predicated region
      $region140: #{cnn_forward.6} parent=5 // pred_check
        %p985 = pneg %p984
      $region141: #{cnn_forward.6} parent=5 // pred_check_branch
        %987 = sbr.rel (%p985) target = $region143
      $region142: #{cnn_forward.6} parent=5 // pred_region
        %s988 = ssub.s32 %s9, 2
        // Predicated region
        $region144: #{cnn_forward.6} parent=142 // pred_check
          %p989 = pneg %p141
        $region145: #{cnn_forward.6} parent=142 // pred_check_branch
          %991 = sbr.rel (%p989) target = $region147
        $region146: #{cnn_forward.6} parent=142 // pred_region
          %s992 = sand.u32 %s126, 1
          %s993 = sand.u32 %s126, 1
          %s994 = smul.addr %s993, 128
          %s995 = scalar_lea.vmem [#allocation4], %s994
        $region147: #{cnn_forward.6} parent=142 // pred_fallthru
          _
      $region143: #{cnn_forward.6} parent=5 // pred_fallthru
        _
    $region6: #{cnn_forward.6} parent=1 // loop_footer
      %s13 = sadd.s32 1, %s9
    $region7: #{cnn_forward.6} parent=1 // loop_footer_branch
      %8 = sbr.rel target = $region3
    $region8: #{cnn_forward.6} parent=1 // loop_exit
      _

// kernel: cnn_forward.7
$region0: #{cnn_forward.7}
  #allocation0 [shape = 'u32[]', space=smem, size = 0x4, offset = 0x4, fixed_abs, tag = 'smem constant byte address 0x4 - core index']
  #allocation1 [shape = 'u32[144,128]{1,0:T(1,128)}', space=vmem, size = 0x12000, scoped, tag = 'internal scratch']
  %s0 = inlined_call_operand.vmem [shape: bf16[32,4608], index: 0, kind: input, shape index: {}]
  %s1 = inlined_call_operand.vmem [shape: bf16[4608,1024], index: 1, kind: input, shape index: {}]
  %s2 = inlined_call_operand.vmem [shape: f32[1,1024], index: 2, kind: input, shape index: {}]
  %s3 = inlined_call_operand.vmem [shape: f32[32,1024], index: 3, kind: output, shape index: {}]
  %s4 = sld [smem:[#allocation0]]
  $region133: #{cnn_forward.7} parent=0
    _
  %s6 = ssub.s32 1, %s4
  %s7 = scalar_select 0, %s6, %s4
  $region1: #{cnn_forward.7} parent=0
    #allocation2 [shape = 'u8[65536]{0}', space=vmem, size = 0x10000, scoped, tag = 'input window, operand 0']
    #allocation3 [shape = 'u8[524288]{0}', space=vmem, size = 0x80000, scoped, tag = 'input window, operand 1']
    #allocation4 [shape = 'u8[65536]{0}', space=vmem, size = 0x10000, scoped, tag = 'output window, operand 0']
    loop: start=0, step=1, limit=38
    $region2: #{cnn_forward.7} parent=1 // loop_pre_header
      _
    $region3: #{cnn_forward.7} parent=1 // loop_header
      %s9 = sphi 0, %s13
      %p10 = scmp.ge.s32.totalorder %s9, 38
      %s16 = sphi 0, %s35
      %s17 = sphi 0, %s31
      %s18 = sphi 0, %s27
      %s19 = sphi 0, %s16
      %s20 = sphi 0, %s17
      %s21 = sphi 0, %s18
      %s22 = sphi 0, %s19
      %s23 = sphi 0, %s20
      %s24 = sphi 0, %s21
      %s40 = sphi 0, %s42
      %s43 = sphi 0, %s40
      %s44 = sphi 0, %s43
      %s60 = sphi 0, %s44
      %s68 = sphi 0, %s70
      %s71 = sphi 0, %s68
      %s72 = sphi 0, %s71
      %s88 = sphi 0, %s72
      %s94 = sphi 0, %s96
      %s97 = sphi 0, %s94
      %s98 = sphi 0, %s97
      %s114 = sphi 0, %s98
      %s122 = sphi 0, %s124
      %s125 = sphi 0, %s122
      %s126 = sphi 0, %s125
      %s142 = sphi 0, %s126
    $region4: #{cnn_forward.7} parent=1 // loop_header_branch
      %12 = sbr.rel (%p10) target = $region8
    $region5: #{cnn_forward.7} parent=1 // loop_body
      %s14 = ssub.s32 %s9, 1
      %s15 = ssub.s32 %s9, 2
      %s25 = sadd.s32 1, %s18
      %p26 = scmp.ge.s32.totalorder %s25, 9
      %s27 = scalar_select %p26, 0, %s25
      %s28 = sadd.s32 1, %s17
      %s29 = scalar_select %p26, %s28, %s17
      %p30 = scmp.ge.s32.totalorder %s29, 4
      %s31 = scalar_select %p30, 0, %s29
      %s32 = sadd.s32 1, %s16
      %s33 = scalar_select %p30, %s32, %s16
      %p34 = scmp.ge.s32.totalorder %s33, 1
      %s35 = scalar_select %p34, 0, %s33
      %s36 = ssub.s32 %s16, %s35
      %s37 = ssub.s32 %s18, %s27
      %s38 = sor.u32 %s36, %s37
      %p39 = scmp.eq.s32.totalorder %s38, 0
      %s41 = sadd.s32 %s40, 1
      %s42 = scalar_select %p39, %s40, %s41
      %p45 = pneg %p39
      %p46 = scmp.eq.s32.totalorder %s9, 35
      %p47 = por %p45, %p46
      %p48 = scmp.ne.s32.totalorder %s40, %s43
      %p49 = scmp.eq.s32.totalorder %s9, 0
      %p50 = por %p48, %p49
      %p51 = scmp.ne.s32.totalorder %s40, %s43
      %p52 = scmp.eq.s32.totalorder %s14, 35
      %p53 = por %p51, %p52
      %p54 = scmp.ne.s32.totalorder %s43, %s44
      %p55 = scmp.eq.s32.totalorder %s14, 0
      %p56 = por %p54, %p55
      %p57 = scmp.ne.s32.totalorder %s43, %s44
      %p58 = scmp.eq.s32.totalorder %s15, 35
      %p59 = por %p57, %p58
      %p61 = scmp.ne.s32.totalorder %s44, %s60
      %p62 = scmp.eq.s32.totalorder %s15, 0
      %p63 = por %p61, %p62
      %s64 = ssub.s32 %s18, %s27
      %s65 = ssub.s32 %s17, %s31
      %s66 = sor.u32 %s64, %s65
      %p67 = scmp.eq.s32.totalorder %s66, 0
      %s69 = sadd.s32 %s68, 1
      %s70 = scalar_select %p67, %s68, %s69
      %p73 = pneg %p67
      %p74 = scmp.eq.s32.totalorder %s9, 35
      %p75 = por %p73, %p74
      %p76 = scmp.ne.s32.totalorder %s68, %s71
      %p77 = scmp.eq.s32.totalorder %s9, 0
      %p78 = por %p76, %p77
      %p79 = scmp.ne.s32.totalorder %s68, %s71
      %p80 = scmp.eq.s32.totalorder %s14, 35
      %p81 = por %p79, %p80
      %p82 = scmp.ne.s32.totalorder %s71, %s72
      %p83 = scmp.eq.s32.totalorder %s14, 0
      %p84 = por %p82, %p83
      %p85 = scmp.ne.s32.totalorder %s71, %s72
      %p86 = scmp.eq.s32.totalorder %s15, 35
      %p87 = por %p85, %p86
      %p89 = scmp.ne.s32.totalorder %s72, %s88
      %p90 = scmp.eq.s32.totalorder %s15, 0
      %p91 = por %p89, %p90
      %s92 = ssub.s32 %s17, %s31
      %p93 = scmp.eq.s32.totalorder %s92, 0
      %s95 = sadd.s32 %s94, 1
      %s96 = scalar_select %p93, %s94, %s95
      %p99 = pneg %p93
      %p100 = scmp.eq.s32.totalorder %s9, 35
      %p101 = por %p99, %p100
      %p102 = scmp.ne.s32.totalorder %s94, %s97
      %p103 = scmp.eq.s32.totalorder %s9, 0
      %p104 = por %p102, %p103
      %p105 = scmp.ne.s32.totalorder %s94, %s97
      %p106 = scmp.eq.s32.totalorder %s14, 35
      %p107 = por %p105, %p106
      %p108 = scmp.ne.s32.totalorder %s97, %s98
      %p109 = scmp.eq.s32.totalorder %s14, 0
      %p110 = por %p108, %p109
      %p111 = scmp.ne.s32.totalorder %s97, %s98
      %p112 = scmp.eq.s32.totalorder %s15, 35
      %p113 = por %p111, %p112
      %p115 = scmp.ne.s32.totalorder %s98, %s114
      %p116 = scmp.eq.s32.totalorder %s15, 0
      %p117 = por %p115, %p116
      %s118 = ssub.s32 %s16, %s35
      %s119 = ssub.s32 %s17, %s31
      %s120 = sor.u32 %s118, %s119
      %p121 = scmp.eq.s32.totalorder %s120, 0
      %s123 = sadd.s32 %s122, 1
      %s124 = scalar_select %p121, %s122, %s123
      %p127 = pneg %p121
      %p128 = scmp.eq.s32.totalorder %s9, 35
      %p129 = por %p127, %p128
      %p130 = scmp.ne.s32.totalorder %s122, %s125
      %p131 = scmp.eq.s32.totalorder %s9, 0
      %p132 = por %p130, %p131
      %p133 = scmp.ne.s32.totalorder %s122, %s125
      %p134 = scmp.eq.s32.totalorder %s14, 35
      %p135 = por %p133, %p134
      %p136 = scmp.ne.s32.totalorder %s125, %s126
      %p137 = scmp.eq.s32.totalorder %s14, 0
      %p138 = por %p136, %p137
      %p139 = scmp.ne.s32.totalorder %s125, %s126
      %p140 = scmp.eq.s32.totalorder %s15, 35
      %p141 = por %p139, %p140
      %p143 = scmp.ne.s32.totalorder %s126, %s142
      %p144 = scmp.eq.s32.totalorder %s15, 0
      %p145 = por %p143, %p144
      %p146 = scmp.le.s32.totalorder 1, %s9
      %p147 = scmp.lt.s32.totalorder %s9, 37
      %p148 = pnand %p146, %p147
      %p149 = pneg %p148
      // Predicated region
      $region9: #{cnn_forward.7} parent=5 // pred_check
        _
      $region10: #{cnn_forward.7} parent=5 // pred_check_branch
        %151 = sbr.rel (%p148) target = $region12
      $region11: #{cnn_forward.7} parent=5 // pred_region
        %s152 = ssub.s32 %s9, 1
      $region12: #{cnn_forward.7} parent=5 // pred_fallthru
        _
      %p153 = scmp.lt.s32.totalorder %s9, 36
      // Predicated region
      $region13: #{cnn_forward.7} parent=5 // pred_check
        %p154 = pneg %p153
      $region14: #{cnn_forward.7} parent=5 // pred_check_branch
        %156 = sbr.rel (%p154) target = $region16
      $region15: #{cnn_forward.7} parent=5 // pred_region
        // Predicated region
        $region17: #{cnn_forward.7} parent=15 // pred_check
          %p157 = pneg %p50
        $region18: #{cnn_forward.7} parent=15 // pred_check_branch
          %159 = sbr.rel (%p157) target = $region20
        $region19: #{cnn_forward.7} parent=15 // pred_region
          %s160 = sand.u32 %s40, 1
          %s161 = sand.u32 %s40, 1
          %s162 = smul.addr %s161, 64
          %s163 = scalar_lea.vmem [#allocation2], %s162
          %s164 = smul.u32 4, %s16
          %s165 = smul.u32 4, %s18
          %s166 = smul.addr %s164, 36
          %s167 = sadd.s32 %s165, %s166
          %s168 = smul.addr %s167, 4
          %s169 = scalar_lea.vmem %s0, %s168
          // Predicated region
          $region21: #{cnn_forward.7} parent=19 // pred_check
            _
          $region22: #{cnn_forward.7} parent=19 // pred_check_branch
            %171 = sbr.rel (0) target = $region24
          $region23: #{cnn_forward.7} parent=19 // pred_region
            // Predicated region
            $region25: #{cnn_forward.7} parent=23 // pred_check
              _
            $region26: #{cnn_forward.7} parent=23 // pred_check_branch
              %173 = sbr.rel (0) target = $region28
            $region27: #{cnn_forward.7} parent=23 // pred_region
              loop: start=0, step=1, limit=1
              $region29: #{cnn_forward.7} parent=27 // loop_pre_header
                _
              $region30: #{cnn_forward.7} parent=27 // loop_header
                %s175 = sphi 0, %s179
                %p176 = scmp.ge.s32.totalorder %s175, 1
                %s180 = sphi %s169, %s169
                %s181 = sphi %s163, %s163
              $region31: #{cnn_forward.7} parent=27 // loop_header_branch
                %178 = sbr.rel (%p176) target = $region35
              $region32: #{cnn_forward.7} parent=27 // loop_body
                %v182 = vld [vmem:[%s180] sm:$0xff]
                %183 = vst [vmem:[%s181] sm:$0xff] %v182
                %v184 = vld [vmem:[%s180 + $0x8] sm:$0xff]
                %185 = vst [vmem:[%s181 + $0x8] sm:$0xff] %v184
                %v186 = vld [vmem:[%s180 + $0x90] sm:$0xff]
                %187 = vst [vmem:[%s181 + $0x10] sm:$0xff] %v186
                %v188 = vld [vmem:[%s180 + $0x98] sm:$0xff]
                %189 = vst [vmem:[%s181 + $0x18] sm:$0xff] %v188
                %v190 = vld [vmem:[%s180 + $0x120] sm:$0xff]
                %191 = vst [vmem:[%s181 + $0x20] sm:$0xff] %v190
                %v192 = vld [vmem:[%s180 + $0x128] sm:$0xff]
                %193 = vst [vmem:[%s181 + $0x28] sm:$0xff] %v192
                %v194 = vld [vmem:[%s180 + $0x1b0] sm:$0xff]
                %195 = vst [vmem:[%s181 + $0x30] sm:$0xff] %v194
                %v196 = vld [vmem:[%s180 + $0x1b8] sm:$0xff]
                %197 = vst [vmem:[%s181 + $0x38] sm:$0xff] %v196
              $region33: #{cnn_forward.7} parent=27 // loop_footer
                %s179 = sadd.s32 1, %s175
              $region34: #{cnn_forward.7} parent=27 // loop_footer_branch
                %174 = sbr.rel target = $region30
              $region35: #{cnn_forward.7} parent=27 // loop_exit
                _
            $region28: #{cnn_forward.7} parent=23 // pred_fallthru
              _
            // Predicated region
            $region36: #{cnn_forward.7} parent=23 // pred_check
              _
            $region37: #{cnn_forward.7} parent=23 // pred_check_branch
              %199 = sbr.rel target = $region39
            $region38: #{cnn_forward.7} parent=23 // pred_region
              _
            $region39: #{cnn_forward.7} parent=23 // pred_fallthru
              _
          $region24: #{cnn_forward.7} parent=19 // pred_fallthru
            _
          %200 = vnop
        $region20: #{cnn_forward.7} parent=15 // pred_fallthru
          _
        // Predicated region
        $region40: #{cnn_forward.7} parent=15 // pred_check
          %p201 = pneg %p78
        $region41: #{cnn_forward.7} parent=15 // pred_check_branch
          %203 = sbr.rel (%p201) target = $region43
        $region42: #{cnn_forward.7} parent=15 // pred_region
          %s204 = sand.u32 %s68, 1
          %s205 = sand.u32 %s68, 1
          %s206 = smul.addr %s205, 512
          %s207 = scalar_lea.vmem [#allocation3], %s206
          %s208 = smul.u32 64, %s18
          %s209 = smul.u32 2, %s17
          %s210 = smul.addr %s208, 8
          %s211 = sadd.s32 %s209, %s210
          %s212 = smul.addr %s211, 4
          %s213 = scalar_lea.vmem %s1, %s212
          // Predicated region
          $region44: #{cnn_forward.7} parent=42 // pred_check
            _
          $region45: #{cnn_forward.7} parent=42 // pred_check_branch
            %215 = sbr.rel (0) target = $region47
          $region46: #{cnn_forward.7} parent=42 // pred_region
            // Predicated region
            $region48: #{cnn_forward.7} parent=46 // pred_check
              _
            $region49: #{cnn_forward.7} parent=46 // pred_check_branch
              %217 = sbr.rel (0) target = $region51
            $region50: #{cnn_forward.7} parent=46 // pred_region
              // Predicated region
              $region63: #{cnn_forward.7} parent=50 // pred_check
                _
              $region64: #{cnn_forward.7} parent=50 // pred_check_branch
                %358 = sbr.rel (0) target = $region66
              $region65: #{cnn_forward.7} parent=50 // pred_region
                loop: start=0, step=1, limit=1
                $region67: #{cnn_forward.7} parent=65 // loop_pre_header
                  _
                $region68: #{cnn_forward.7} parent=65 // loop_header
                  %s360 = sphi 0, %s364
                  %p361 = scmp.ge.s32.totalorder %s360, 1
                  %s365 = sphi %s213, %s213
                  %s366 = sphi %s207, %s207
                $region69: #{cnn_forward.7} parent=65 // loop_header_branch
                  %363 = sbr.rel (%p361) target = $region73
                $region70: #{cnn_forward.7} parent=65 // loop_body
                  %v367 = vld [vmem:[%s365] sm:$0xff]
                  %368 = vst [vmem:[%s366] sm:$0xff] %v367
                  %v369 = vld [vmem:[%s365 + $0x20] sm:$0xff]
                  %370 = vst [vmem:[%s366 + $0x8] sm:$0xff] %v369
                  %v371 = vld [vmem:[%s365 + $0x40] sm:$0xff]
                  %372 = vst [vmem:[%s366 + $0x10] sm:$0xff] %v371
                  %v373 = vld [vmem:[%s365 + $0x60] sm:$0xff]
                  %374 = vst [vmem:[%s366 + $0x18] sm:$0xff] %v373
                  %v375 = vld [vmem:[%s365 + $0x80] sm:$0xff]
                  %376 = vst [vmem:[%s366 + $0x20] sm:$0xff] %v375
                  %v377 = vld [vmem:[%s365 + $0xa0] sm:$0xff]
                  %378 = vst [vmem:[%s366 + $0x28] sm:$0xff] %v377
                  %v379 = vld [vmem:[%s365 + $0xc0] sm:$0xff]
                  %380 = vst [vmem:[%s366 + $0x30] sm:$0xff] %v379
                  %v381 = vld [vmem:[%s365 + $0xe0] sm:$0xff]
                  %382 = vst [vmem:[%s366 + $0x38] sm:$0xff] %v381
                  %v383 = vld [vmem:[%s365 + $0x100] sm:$0xff]
                  %384 = vst [vmem:[%s366 + $0x40] sm:$0xff] %v383
                  %v385 = vld [vmem:[%s365 + $0x120] sm:$0xff]
                  %386 = vst [vmem:[%s366 + $0x48] sm:$0xff] %v385
                  %v387 = vld [vmem:[%s365 + $0x140] sm:$0xff]
                  %388 = vst [vmem:[%s366 + $0x50] sm:$0xff] %v387
                  %v389 = vld [vmem:[%s365 + $0x160] sm:$0xff]
                  %390 = vst [vmem:[%s366 + $0x58] sm:$0xff] %v389
                  %v391 = vld [vmem:[%s365 + $0x180] sm:$0xff]
                  %392 = vst [vmem:[%s366 + $0x60] sm:$0xff] %v391
                  %v393 = vld [vmem:[%s365 + $0x1a0] sm:$0xff]
                  %394 = vst [vmem:[%s366 + $0x68] sm:$0xff] %v393
                  %v395 = vld [vmem:[%s365 + $0x1c0] sm:$0xff]
                  %396 = vst [vmem:[%s366 + $0x70] sm:$0xff] %v395
                  %v397 = vld [vmem:[%s365 + $0x1e0] sm:$0xff]
                  %398 = vst [vmem:[%s366 + $0x78] sm:$0xff] %v397
                  %v399 = vld [vmem:[%s365 + $0x200] sm:$0xff]
                  %400 = vst [vmem:[%s366 + $0x80] sm:$0xff] %v399
                  %v401 = vld [vmem:[%s365 + $0x220] sm:$0xff]
                  %402 = vst [vmem:[%s366 + $0x88] sm:$0xff] %v401
                  %v403 = vld [vmem:[%s365 + $0x240] sm:$0xff]
                  %404 = vst [vmem:[%s366 + $0x90] sm:$0xff] %v403
                  %v405 = vld [vmem:[%s365 + $0x260] sm:$0xff]
                  %406 = vst [vmem:[%s366 + $0x98] sm:$0xff] %v405
                  %v407 = vld [vmem:[%s365 + $0x280] sm:$0xff]
                  %408 = vst [vmem:[%s366 + $0xa0] sm:$0xff] %v407
                  %v409 = vld [vmem:[%s365 + $0x2a0] sm:$0xff]
                  %410 = vst [vmem:[%s366 + $0xa8] sm:$0xff] %v409
                  %v411 = vld [vmem:[%s365 + $0x2c0] sm:$0xff]
                  %412 = vst [vmem:[%s366 + $0xb0] sm:$0xff] %v411
                  %v413 = vld [vmem:[%s365 + $0x2e0] sm:$0xff]
                  %414 = vst [vmem:[%s366 + $0xb8] sm:$0xff] %v413
                  %v415 = vld [vmem:[%s365 + $0x300] sm:$0xff]
                  %416 = vst [vmem:[%s366 + $0xc0] sm:$0xff] %v415
                  %v417 = vld [vmem:[%s365 + $0x320] sm:$0xff]
                  %418 = vst [vmem:[%s366 + $0xc8] sm:$0xff] %v417
                  %v419 = vld [vmem:[%s365 + $0x340] sm:$0xff]
                  %420 = vst [vmem:[%s366 + $0xd0] sm:$0xff] %v419
                  %v421 = vld [vmem:[%s365 + $0x360] sm:$0xff]
                  %422 = vst [vmem:[%s366 + $0xd8] sm:$0xff] %v421
                  %v423 = vld [vmem:[%s365 + $0x380] sm:$0xff]
                  %424 = vst [vmem:[%s366 + $0xe0] sm:$0xff] %v423
                  %v425 = vld [vmem:[%s365 + $0x3a0] sm:$0xff]
                  %426 = vst [vmem:[%s366 + $0xe8] sm:$0xff] %v425
                  %v427 = vld [vmem:[%s365 + $0x3c0] sm:$0xff]
                  %428 = vst [vmem:[%s366 + $0xf0] sm:$0xff] %v427
                  %v429 = vld [vmem:[%s365 + $0x3e0] sm:$0xff]
                  %430 = vst [vmem:[%s366 + $0xf8] sm:$0xff] %v429
                  %v431 = vld [vmem:[%s365 + $0x400] sm:$0xff]
                  %432 = vst [vmem:[%s366 + $0x100] sm:$0xff] %v431
                  %v433 = vld [vmem:[%s365 + $0x420] sm:$0xff]
                  %434 = vst [vmem:[%s366 + $0x108] sm:$0xff] %v433
                  %v435 = vld [vmem:[%s365 + $0x440] sm:$0xff]
                  %436 = vst [vmem:[%s366 + $0x110] sm:$0xff] %v435
                  %v437 = vld [vmem:[%s365 + $0x460] sm:$0xff]
                  %438 = vst [vmem:[%s366 + $0x118] sm:$0xff] %v437
                  %v439 = vld [vmem:[%s365 + $0x480] sm:$0xff]
                  %440 = vst [vmem:[%s366 + $0x120] sm:$0xff] %v439
                  %v441 = vld [vmem:[%s365 + $0x4a0] sm:$0xff]
                  %442 = vst [vmem:[%s366 + $0x128] sm:$0xff] %v441
                  %v443 = vld [vmem:[%s365 + $0x4c0] sm:$0xff]
                  %444 = vst [vmem:[%s366 + $0x130] sm:$0xff] %v443
                  %v445 = vld [vmem:[%s365 + $0x4e0] sm:$0xff]
                  %446 = vst [vmem:[%s366 + $0x138] sm:$0xff] %v445
                  %v447 = vld [vmem:[%s365 + $0x500] sm:$0xff]
                  %448 = vst [vmem:[%s366 + $0x140] sm:$0xff] %v447
                  %v449 = vld [vmem:[%s365 + $0x520] sm:$0xff]
                  %450 = vst [vmem:[%s366 + $0x148] sm:$0xff] %v449
                  %v451 = vld [vmem:[%s365 + $0x540] sm:$0xff]
                  %452 = vst [vmem:[%s366 + $0x150] sm:$0xff] %v451
                  %v453 = vld [vmem:[%s365 + $0x560] sm:$0xff]
                  %454 = vst [vmem:[%s366 + $0x158] sm:$0xff] %v453
                  %v455 = vld [vmem:[%s365 + $0x580] sm:$0xff]
                  %456 = vst [vmem:[%s366 + $0x160] sm:$0xff] %v455
                  %v457 = vld [vmem:[%s365 + $0x5a0] sm:$0xff]
                  %458 = vst [vmem:[%s366 + $0x168] sm:$0xff] %v457
                  %v459 = vld [vmem:[%s365 + $0x5c0] sm:$0xff]
                  %460 = vst [vmem:[%s366 + $0x170] sm:$0xff] %v459
                  %v461 = vld [vmem:[%s365 + $0x5e0] sm:$0xff]
                  %462 = vst [vmem:[%s366 + $0x178] sm:$0xff] %v461
                  %v463 = vld [vmem:[%s365 + $0x600] sm:$0xff]
                  %464 = vst [vmem:[%s366 + $0x180] sm:$0xff] %v463
                  %v465 = vld [vmem:[%s365 + $0x620] sm:$0xff]
                  %466 = vst [vmem:[%s366 + $0x188] sm:$0xff] %v465
                  %v467 = vld [vmem:[%s365 + $0x640] sm:$0xff]
                  %468 = vst [vmem:[%s366 + $0x190] sm:$0xff] %v467
                  %v469 = vld [vmem:[%s365 + $0x660] sm:$0xff]
                  %470 = vst [vmem:[%s366 + $0x198] sm:$0xff] %v469
                  %v471 = vld [vmem:[%s365 + $0x680] sm:$0xff]
                  %472 = vst [vmem:[%s366 + $0x1a0] sm:$0xff] %v471
                  %v473 = vld [vmem:[%s365 + $0x6a0] sm:$0xff]
                  %474 = vst [vmem:[%s366 + $0x1a8] sm:$0xff] %v473
                  %v475 = vld [vmem:[%s365 + $0x6c0] sm:$0xff]
                  %476 = vst [vmem:[%s366 + $0x1b0] sm:$0xff] %v475
                  %v477 = vld [vmem:[%s365 + $0x6e0] sm:$0xff]
                  %478 = vst [vmem:[%s366 + $0x1b8] sm:$0xff] %v477
                  %v479 = vld [vmem:[%s365 + $0x700] sm:$0xff]
                  %480 = vst [vmem:[%s366 + $0x1c0] sm:$0xff] %v479
                  %v481 = vld [vmem:[%s365 + $0x720] sm:$0xff]
                  %482 = vst [vmem:[%s366 + $0x1c8] sm:$0xff] %v481
                  %v483 = vld [vmem:[%s365 + $0x740] sm:$0xff]
                  %484 = vst [vmem:[%s366 + $0x1d0] sm:$0xff] %v483
                  %v485 = vld [vmem:[%s365 + $0x760] sm:$0xff]
                  %486 = vst [vmem:[%s366 + $0x1d8] sm:$0xff] %v485
                  %v487 = vld [vmem:[%s365 + $0x780] sm:$0xff]
                  %488 = vst [vmem:[%s366 + $0x1e0] sm:$0xff] %v487
                  %v489 = vld [vmem:[%s365 + $0x7a0] sm:$0xff]
                  %490 = vst [vmem:[%s366 + $0x1e8] sm:$0xff] %v489
                  %v491 = vld [vmem:[%s365 + $0x7c0] sm:$0xff]
                  %492 = vst [vmem:[%s366 + $0x1f0] sm:$0xff] %v491
                  %v493 = vld [vmem:[%s365 + $0x7e0] sm:$0xff]
                  %494 = vst [vmem:[%s366 + $0x1f8] sm:$0xff] %v493
                $region71: #{cnn_forward.7} parent=65 // loop_footer
                  %s364 = sadd.s32 1, %s360
                $region72: #{cnn_forward.7} parent=65 // loop_footer_branch
                  %359 = sbr.rel target = $region68
                $region73: #{cnn_forward.7} parent=65 // loop_exit
                  _
              $region66: #{cnn_forward.7} parent=50 // pred_fallthru
                _
              // Predicated region
              $region74: #{cnn_forward.7} parent=50 // pred_check
                _
              $region75: #{cnn_forward.7} parent=50 // pred_check_branch
                %496 = sbr.rel target = $region77
              $region76: #{cnn_forward.7} parent=50 // pred_region
                _
              $region77: #{cnn_forward.7} parent=50 // pred_fallthru
                _
            $region51: #{cnn_forward.7} parent=46 // pred_fallthru
              _
            // Predicated region
            $region52: #{cnn_forward.7} parent=46 // pred_check
              _
            $region53: #{cnn_forward.7} parent=46 // pred_check_branch
              %219 = sbr.rel target = $region55
            $region54: #{cnn_forward.7} parent=46 // pred_region
              loop: start=0, step=1, limit=1
              $region56: #{cnn_forward.7} parent=54 // loop_pre_header
                _
              $region57: #{cnn_forward.7} parent=54 // loop_header
                %s222 = sphi 0, %s226
                %p223 = scmp.ge.s32.totalorder %s222, 1
                %s227 = sphi %s213, %s213
                %s228 = sphi %s207, %s207
              $region58: #{cnn_forward.7} parent=54 // loop_header_branch
                %225 = sbr.rel (%p223) target = $region62
              $region59: #{cnn_forward.7} parent=54 // loop_body
                %v229 = vld [vmem:[%s227] sm:$0xff]
                %230 = vst [vmem:[%s228] sm:$0xff] %v229
                %v231 = vld [vmem:[%s227 + $0x20] sm:$0xff]
                %232 = vst [vmem:[%s228 + $0x8] sm:$0xff] %v231
                %v233 = vld [vmem:[%s227 + $0x40] sm:$0xff]
                %234 = vst [vmem:[%s228 + $0x10] sm:$0xff] %v233
                %v235 = vld [vmem:[%s227 + $0x60] sm:$0xff]
                %236 = vst [vmem:[%s228 + $0x18] sm:$0xff] %v235
                %v237 = vld [vmem:[%s227 + $0x80] sm:$0xff]
                %238 = vst [vmem:[%s228 + $0x20] sm:$0xff] %v237
                %v239 = vld [vmem:[%s227 + $0xa0] sm:$0xff]
                %240 = vst [vmem:[%s228 + $0x28] sm:$0xff] %v239
                %v241 = vld [vmem:[%s227 + $0xc0] sm:$0xff]
                %242 = vst [vmem:[%s228 + $0x30] sm:$0xff] %v241
                %v243 = vld [vmem:[%s227 + $0xe0] sm:$0xff]
                %244 = vst [vmem:[%s228 + $0x38] sm:$0xff] %v243
                %v245 = vld [vmem:[%s227 + $0x100] sm:$0xff]
                %246 = vst [vmem:[%s228 + $0x40] sm:$0xff] %v245
                %v247 = vld [vmem:[%s227 + $0x120] sm:$0xff]
                %248 = vst [vmem:[%s228 + $0x48] sm:$0xff] %v247
                %v249 = vld [vmem:[%s227 + $0x140] sm:$0xff]
                %250 = vst [vmem:[%s228 + $0x50] sm:$0xff] %v249
                %v251 = vld [vmem:[%s227 + $0x160] sm:$0xff]
                %252 = vst [vmem:[%s228 + $0x58] sm:$0xff] %v251
                %v253 = vld [vmem:[%s227 + $0x180] sm:$0xff]
                %254 = vst [vmem:[%s228 + $0x60] sm:$0xff] %v253
                %v255 = vld [vmem:[%s227 + $0x1a0] sm:$0xff]
                %256 = vst [vmem:[%s228 + $0x68] sm:$0xff] %v255
                %v257 = vld [vmem:[%s227 + $0x1c0] sm:$0xff]
                %258 = vst [vmem:[%s228 + $0x70] sm:$0xff] %v257
                %v259 = vld [vmem:[%s227 + $0x1e0] sm:$0xff]
                %260 = vst [vmem:[%s228 + $0x78] sm:$0xff] %v259
                %v261 = vld [vmem:[%s227 + $0x200] sm:$0xff]
                %262 = vst [vmem:[%s228 + $0x80] sm:$0xff] %v261
                %v263 = vld [vmem:[%s227 + $0x220] sm:$0xff]
                %264 = vst [vmem:[%s228 + $0x88] sm:$0xff] %v263
                %v265 = vld [vmem:[%s227 + $0x240] sm:$0xff]
                %266 = vst [vmem:[%s228 + $0x90] sm:$0xff] %v265
                %v267 = vld [vmem:[%s227 + $0x260] sm:$0xff]
                %268 = vst [vmem:[%s228 + $0x98] sm:$0xff] %v267
                %v269 = vld [vmem:[%s227 + $0x280] sm:$0xff]
                %270 = vst [vmem:[%s228 + $0xa0] sm:$0xff] %v269
                %v271 = vld [vmem:[%s227 + $0x2a0] sm:$0xff]
                %272 = vst [vmem:[%s228 + $0xa8] sm:$0xff] %v271
                %v273 = vld [vmem:[%s227 + $0x2c0] sm:$0xff]
                %274 = vst [vmem:[%s228 + $0xb0] sm:$0xff] %v273
                %v275 = vld [vmem:[%s227 + $0x2e0] sm:$0xff]
                %276 = vst [vmem:[%s228 + $0xb8] sm:$0xff] %v275
                %v277 = vld [vmem:[%s227 + $0x300] sm:$0xff]
                %278 = vst [vmem:[%s228 + $0xc0] sm:$0xff] %v277
                %v279 = vld [vmem:[%s227 + $0x320] sm:$0xff]
                %280 = vst [vmem:[%s228 + $0xc8] sm:$0xff] %v279
                %v281 = vld [vmem:[%s227 + $0x340] sm:$0xff]
                %282 = vst [vmem:[%s228 + $0xd0] sm:$0xff] %v281
                %v283 = vld [vmem:[%s227 + $0x360] sm:$0xff]
                %284 = vst [vmem:[%s228 + $0xd8] sm:$0xff] %v283
                %v285 = vld [vmem:[%s227 + $0x380] sm:$0xff]
                %286 = vst [vmem:[%s228 + $0xe0] sm:$0xff] %v285
                %v287 = vld [vmem:[%s227 + $0x3a0] sm:$0xff]
                %288 = vst [vmem:[%s228 + $0xe8] sm:$0xff] %v287
                %v289 = vld [vmem:[%s227 + $0x3c0] sm:$0xff]
                %290 = vst [vmem:[%s228 + $0xf0] sm:$0xff] %v289
                %v291 = vld [vmem:[%s227 + $0x3e0] sm:$0xff]
                %292 = vst [vmem:[%s228 + $0xf8] sm:$0xff] %v291
                %v293 = vld [vmem:[%s227 + $0x400] sm:$0xff]
                %294 = vst [vmem:[%s228 + $0x100] sm:$0xff] %v293
                %v295 = vld [vmem:[%s227 + $0x420] sm:$0xff]
                %296 = vst [vmem:[%s228 + $0x108] sm:$0xff] %v295
                %v297 = vld [vmem:[%s227 + $0x440] sm:$0xff]
                %298 = vst [vmem:[%s228 + $0x110] sm:$0xff] %v297
                %v299 = vld [vmem:[%s227 + $0x460] sm:$0xff]
                %300 = vst [vmem:[%s228 + $0x118] sm:$0xff] %v299
                %v301 = vld [vmem:[%s227 + $0x480] sm:$0xff]
                %302 = vst [vmem:[%s228 + $0x120] sm:$0xff] %v301
                %v303 = vld [vmem:[%s227 + $0x4a0] sm:$0xff]
                %304 = vst [vmem:[%s228 + $0x128] sm:$0xff] %v303
                %v305 = vld [vmem:[%s227 + $0x4c0] sm:$0xff]
                %306 = vst [vmem:[%s228 + $0x130] sm:$0xff] %v305
                %v307 = vld [vmem:[%s227 + $0x4e0] sm:$0xff]
                %308 = vst [vmem:[%s228 + $0x138] sm:$0xff] %v307
                %v309 = vld [vmem:[%s227 + $0x500] sm:$0xff]
                %310 = vst [vmem:[%s228 + $0x140] sm:$0xff] %v309
                %v311 = vld [vmem:[%s227 + $0x520] sm:$0xff]
                %312 = vst [vmem:[%s228 + $0x148] sm:$0xff] %v311
                %v313 = vld [vmem:[%s227 + $0x540] sm:$0xff]
                %314 = vst [vmem:[%s228 + $0x150] sm:$0xff] %v313
                %v315 = vld [vmem:[%s227 + $0x560] sm:$0xff]
                %316 = vst [vmem:[%s228 + $0x158] sm:$0xff] %v315
                %v317 = vld [vmem:[%s227 + $0x580] sm:$0xff]
                %318 = vst [vmem:[%s228 + $0x160] sm:$0xff] %v317
                %v319 = vld [vmem:[%s227 + $0x5a0] sm:$0xff]
                %320 = vst [vmem:[%s228 + $0x168] sm:$0xff] %v319
                %v321 = vld [vmem:[%s227 + $0x5c0] sm:$0xff]
                %322 = vst [vmem:[%s228 + $0x170] sm:$0xff] %v321
                %v323 = vld [vmem:[%s227 + $0x5e0] sm:$0xff]
                %324 = vst [vmem:[%s228 + $0x178] sm:$0xff] %v323
                %v325 = vld [vmem:[%s227 + $0x600] sm:$0xff]
                %326 = vst [vmem:[%s228 + $0x180] sm:$0xff] %v325
                %v327 = vld [vmem:[%s227 + $0x620] sm:$0xff]
                %328 = vst [vmem:[%s228 + $0x188] sm:$0xff] %v327
                %v329 = vld [vmem:[%s227 + $0x640] sm:$0xff]
                %330 = vst [vmem:[%s228 + $0x190] sm:$0xff] %v329
                %v331 = vld [vmem:[%s227 + $0x660] sm:$0xff]
                %332 = vst [vmem:[%s228 + $0x198] sm:$0xff] %v331
                %v333 = vld [vmem:[%s227 + $0x680] sm:$0xff]
                %334 = vst [vmem:[%s228 + $0x1a0] sm:$0xff] %v333
                %v335 = vld [vmem:[%s227 + $0x6a0] sm:$0xff]
                %336 = vst [vmem:[%s228 + $0x1a8] sm:$0xff] %v335
                %v337 = vld [vmem:[%s227 + $0x6c0] sm:$0xff]
                %338 = vst [vmem:[%s228 + $0x1b0] sm:$0xff] %v337
                %v339 = vld [vmem:[%s227 + $0x6e0] sm:$0xff]
                %340 = vst [vmem:[%s228 + $0x1b8] sm:$0xff] %v339
                %v341 = vld [vmem:[%s227 + $0x700] sm:$0xff]
                %342 = vst [vmem:[%s228 + $0x1c0] sm:$0xff] %v341
                %v343 = vld [vmem:[%s227 + $0x720] sm:$0xff]
                %344 = vst [vmem:[%s228 + $0x1c8] sm:$0xff] %v343
                %v345 = vld [vmem:[%s227 + $0x740] sm:$0xff]
                %346 = vst [vmem:[%s228 + $0x1d0] sm:$0xff] %v345
                %v347 = vld [vmem:[%s227 + $0x760] sm:$0xff]
                %348 = vst [vmem:[%s228 + $0x1d8] sm:$0xff] %v347
                %v349 = vld [vmem:[%s227 + $0x780] sm:$0xff]
                %350 = vst [vmem:[%s228 + $0x1e0] sm:$0xff] %v349
                %v351 = vld [vmem:[%s227 + $0x7a0] sm:$0xff]
                %352 = vst [vmem:[%s228 + $0x1e8] sm:$0xff] %v351
                %v353 = vld [vmem:[%s227 + $0x7c0] sm:$0xff]
                %354 = vst [vmem:[%s228 + $0x1f0] sm:$0xff] %v353
                %v355 = vld [vmem:[%s227 + $0x7e0] sm:$0xff]
                %356 = vst [vmem:[%s228 + $0x1f8] sm:$0xff] %v355
              $region60: #{cnn_forward.7} parent=54 // loop_footer
                %s226 = sadd.s32 1, %s222
              $region61: #{cnn_forward.7} parent=54 // loop_footer_branch
                %221 = sbr.rel target = $region57
              $region62: #{cnn_forward.7} parent=54 // loop_exit
                _
            $region55: #{cnn_forward.7} parent=46 // pred_fallthru
              _
          $region47: #{cnn_forward.7} parent=42 // pred_fallthru
            _
          %497 = vnop
        $region43: #{cnn_forward.7} parent=15 // pred_fallthru
          _
        // Predicated region
        $region78: #{cnn_forward.7} parent=15 // pred_check
          %p498 = pneg %p104
        $region79: #{cnn_forward.7} parent=15 // pred_check_branch
          %500 = sbr.rel (%p498) target = $region81
        $region80: #{cnn_forward.7} parent=15 // pred_region
          %s501 = smul.u32 2, %s17
          %p502 = scmp.lt.s32.totalorder %s501, 7
          %s503 = scalar_select %p502, %s501, 7
          %s504 = scalar_lea.vmem %s2, %s503
          %s505 = smul.u32 2, %s17
        $region81: #{cnn_forward.7} parent=15 // pred_fallthru
          _
      $region16: #{cnn_forward.7} parent=5 // pred_fallthru
        _
      %p506 = scmp.le.s32.totalorder 1, %s9
      %p507 = scmp.lt.s32.totalorder %s9, 37
      %p508 = pnand %p506, %p507
      %p509 = pneg %p508
      // Predicated region
      $region82: #{cnn_forward.7} parent=5 // pred_check
        _
      $region83: #{cnn_forward.7} parent=5 // pred_check_branch
        %511 = sbr.rel (%p508) target = $region85
      $region84: #{cnn_forward.7} parent=5 // pred_region
        %s512 = ssub.s32 %s9, 1
        %s513 = sand.u32 %s43, 1
        %s514 = sand.u32 %s43, 1
        %s515 = smul.addr %s514, 64
        %s516 = scalar_lea.vmem [#allocation2], %s515
        // Predicated region
        $region86: #{cnn_forward.7} parent=84 // pred_check
          %p517 = pneg %p56
        $region87: #{cnn_forward.7} parent=84 // pred_check_branch
          %519 = sbr.rel (%p517) target = $region89
        $region88: #{cnn_forward.7} parent=84 // pred_region
          _
        $region89: #{cnn_forward.7} parent=84 // pred_fallthru
          _
        %s520 = sand.u32 %s71, 1
        %s521 = sand.u32 %s71, 1
        %s522 = smul.addr %s521, 512
        %s523 = scalar_lea.vmem [#allocation3], %s522
        // Predicated region
        $region90: #{cnn_forward.7} parent=84 // pred_check
          %p524 = pneg %p84
        $region91: #{cnn_forward.7} parent=84 // pred_check_branch
          %526 = sbr.rel (%p524) target = $region93
        $region92: #{cnn_forward.7} parent=84 // pred_region
          _
        $region93: #{cnn_forward.7} parent=84 // pred_fallthru
          _
        %s527 = sand.u32 %s43, 1
        %s528 = sand.u32 %s43, 1
        %s529 = smul.addr %s528, 64
        %s530 = scalar_lea.vmem [#allocation2], %s529
        %p531 = pneg %p56
        %p532 = pneg %p53
        %s533 = sand.u32 %s71, 1
        %s534 = sand.u32 %s71, 1
        %s535 = smul.addr %s534, 512
        %s536 = scalar_lea.vmem [#allocation3], %s535
        %p537 = pneg %p84
        %p538 = pneg %p81
        %s539 = smul.u32 2, %s20
        %p540 = scmp.lt.s32.totalorder %s539, 7
        %s541 = scalar_select %p540, %s539, 7
        %s542 = scalar_lea.vmem %s2, %s541
        %p543 = pneg %p110
        %p544 = pneg %p107
        %p545 = pneg %p138
        %p546 = pneg %p135
        %s547 = sand.u32 %s125, 1
        %s548 = sand.u32 %s125, 1
        %s549 = smul.addr %s548, 64
        %s550 = scalar_lea.vmem [#allocation4], %s549
        %s551 = smul.u32 4, %s19
        %s552 = smul.u32 4, %s21
        %s553 = smul.u32 64, %s21
        %s554 = smul.u32 2, %s20
        %s555 = smul.u32 2, %s20
        %p556 = scmp.lt.s32.totalorder %s555, 7
        %s557 = scalar_select %p556, %s555, 7
        %s558 = scalar_lea.vmem %s2, %s557
        %s559 = smul.u32 2, %s20
        %s560 = smul.u32 4, %s19
        %s561 = smul.u32 2, %s20
        %p562 = scmp.eq.s32.totalorder %s21, 0
        // Predicated region
        $region94: #{cnn_forward.7} parent=84 // pred_check
          %p563 = pneg %p562
        $region95: #{cnn_forward.7} parent=84 // pred_check_branch
          %565 = sbr.rel (%p563) target = $region97
        $region96: #{cnn_forward.7} parent=84 // pred_region
          %566 = vst [vmem:[%s550] sm:$0xff] 0.0
          %567 = vst [vmem:[%s550 + $0x8] sm:$0xff] 0.0
          %568 = vst [vmem:[%s550 + $0x10] sm:$0xff] 0.0
          %569 = vst [vmem:[%s550 + $0x18] sm:$0xff] 0.0
          %570 = vst [vmem:[%s550 + $0x20] sm:$0xff] 0.0
          %571 = vst [vmem:[%s550 + $0x28] sm:$0xff] 0.0
          %572 = vst [vmem:[%s550 + $0x30] sm:$0xff] 0.0
          %573 = vst [vmem:[%s550 + $0x38] sm:$0xff] 0.0
        $region97: #{cnn_forward.7} parent=84 // pred_fallthru
          _
        %v574 = vld [vmem:[%s550] sm:$0xff]
        %v575 = vld [vmem:[%s550 + $0x8] sm:$0xff]
        %v576 = vld [vmem:[%s550 + $0x10] sm:$0xff]
        %v577 = vld [vmem:[%s550 + $0x18] sm:$0xff]
        %v578 = vld [vmem:[%s550 + $0x20] sm:$0xff]
        %v579 = vld [vmem:[%s550 + $0x28] sm:$0xff]
        %v580 = vld [vmem:[%s550 + $0x30] sm:$0xff]
        %v581 = vld [vmem:[%s550 + $0x38] sm:$0xff]
        %v582 = vld [vmem:[%s516] sm:$0xff]
        %v583 = vld [vmem:[%s516 + $0x8] sm:$0xff]
        %v584 = vld [vmem:[%s516 + $0x10] sm:$0xff]
        %v585 = vld [vmem:[%s516 + $0x18] sm:$0xff]
        %v586 = vld [vmem:[%s516 + $0x20] sm:$0xff]
        %v587 = vld [vmem:[%s516 + $0x28] sm:$0xff]
        %v588 = vld [vmem:[%s516 + $0x30] sm:$0xff]
        %v589 = vld [vmem:[%s516 + $0x38] sm:$0xff]
        %v590 = vld [vmem:[%s523] sm:$0xff]
        %v591 = vld [vmem:[%s523 + $0x8] sm:$0xff]
        %v592 = vld [vmem:[%s523 + $0x10] sm:$0xff]
        %v593 = vld [vmem:[%s523 + $0x18] sm:$0xff]
        %v594 = vld [vmem:[%s523 + $0x20] sm:$0xff]
        %v595 = vld [vmem:[%s523 + $0x28] sm:$0xff]
        %v596 = vld [vmem:[%s523 + $0x30] sm:$0xff]
        %v597 = vld [vmem:[%s523 + $0x38] sm:$0xff]
        %v598 = vld [vmem:[%s523 + $0x40] sm:$0xff]
        %v599 = vld [vmem:[%s523 + $0x48] sm:$0xff]
        %v600 = vld [vmem:[%s523 + $0x50] sm:$0xff]
        %v601 = vld [vmem:[%s523 + $0x58] sm:$0xff]
        %v602 = vld [vmem:[%s523 + $0x60] sm:$0xff]
        %v603 = vld [vmem:[%s523 + $0x68] sm:$0xff]
        %v604 = vld [vmem:[%s523 + $0x70] sm:$0xff]
        %v605 = vld [vmem:[%s523 + $0x78] sm:$0xff]
        %v606 = vld [vmem:[%s523 + $0x80] sm:$0xff]
        %v607 = vld [vmem:[%s523 + $0x88] sm:$0xff]
        %v608 = vld [vmem:[%s523 + $0x90] sm:$0xff]
        %v609 = vld [vmem:[%s523 + $0x98] sm:$0xff]
        %v610 = vld [vmem:[%s523 + $0xa0] sm:$0xff]
        %v611 = vld [vmem:[%s523 + $0xa8] sm:$0xff]
        %v612 = vld [vmem:[%s523 + $0xb0] sm:$0xff]
        %v613 = vld [vmem:[%s523 + $0xb8] sm:$0xff]
        %v614 = vld [vmem:[%s523 + $0xc0] sm:$0xff]
        %v615 = vld [vmem:[%s523 + $0xc8] sm:$0xff]
        %v616 = vld [vmem:[%s523 + $0xd0] sm:$0xff]
        %v617 = vld [vmem:[%s523 + $0xd8] sm:$0xff]
        %v618 = vld [vmem:[%s523 + $0xe0] sm:$0xff]
        %v619 = vld [vmem:[%s523 + $0xe8] sm:$0xff]
        %v620 = vld [vmem:[%s523 + $0xf0] sm:$0xff]
        %v621 = vld [vmem:[%s523 + $0xf8] sm:$0xff]
        %v622 = vld [vmem:[%s523 + $0x100] sm:$0xff]
        %v623 = vld [vmem:[%s523 + $0x108] sm:$0xff]
        %v624 = vld [vmem:[%s523 + $0x110] sm:$0xff]
        %v625 = vld [vmem:[%s523 + $0x118] sm:$0xff]
        %v626 = vld [vmem:[%s523 + $0x120] sm:$0xff]
        %v627 = vld [vmem:[%s523 + $0x128] sm:$0xff]
        %v628 = vld [vmem:[%s523 + $0x130] sm:$0xff]
        %v629 = vld [vmem:[%s523 + $0x138] sm:$0xff]
        %v630 = vld [vmem:[%s523 + $0x140] sm:$0xff]
        %v631 = vld [vmem:[%s523 + $0x148] sm:$0xff]
        %v632 = vld [vmem:[%s523 + $0x150] sm:$0xff]
        %v633 = vld [vmem:[%s523 + $0x158] sm:$0xff]
        %v634 = vld [vmem:[%s523 + $0x160] sm:$0xff]
        %v635 = vld [vmem:[%s523 + $0x168] sm:$0xff]
        %v636 = vld [vmem:[%s523 + $0x170] sm:$0xff]
        %v637 = vld [vmem:[%s523 + $0x178] sm:$0xff]
        %v638 = vld [vmem:[%s523 + $0x180] sm:$0xff]
        %v639 = vld [vmem:[%s523 + $0x188] sm:$0xff]
        %v640 = vld [vmem:[%s523 + $0x190] sm:$0xff]
        %v641 = vld [vmem:[%s523 + $0x198] sm:$0xff]
        %v642 = vld [vmem:[%s523 + $0x1a0] sm:$0xff]
        %v643 = vld [vmem:[%s523 + $0x1a8] sm:$0xff]
        %v644 = vld [vmem:[%s523 + $0x1b0] sm:$0xff]
        %v645 = vld [vmem:[%s523 + $0x1b8] sm:$0xff]
        %v646 = vld [vmem:[%s523 + $0x1c0] sm:$0xff]
        %v647 = vld [vmem:[%s523 + $0x1c8] sm:$0xff]
        %v648 = vld [vmem:[%s523 + $0x1d0] sm:$0xff]
        %v649 = vld [vmem:[%s523 + $0x1d8] sm:$0xff]
        %v650 = vld [vmem:[%s523 + $0x1e0] sm:$0xff]
        %v651 = vld [vmem:[%s523 + $0x1e8] sm:$0xff]
        %v652 = vld [vmem:[%s523 + $0x1f0] sm:$0xff]
        %v653 = vld [vmem:[%s523 + $0x1f8] sm:$0xff]
        %v662 = vunpack.c.l.b16 %v582
        %v663 = vunpack.c.h.b16 %v582
        %v664 = vunpack.c.l.b16 %v583
        %v665 = vunpack.c.h.b16 %v583
        %v666 = vunpack.c.l.b16 %v584
        %v667 = vunpack.c.h.b16 %v584
        %v668 = vunpack.c.l.b16 %v585
        %v669 = vunpack.c.h.b16 %v585
        %v670 = vunpack.c.l.b16 %v586
        %v671 = vunpack.c.h.b16 %v586
        %v672 = vunpack.c.l.b16 %v587
        %v673 = vunpack.c.h.b16 %v587
        %v674 = vunpack.c.l.b16 %v588
        %v675 = vunpack.c.h.b16 %v588
        %v676 = vunpack.c.l.b16 %v589
        %v677 = vunpack.c.h.b16 %v589
        %v678 = vpack.c.b16 %v666, %v662
        %v679 = vpack.c.b16 %v667, %v663
        %v680 = vpack.c.b16 %v668, %v664
        %v681 = vpack.c.b16 %v669, %v665
        %v682 = vpack.c.b16 %v674, %v670
        %v683 = vpack.c.b16 %v675, %v671
        %v684 = vpack.c.b16 %v676, %v672
        %v685 = vpack.c.b16 %v677, %v673
        %v758 = vunpack.c.l.b16 %v590
        %v759 = vunpack.c.h.b16 %v590
        %v760 = vunpack.c.l.b16 %v591
        %v761 = vunpack.c.h.b16 %v591
        %v762 = vunpack.c.l.b16 %v592
        %v763 = vunpack.c.h.b16 %v592
        %v764 = vunpack.c.l.b16 %v593
        %v765 = vunpack.c.h.b16 %v593
        %v766 = vunpack.c.l.b16 %v594
        %v767 = vunpack.c.h.b16 %v594
        %v768 = vunpack.c.l.b16 %v595
        %v769 = vunpack.c.h.b16 %v595
        %v770 = vunpack.c.l.b16 %v596
        %v771 = vunpack.c.h.b16 %v596
        %v772 = vunpack.c.l.b16 %v597
        %v773 = vunpack.c.h.b16 %v597
        %v774 = vunpack.c.l.b16 %v598
        %v775 = vunpack.c.h.b16 %v598
        %v776 = vunpack.c.l.b16 %v599
        %v777 = vunpack.c.h.b16 %v599
        %v778 = vunpack.c.l.b16 %v600
        %v779 = vunpack.c.h.b16 %v600
        %v780 = vunpack.c.l.b16 %v601
        %v781 = vunpack.c.h.b16 %v601
        %v782 = vunpack.c.l.b16 %v602
        %v783 = vunpack.c.h.b16 %v602
        %v784 = vunpack.c.l.b16 %v603
        %v785 = vunpack.c.h.b16 %v603
        %v786 = vunpack.c.l.b16 %v604
        %v787 = vunpack.c.h.b16 %v604
        %v788 = vunpack.c.l.b16 %v605
        %v789 = vunpack.c.h.b16 %v605
        %v790 = vunpack.c.l.b16 %v606
        %v791 = vunpack.c.h.b16 %v606
        %v792 = vunpack.c.l.b16 %v607
        %v793 = vunpack.c.h.b16 %v607
        %v794 = vunpack.c.l.b16 %v608
        %v795 = vunpack.c.h.b16 %v608
        %v796 = vunpack.c.l.b16 %v609
        %v797 = vunpack.c.h.b16 %v609
        %v798 = vunpack.c.l.b16 %v610
        %v799 = vunpack.c.h.b16 %v610
        %v800 = vunpack.c.l.b16 %v611
        %v801 = vunpack.c.h.b16 %v611
        %v802 = vunpack.c.l.b16 %v612
        %v803 = vunpack.c.h.b16 %v612
        %v804 = vunpack.c.l.b16 %v613
        %v805 = vunpack.c.h.b16 %v613
        %v806 = vunpack.c.l.b16 %v614
        %v807 = vunpack.c.h.b16 %v614
        %v808 = vunpack.c.l.b16 %v615
        %v809 = vunpack.c.h.b16 %v615
        %v810 = vunpack.c.l.b16 %v616
        %v811 = vunpack.c.h.b16 %v616
        %v812 = vunpack.c.l.b16 %v617
        %v813 = vunpack.c.h.b16 %v617
        %v814 = vunpack.c.l.b16 %v618
        %v815 = vunpack.c.h.b16 %v618
        %v816 = vunpack.c.l.b16 %v619
        %v817 = vunpack.c.h.b16 %v619
        %v818 = vunpack.c.l.b16 %v620
        %v819 = vunpack.c.h.b16 %v620
        %v820 = vunpack.c.l.b16 %v621
        %v821 = vunpack.c.h.b16 %v621
        %v822 = vunpack.c.l.b16 %v622
        %v823 = vunpack.c.h.b16 %v622
        %v824 = vunpack.c.l.b16 %v623
        %v825 = vunpack.c.h.b16 %v623
        %v826 = vunpack.c.l.b16 %v624
        %v827 = vunpack.c.h.b16 %v624
        %v828 = vunpack.c.l.b16 %v625
        %v829 = vunpack.c.h.b16 %v625
        %v830 = vunpack.c.l.b16 %v626
        %v831 = vunpack.c.h.b16 %v626
        %v832 = vunpack.c.l.b16 %v627
        %v833 = vunpack.c.h.b16 %v627
        %v834 = vunpack.c.l.b16 %v628
        %v835 = vunpack.c.h.b16 %v628
        %v836 = vunpack.c.l.b16 %v629
        %v837 = vunpack.c.h.b16 %v629
        %v838 = vunpack.c.l.b16 %v630
        %v839 = vunpack.c.h.b16 %v630
        %v840 = vunpack.c.l.b16 %v631
        %v841 = vunpack.c.h.b16 %v631
        %v842 = vunpack.c.l.b16 %v632
        %v843 = vunpack.c.h.b16 %v632
        %v844 = vunpack.c.l.b16 %v633
        %v845 = vunpack.c.h.b16 %v633
        %v846 = vunpack.c.l.b16 %v634
        %v847 = vunpack.c.h.b16 %v634
        %v848 = vunpack.c.l.b16 %v635
        %v849 = vunpack.c.h.b16 %v635
        %v850 = vunpack.c.l.b16 %v636
        %v851 = vunpack.c.h.b16 %v636
        %v852 = vunpack.c.l.b16 %v637
        %v853 = vunpack.c.h.b16 %v637
        %v854 = vunpack.c.l.b16 %v638
        %v855 = vunpack.c.h.b16 %v638
        %v856 = vunpack.c.l.b16 %v639
        %v857 = vunpack.c.h.b16 %v639
        %v858 = vunpack.c.l.b16 %v640
        %v859 = vunpack.c.h.b16 %v640
        %v860 = vunpack.c.l.b16 %v641
        %v861 = vunpack.c.h.b16 %v641
        %v862 = vunpack.c.l.b16 %v642
        %v863 = vunpack.c.h.b16 %v642
        %v864 = vunpack.c.l.b16 %v643
        %v865 = vunpack.c.h.b16 %v643
        %v866 = vunpack.c.l.b16 %v644
        %v867 = vunpack.c.h.b16 %v644
        %v868 = vunpack.c.l.b16 %v645
        %v869 = vunpack.c.h.b16 %v645
        %v870 = vunpack.c.l.b16 %v646
        %v871 = vunpack.c.h.b16 %v646
        %v872 = vunpack.c.l.b16 %v647
        %v873 = vunpack.c.h.b16 %v647
        %v874 = vunpack.c.l.b16 %v648
        %v875 = vunpack.c.h.b16 %v648
        %v876 = vunpack.c.l.b16 %v649
        %v877 = vunpack.c.h.b16 %v649
        %v878 = vunpack.c.l.b16 %v650
        %v879 = vunpack.c.h.b16 %v650
        %v880 = vunpack.c.l.b16 %v651
        %v881 = vunpack.c.h.b16 %v651
        %v882 = vunpack.c.l.b16 %v652
        %v883 = vunpack.c.h.b16 %v652
        %v884 = vunpack.c.l.b16 %v653
        %v885 = vunpack.c.h.b16 %v653
        %v886 = vpack.c.b16 %v760, %v758
        %v887 = vpack.c.b16 %v761, %v759
        %v888 = vpack.c.b16 %v764, %v762
        %v889 = vpack.c.b16 %v765, %v763
        %v890 = vpack.c.b16 %v768, %v766
        %v891 = vpack.c.b16 %v769, %v767
        %v892 = vpack.c.b16 %v772, %v770
        %v893 = vpack.c.b16 %v773, %v771
        %v894 = vpack.c.b16 %v776, %v774
        %v895 = vpack.c.b16 %v777, %v775
        %v896 = vpack.c.b16 %v780, %v778
        %v897 = vpack.c.b16 %v781, %v779
        %v898 = vpack.c.b16 %v784, %v782
        %v899 = vpack.c.b16 %v785, %v783
        %v900 = vpack.c.b16 %v788, %v786
        %v901 = vpack.c.b16 %v789, %v787
        %v902 = vpack.c.b16 %v792, %v790
        %v903 = vpack.c.b16 %v793, %v791
        %v904 = vpack.c.b16 %v796, %v794
        %v905 = vpack.c.b16 %v797, %v795
        %v906 = vpack.c.b16 %v800, %v798
        %v907 = vpack.c.b16 %v801, %v799
        %v908 = vpack.c.b16 %v804, %v802
        %v909 = vpack.c.b16 %v805, %v803
        %v910 = vpack.c.b16 %v808, %v806
        %v911 = vpack.c.b16 %v809, %v807
        %v912 = vpack.c.b16 %v812, %v810
        %v913 = vpack.c.b16 %v813, %v811
        %v914 = vpack.c.b16 %v816, %v814
        %v915 = vpack.c.b16 %v817, %v815
        %v916 = vpack.c.b16 %v820, %v818
        %v917 = vpack.c.b16 %v821, %v819
        %v918 = vpack.c.b16 %v824, %v822
        %v919 = vpack.c.b16 %v825, %v823
        %v920 = vpack.c.b16 %v828, %v826
        %v921 = vpack.c.b16 %v829, %v827
        %v922 = vpack.c.b16 %v832, %v830
        %v923 = vpack.c.b16 %v833, %v831
        %v924 = vpack.c.b16 %v836, %v834
        %v925 = vpack.c.b16 %v837, %v835
        %v926 = vpack.c.b16 %v840, %v838
        %v927 = vpack.c.b16 %v841, %v839
        %v928 = vpack.c.b16 %v844, %v842
        %v929 = vpack.c.b16 %v845, %v843
        %v930 = vpack.c.b16 %v848, %v846
        %v931 = vpack.c.b16 %v849, %v847
        %v932 = vpack.c.b16 %v852, %v850
        %v933 = vpack.c.b16 %v853, %v851
        %v934 = vpack.c.b16 %v856, %v854
        %v935 = vpack.c.b16 %v857, %v855
        %v936 = vpack.c.b16 %v860, %v858
        %v937 = vpack.c.b16 %v861, %v859
        %v938 = vpack.c.b16 %v864, %v862
        %v939 = vpack.c.b16 %v865, %v863
        %v940 = vpack.c.b16 %v868, %v866
        %v941 = vpack.c.b16 %v869, %v867
        %v942 = vpack.c.b16 %v872, %v870
        %v943 = vpack.c.b16 %v873, %v871
        %v944 = vpack.c.b16 %v876, %v874
        %v945 = vpack.c.b16 %v877, %v875
        %v946 = vpack.c.b16 %v880, %v878
        %v947 = vpack.c.b16 %v881, %v879
        %v948 = vpack.c.b16 %v884, %v882
        %v949 = vpack.c.b16 %v885, %v883
        %1014 = vmatprep.subr.bf16.mxu0 %v887
        %1015 = vmatpush1.bf16.msra.mxu0 %v886
        %1016 = vmatprep.subr.bf16.mxu0 %v889
        %1017 = vmatpush1.bf16.msra.mxu0 %v888
        %1018 = vmatprep.subr.bf16.mxu0 %v891
        %1019 = vmatpush1.bf16.msra.mxu0 %v890
        %1020 = vmatprep.subr.bf16.mxu0 %v893
        %1021 = vmatpush1.bf16.msra.mxu0 %v892
        %1022 = vmatprep.subr.bf16.mxu0 %v895
        %1023 = vmatpush1.bf16.msra.mxu0 %v894
        %1024 = vmatprep.subr.bf16.mxu0 %v897
        %1025 = vmatpush1.bf16.msra.mxu0 %v896
        %1026 = vmatprep.subr.bf16.mxu0 %v899
        %1027 = vmatpush1.bf16.msra.mxu0 %v898
        %1028 = vmatprep.subr.bf16.mxu0 %v901
        %1029 = vmatpush1.bf16.msra.mxu0 %v900
        %1030 = vmatprep.subr.bf16.mxu0 %v903
        %1031 = vmatpush1.bf16.msra.mxu0 %v902
        %1032 = vmatprep.subr.bf16.mxu0 %v905
        %1033 = vmatpush1.bf16.msra.mxu0 %v904
        %1034 = vmatprep.subr.bf16.mxu0 %v907
        %1035 = vmatpush1.bf16.msra.mxu0 %v906
        %1036 = vmatprep.subr.bf16.mxu0 %v909
        %1037 = vmatpush1.bf16.msra.mxu0 %v908
        %1038 = vmatprep.subr.bf16.mxu0 %v911
        %1039 = vmatpush1.bf16.msra.mxu0 %v910
        %1040 = vmatprep.subr.bf16.mxu0 %v913
        %1041 = vmatpush1.bf16.msra.mxu0 %v912
        %1042 = vmatprep.subr.bf16.mxu0 %v915
        %1043 = vmatpush1.bf16.msra.mxu0 %v914
        %1044 = vmatprep.subr.bf16.mxu0 %v917
        %1045 = vmatpush1.bf16.msra.mxu0 %v916
        %1046 = vmatprep.mubr.bf16.mxu0 %v679
        %1047 = vmatmul.mubr.bf16.gmra.mrb[0].mxu0 %v678
        %v1048 = vpop.f32.mrb[0].mxu0
        %v1049 = vadd.f32 0.0, %v1048
        %v1050 = vpop.f32.mrb[0].mxu0
        %v1051 = vadd.f32 0.0, %v1050
        %v1052 = vpop.f32.mrb[0].mxu0
        %v1053 = vadd.f32 0.0, %v1052
        %v1054 = vpop.f32.mrb[0].mxu0
        %v1055 = vadd.f32 0.0, %v1054
        %1056 = vmatprep.mubr.bf16.mxu0 %v683
        %1057 = vmatmul.mubr.bf16.gmra.mrb[0].mxu0 %v682
        %v1058 = vpop.f32.mrb[0].mxu0
        %v1059 = vadd.f32 0.0, %v1058
        %v1060 = vpop.f32.mrb[0].mxu0
        %v1061 = vadd.f32 0.0, %v1060
        %v1062 = vpop.f32.mrb[0].mxu0
        %v1063 = vadd.f32 0.0, %v1062
        %v1064 = vpop.f32.mrb[0].mxu0
        %v1065 = vadd.f32 0.0, %v1064
        %1066 = vdwg.mxu0
        %1067 = vmatprep.subr.bf16.mxu0 %v919
        %1068 = vmatpush1.bf16.msra.mxu0 %v918
        %1069 = vmatprep.subr.bf16.mxu0 %v921
        %1070 = vmatpush1.bf16.msra.mxu0 %v920
        %1071 = vmatprep.subr.bf16.mxu0 %v923
        %1072 = vmatpush1.bf16.msra.mxu0 %v922
        %1073 = vmatprep.subr.bf16.mxu0 %v925
        %1074 = vmatpush1.bf16.msra.mxu0 %v924
        %1075 = vmatprep.subr.bf16.mxu0 %v927
        %1076 = vmatpush1.bf16.msra.mxu0 %v926
        %1077 = vmatprep.subr.bf16.mxu0 %v929
        %1078 = vmatpush1.bf16.msra.mxu0 %v928
        %1079 = vmatprep.subr.bf16.mxu0 %v931
        %1080 = vmatpush1.bf16.msra.mxu0 %v930
        %1081 = vmatprep.subr.bf16.mxu0 %v933
        %1082 = vmatpush1.bf16.msra.mxu0 %v932
        %1083 = vmatprep.subr.bf16.mxu0 %v935
        %1084 = vmatpush1.bf16.msra.mxu0 %v934
        %1085 = vmatprep.subr.bf16.mxu0 %v937
        %1086 = vmatpush1.bf16.msra.mxu0 %v936
        %1087 = vmatprep.subr.bf16.mxu0 %v939
        %1088 = vmatpush1.bf16.msra.mxu0 %v938
        %1089 = vmatprep.subr.bf16.mxu0 %v941
        %1090 = vmatpush1.bf16.msra.mxu0 %v940
        %1091 = vmatprep.subr.bf16.mxu0 %v943
        %1092 = vmatpush1.bf16.msra.mxu0 %v942
        %1093 = vmatprep.subr.bf16.mxu0 %v945
        %1094 = vmatpush1.bf16.msra.mxu0 %v944
        %1095 = vmatprep.subr.bf16.mxu0 %v947
        %1096 = vmatpush1.bf16.msra.mxu0 %v946
        %1097 = vmatprep.subr.bf16.mxu0 %v949
        %1098 = vmatpush1.bf16.msra.mxu0 %v948
        %1099 = vmatprep.mubr.bf16.mxu0 %v681
        %1100 = vmatmul.mubr.bf16.gmra.mrb[0].mxu0 %v680
        %v1101 = vpop.f32.mrb[0].mxu0
        %v1102 = vadd.f32 %v1049, %v1101
        %v1103 = vpop.f32.mrb[0].mxu0
        %v1104 = vadd.f32 %v1051, %v1103
        %v1105 = vpop.f32.mrb[0].mxu0
        %v1106 = vadd.f32 %v1053, %v1105
        %v1107 = vpop.f32.mrb[0].mxu0
        %v1108 = vadd.f32 %v1055, %v1107
        %1109 = vmatprep.mubr.bf16.mxu0 %v685
        %1110 = vmatmul.mubr.bf16.gmra.mrb[0].mxu0 %v684
        %v1111 = vpop.f32.mrb[0].mxu0
        %v1112 = vadd.f32 %v1059, %v1111
        %v1113 = vpop.f32.mrb[0].mxu0
        %v1114 = vadd.f32 %v1061, %v1113
        %v1115 = vpop.f32.mrb[0].mxu0
        %v1116 = vadd.f32 %v1063, %v1115
        %v1117 = vpop.f32.mrb[0].mxu0
        %v1118 = vadd.f32 %v1065, %v1117
        %1119 = vdwg.mxu0
        %v1120 = vadd.f32 %v574, %v1102
        %v1121 = vadd.f32 %v575, %v1104
        %v1122 = vadd.f32 %v576, %v1106
        %v1123 = vadd.f32 %v577, %v1108
        %v1124 = vadd.f32 %v578, %v1112
        %v1125 = vadd.f32 %v579, %v1114
        %v1126 = vadd.f32 %v580, %v1116
        %v1127 = vadd.f32 %v581, %v1118
        %1128 = vst [vmem:[%s550] sm:$0xff] %v1120
        %1129 = vst [vmem:[%s550 + $0x8] sm:$0xff] %v1121
        %1130 = vst [vmem:[%s550 + $0x10] sm:$0xff] %v1122
        %1131 = vst [vmem:[%s550 + $0x18] sm:$0xff] %v1123
        %1132 = vst [vmem:[%s550 + $0x20] sm:$0xff] %v1124
        %1133 = vst [vmem:[%s550 + $0x28] sm:$0xff] %v1125
        %1134 = vst [vmem:[%s550 + $0x30] sm:$0xff] %v1126
        %1135 = vst [vmem:[%s550 + $0x38] sm:$0xff] %v1127
        %p1136 = scmp.eq.s32.totalorder %s21, 8
        // Predicated region
        $region98: #{cnn_forward.7} parent=84 // pred_check
          %p1137 = pneg %p1136
        $region99: #{cnn_forward.7} parent=84 // pred_check_branch
          %1139 = sbr.rel (%p1137) target = $region101
        $region100: #{cnn_forward.7} parent=84 // pred_region
          %v1140 = vld [vmem:[%s550] sm:$0xff]
          %v1141 = vld [vmem:[%s550 + $0x8] sm:$0xff]
          %v1142 = vld [vmem:[%s550 + $0x10] sm:$0xff]
          %v1143 = vld [vmem:[%s550 + $0x18] sm:$0xff]
          %v1144 = vld [vmem:[%s550 + $0x20] sm:$0xff]
          %v1145 = vld [vmem:[%s550 + $0x28] sm:$0xff]
          %v1146 = vld [vmem:[%s550 + $0x30] sm:$0xff]
          %v1147 = vld [vmem:[%s550 + $0x38] sm:$0xff]
          %v1148 = vld [vmem:[%s558] sm:$0x3]
          %v1150 = vlaneseq
          %v1151 = vshrl.u32 %v1150, 7
          %v1152 = vsub.s32 0, %v1151
          %v1153 = vrot.slane %v1148, %v1152
          %v1154 = vlaneseq
          %v1155 = vshrl.u32 %v1154, 7
          %v1156 = vsub.s32 1, %v1155
          %v1157 = vrot.slane %v1148, %v1156
          %v1160 = vadd.f32 %v1140, %v1153
          %v1161 = vadd.f32 %v1141, %v1157
          %v1162 = vadd.f32 %v1142, %v1153
          %v1163 = vadd.f32 %v1143, %v1157
          %v1164 = vadd.f32 %v1144, %v1153
          %v1165 = vadd.f32 %v1145, %v1157
          %v1166 = vadd.f32 %v1146, %v1153
          %v1167 = vadd.f32 %v1147, %v1157
          %v1168 = vmax.f32 %v1160, 0.0
          %v1169 = vmax.f32 %v1161, 0.0
          %v1170 = vmax.f32 %v1162, 0.0
          %v1171 = vmax.f32 %v1163, 0.0
          %v1172 = vmax.f32 %v1164, 0.0
          %v1173 = vmax.f32 %v1165, 0.0
          %v1174 = vmax.f32 %v1166, 0.0
          %v1175 = vmax.f32 %v1167, 0.0
          %1176 = vst [vmem:[%s550] sm:$0xff] %v1168
          %1177 = vst [vmem:[%s550 + $0x8] sm:$0xff] %v1169
          %1178 = vst [vmem:[%s550 + $0x10] sm:$0xff] %v1170
          %1179 = vst [vmem:[%s550 + $0x18] sm:$0xff] %v1171
          %1180 = vst [vmem:[%s550 + $0x20] sm:$0xff] %v1172
          %1181 = vst [vmem:[%s550 + $0x28] sm:$0xff] %v1173
          %1182 = vst [vmem:[%s550 + $0x30] sm:$0xff] %v1174
          %1183 = vst [vmem:[%s550 + $0x38] sm:$0xff] %v1175
        $region101: #{cnn_forward.7} parent=84 // pred_fallthru
          _
        %s1184 = sand.u32 %s125, 1
        %s1185 = sand.u32 %s125, 1
        %s1186 = smul.addr %s1185, 64
        %s1187 = scalar_lea.vmem [#allocation4], %s1186
        // Predicated region
        $region102: #{cnn_forward.7} parent=84 // pred_check
          %p1188 = pneg %p135
        $region103: #{cnn_forward.7} parent=84 // pred_check_branch
          %1190 = sbr.rel (%p1188) target = $region105
        $region104: #{cnn_forward.7} parent=84 // pred_region
          %s1191 = smul.u32 4, %s19
          %s1192 = smul.u32 2, %s20
          %s1193 = smul.addr %s1191, 8
          %s1194 = sadd.s32 %s1192, %s1193
          %s1195 = smul.addr %s1194, 8
          %s1196 = scalar_lea.vmem %s3, %s1195
          // Predicated region
          $region106: #{cnn_forward.7} parent=104 // pred_check
            _
          $region107: #{cnn_forward.7} parent=104 // pred_check_branch
            %1198 = sbr.rel (0) target = $region109
          $region108: #{cnn_forward.7} parent=104 // pred_region
            // Predicated region
            $region110: #{cnn_forward.7} parent=108 // pred_check
              _
            $region111: #{cnn_forward.7} parent=108 // pred_check_branch
              %1200 = sbr.rel (0) target = $region113
            $region112: #{cnn_forward.7} parent=108 // pred_region
              loop: start=0, step=1, limit=1
              $region114: #{cnn_forward.7} parent=112 // loop_pre_header
                _
              $region115: #{cnn_forward.7} parent=112 // loop_header
                %s1202 = sphi 0, %s1206
                %p1203 = scmp.ge.s32.totalorder %s1202, 1
                %s1207 = sphi %s1187, %s1187
                %s1208 = sphi %s1196, %s1196
              $region116: #{cnn_forward.7} parent=112 // loop_header_branch
                %1205 = sbr.rel (%p1203) target = $region120
              $region117: #{cnn_forward.7} parent=112 // loop_body
                %v1209 = vld [vmem:[%s1207] sm:$0xff]
                %1210 = vst [vmem:[%s1208] sm:$0xff] %v1209
                %v1211 = vld [vmem:[%s1207 + $0x8] sm:$0xff]
                %1212 = vst [vmem:[%s1208 + $0x8] sm:$0xff] %v1211
                %v1213 = vld [vmem:[%s1207 + $0x10] sm:$0xff]
                %1214 = vst [vmem:[%s1208 + $0x40] sm:$0xff] %v1213
                %v1215 = vld [vmem:[%s1207 + $0x18] sm:$0xff]
                %1216 = vst [vmem:[%s1208 + $0x48] sm:$0xff] %v1215
                %v1217 = vld [vmem:[%s1207 + $0x20] sm:$0xff]
                %1218 = vst [vmem:[%s1208 + $0x80] sm:$0xff] %v1217
                %v1219 = vld [vmem:[%s1207 + $0x28] sm:$0xff]
                %1220 = vst [vmem:[%s1208 + $0x88] sm:$0xff] %v1219
                %v1221 = vld [vmem:[%s1207 + $0x30] sm:$0xff]
                %1222 = vst [vmem:[%s1208 + $0xc0] sm:$0xff] %v1221
                %v1223 = vld [vmem:[%s1207 + $0x38] sm:$0xff]
                %1224 = vst [vmem:[%s1208 + $0xc8] sm:$0xff] %v1223
              $region118: #{cnn_forward.7} parent=112 // loop_footer
                %s1206 = sadd.s32 1, %s1202
              $region119: #{cnn_forward.7} parent=112 // loop_footer_branch
                %1201 = sbr.rel target = $region115
              $region120: #{cnn_forward.7} parent=112 // loop_exit
                _
            $region113: #{cnn_forward.7} parent=108 // pred_fallthru
              _
            // Predicated region
            $region121: #{cnn_forward.7} parent=108 // pred_check
              _
            $region122: #{cnn_forward.7} parent=108 // pred_check_branch
              %1226 = sbr.rel target = $region124
            $region123: #{cnn_forward.7} parent=108 // pred_region
              _
            $region124: #{cnn_forward.7} parent=108 // pred_fallthru
              _
          $region109: #{cnn_forward.7} parent=104 // pred_fallthru
            _
          %1227 = vnop
        $region105: #{cnn_forward.7} parent=84 // pred_fallthru
          _
      $region85: #{cnn_forward.7} parent=5 // pred_fallthru
        _
      %p1228 = scmp.le.s32.totalorder 2, %s9
      // Predicated region
      $region125: #{cnn_forward.7} parent=5 // pred_check
        %p1229 = pneg %p1228
      $region126: #{cnn_forward.7} parent=5 // pred_check_branch
        %1231 = sbr.rel (%p1229) target = $region128
      $region127: #{cnn_forward.7} parent=5 // pred_region
        %s1232 = ssub.s32 %s9, 2
        // Predicated region
        $region129: #{cnn_forward.7} parent=127 // pred_check
          %p1233 = pneg %p141
        $region130: #{cnn_forward.7} parent=127 // pred_check_branch
          %1235 = sbr.rel (%p1233) target = $region132
        $region131: #{cnn_forward.7} parent=127 // pred_region
          %s1236 = sand.u32 %s126, 1
          %s1237 = sand.u32 %s126, 1
          %s1238 = smul.addr %s1237, 64
          %s1239 = scalar_lea.vmem [#allocation4], %s1238
        $region132: #{cnn_forward.7} parent=127 // pred_fallthru
          _
      $region128: #{cnn_forward.7} parent=5 // pred_fallthru
        _
    $region6: #{cnn_forward.7} parent=1 // loop_footer
      %s13 = sadd.s32 1, %s9
    $region7: #{cnn_forward.7} parent=1 // loop_footer_branch
      %8 = sbr.rel target = $region3
    $region8: #{cnn_forward.7} parent=1 // loop_exit
      _

// kernel: cnn_forward.8
$region0: #{cnn_forward.8}
  #allocation0 [shape = 'u32[]', space=smem, size = 0x4, offset = 0x4, fixed_abs, tag = 'smem constant byte address 0x4 - core index']
  #allocation1 [shape = 'u32[144,128]{1,0:T(1,128)}', space=vmem, size = 0x12000, scoped, tag = 'internal scratch']
  %s0 = inlined_call_operand.vmem [shape: f32[2,9,1024], index: 0, kind: input, shape index: {}]
  %s1 = inlined_call_operand.vmem [shape: f32[2,1024], index: 1, kind: output, shape index: {}]
  %s2 = sld [smem:[#allocation0]]
  $region60: #{cnn_forward.8} parent=0
    _
  %s4 = ssub.s32 1, %s2
  %s5 = scalar_select 0, %s4, %s2
  $region1: #{cnn_forward.8} parent=0
    #allocation2 [shape = 'u8[131072]{0}', space=vmem, size = 0x20000, scoped, tag = 'input window, operand 0']
    loop: start=0, step=1, limit=4
    $region2: #{cnn_forward.8} parent=1 // loop_pre_header
      _
    $region3: #{cnn_forward.8} parent=1 // loop_header
      %s7 = sphi 0, %s11
      %p8 = scmp.ge.s32.totalorder %s7, 4
      %s17 = sphi 0, %s19
      %s20 = sphi 0, %s17
      %s21 = sphi 0, %s20
      %s37 = sphi 0, %s21
      %s43 = sphi 0, %s45
      %s46 = sphi 0, %s43
      %s47 = sphi 0, %s46
      %s63 = sphi 0, %s47
    $region4: #{cnn_forward.8} parent=1 // loop_header_branch
      %10 = sbr.rel (%p8) target = $region8
    $region5: #{cnn_forward.8} parent=1 // loop_body
      %s12 = ssub.s32 %s7, 1
      %s13 = ssub.s32 %s7, 2
      %s14 = sadd.s32 %s7, 1
      %s15 = ssub.s32 %s7, %s14
      %p16 = scmp.eq.s32.totalorder %s15, 0
      %s18 = sadd.s32 %s17, 1
      %s19 = scalar_select %p16, %s17, %s18
      %p22 = pneg %p16
      %p23 = scmp.eq.s32.totalorder %s7, 1
      %p24 = por %p22, %p23
      %p25 = scmp.ne.s32.totalorder %s17, %s20
      %p26 = scmp.eq.s32.totalorder %s7, 0
      %p27 = por %p25, %p26
      %p28 = scmp.ne.s32.totalorder %s17, %s20
      %p29 = scmp.eq.s32.totalorder %s12, 1
      %p30 = por %p28, %p29
      %p31 = scmp.ne.s32.totalorder %s20, %s21
      %p32 = scmp.eq.s32.totalorder %s12, 0
      %p33 = por %p31, %p32
      %p34 = scmp.ne.s32.totalorder %s20, %s21
      %p35 = scmp.eq.s32.totalorder %s13, 1
      %p36 = por %p34, %p35
      %p38 = scmp.ne.s32.totalorder %s21, %s37
      %p39 = scmp.eq.s32.totalorder %s13, 0
      %p40 = por %p38, %p39
      %s41 = ssub.s32 %s7, %s14
      %p42 = scmp.eq.s32.totalorder %s41, 0
      %s44 = sadd.s32 %s43, 1
      %s45 = scalar_select %p42, %s43, %s44
      %p48 = pneg %p42
      %p49 = scmp.eq.s32.totalorder %s7, 1
      %p50 = por %p48, %p49
      %p51 = scmp.ne.s32.totalorder %s43, %s46
      %p52 = scmp.eq.s32.totalorder %s7, 0
      %p53 = por %p51, %p52
      %p54 = scmp.ne.s32.totalorder %s43, %s46
      %p55 = scmp.eq.s32.totalorder %s12, 1
      %p56 = por %p54, %p55
      %p57 = scmp.ne.s32.totalorder %s46, %s47
      %p58 = scmp.eq.s32.totalorder %s12, 0
      %p59 = por %p57, %p58
      %p60 = scmp.ne.s32.totalorder %s46, %s47
      %p61 = scmp.eq.s32.totalorder %s13, 1
      %p62 = por %p60, %p61
      %p64 = scmp.ne.s32.totalorder %s47, %s63
      %p65 = scmp.eq.s32.totalorder %s13, 0
      %p66 = por %p64, %p65
      %p67 = scmp.le.s32.totalorder 1, %s7
      %p68 = scmp.lt.s32.totalorder %s7, 3
      %p69 = pnand %p67, %p68
      %p70 = pneg %p69
      // Predicated region
      $region9: #{cnn_forward.8} parent=5 // pred_check
        _
      $region10: #{cnn_forward.8} parent=5 // pred_check_branch
        %72 = sbr.rel (%p69) target = $region12
      $region11: #{cnn_forward.8} parent=5 // pred_region
        %s73 = ssub.s32 %s7, 1
      $region12: #{cnn_forward.8} parent=5 // pred_fallthru
        _
      %p74 = scmp.lt.s32.totalorder %s7, 2
      // Predicated region
      $region13: #{cnn_forward.8} parent=5 // pred_check
        %p75 = pneg %p74
      $region14: #{cnn_forward.8} parent=5 // pred_check_branch
        %77 = sbr.rel (%p75) target = $region16
      $region15: #{cnn_forward.8} parent=5 // pred_region
        // Predicated region
        $region17: #{cnn_forward.8} parent=15 // pred_check
          %p78 = pneg %p27
        $region18: #{cnn_forward.8} parent=15 // pred_check_branch
          %80 = sbr.rel (%p78) target = $region20
        $region19: #{cnn_forward.8} parent=15 // pred_region
          %s81 = sand.u32 %s17, 1
          %s82 = sand.u32 %s17, 1
          %s83 = smul.addr %s82, 128
          %s84 = scalar_lea.vmem [#allocation2], %s83
          %s85 = smul.u32 4, %s7
          %s86 = smul.addr %s85, 8
          %s87 = scalar_lea.vmem %s0, %s86
          // Predicated region
          $region21: #{cnn_forward.8} parent=19 // pred_check
            _
          $region22: #{cnn_forward.8} parent=19 // pred_check_branch
            %89 = sbr.rel (0) target = $region24
          $region23: #{cnn_forward.8} parent=19 // pred_region
            // Predicated region
            $region25: #{cnn_forward.8} parent=23 // pred_check
              _
            $region26: #{cnn_forward.8} parent=23 // pred_check_branch
              %91 = sbr.rel (0) target = $region28
            $region27: #{cnn_forward.8} parent=23 // pred_region
              loop: start=0, step=1, limit=1
              $region29: #{cnn_forward.8} parent=27 // loop_pre_header
                _
              $region30: #{cnn_forward.8} parent=27 // loop_header
                %s93 = sphi 0, %s97
                %p94 = scmp.ge.s32.totalorder %s93, 1
                %s98 = sphi %s87, %s87
                %s99 = sphi %s84, %s84
              $region31: #{cnn_forward.8} parent=27 // loop_header_branch
                %96 = sbr.rel (%p94) target = $region35
              $region32: #{cnn_forward.8} parent=27 // loop_body
                %v100 = vld [vmem:[%s98] sm:$0xff]
                %101 = vst [vmem:[%s99] sm:$0xff] %v100
                %v102 = vld [vmem:[%s98 + $0x8] sm:$0xff]
                %103 = vst [vmem:[%s99 + $0x8] sm:$0xff] %v102
                %v104 = vld [vmem:[%s98 + $0x10] sm:$0xff]
                %105 = vst [vmem:[%s99 + $0x10] sm:$0xff] %v104
                %v106 = vld [vmem:[%s98 + $0x18] sm:$0xff]
                %107 = vst [vmem:[%s99 + $0x18] sm:$0xff] %v106
                %v108 = vld [vmem:[%s98 + $0x40] sm:$0xff]
                %109 = vst [vmem:[%s99 + $0x20] sm:$0xff] %v108
                %v110 = vld [vmem:[%s98 + $0x48] sm:$0xff]
                %111 = vst [vmem:[%s99 + $0x28] sm:$0xff] %v110
                %v112 = vld [vmem:[%s98 + $0x50] sm:$0xff]
                %113 = vst [vmem:[%s99 + $0x30] sm:$0xff] %v112
                %v114 = vld [vmem:[%s98 + $0x58] sm:$0xff]
                %115 = vst [vmem:[%s99 + $0x38] sm:$0xff] %v114
                %v116 = vld [vmem:[%s98 + $0x80] sm:$0xff]
                %117 = vst [vmem:[%s99 + $0x40] sm:$0xff] %v116
                %v118 = vld [vmem:[%s98 + $0x88] sm:$0xff]
                %119 = vst [vmem:[%s99 + $0x48] sm:$0xff] %v118
                %v120 = vld [vmem:[%s98 + $0x90] sm:$0xff]
                %121 = vst [vmem:[%s99 + $0x50] sm:$0xff] %v120
                %v122 = vld [vmem:[%s98 + $0x98] sm:$0xff]
                %123 = vst [vmem:[%s99 + $0x58] sm:$0xff] %v122
                %v124 = vld [vmem:[%s98 + $0xc0] sm:$0xff]
                %125 = vst [vmem:[%s99 + $0x60] sm:$0xff] %v124
                %v126 = vld [vmem:[%s98 + $0xc8] sm:$0xff]
                %127 = vst [vmem:[%s99 + $0x68] sm:$0xff] %v126
                %v128 = vld [vmem:[%s98 + $0xd0] sm:$0xff]
                %129 = vst [vmem:[%s99 + $0x70] sm:$0xff] %v128
                %v130 = vld [vmem:[%s98 + $0xd8] sm:$0xff]
                %131 = vst [vmem:[%s99 + $0x78] sm:$0xff] %v130
              $region33: #{cnn_forward.8} parent=27 // loop_footer
                %s97 = sadd.s32 1, %s93
              $region34: #{cnn_forward.8} parent=27 // loop_footer_branch
                %92 = sbr.rel target = $region30
              $region35: #{cnn_forward.8} parent=27 // loop_exit
                _
            $region28: #{cnn_forward.8} parent=23 // pred_fallthru
              _
            // Predicated region
            $region36: #{cnn_forward.8} parent=23 // pred_check
              _
            $region37: #{cnn_forward.8} parent=23 // pred_check_branch
              %133 = sbr.rel target = $region39
            $region38: #{cnn_forward.8} parent=23 // pred_region
              _
            $region39: #{cnn_forward.8} parent=23 // pred_fallthru
              _
          $region24: #{cnn_forward.8} parent=19 // pred_fallthru
            _
          %134 = vnop
        $region20: #{cnn_forward.8} parent=15 // pred_fallthru
          _
      $region16: #{cnn_forward.8} parent=5 // pred_fallthru
        _
      %p135 = scmp.le.s32.totalorder 1, %s7
      %p136 = scmp.lt.s32.totalorder %s7, 3
      %p137 = pnand %p135, %p136
      %p138 = pneg %p137
      // Predicated region
      $region40: #{cnn_forward.8} parent=5 // pred_check
        _
      $region41: #{cnn_forward.8} parent=5 // pred_check_branch
        %140 = sbr.rel (%p137) target = $region43
      $region42: #{cnn_forward.8} parent=5 // pred_region
        %s141 = ssub.s32 %s7, 1
        %s142 = sand.u32 %s20, 1
        %s143 = sand.u32 %s20, 1
        %s144 = smul.addr %s143, 128
        %s145 = scalar_lea.vmem [#allocation2], %s144
        // Predicated region
        $region44: #{cnn_forward.8} parent=42 // pred_check
          %p146 = pneg %p33
        $region45: #{cnn_forward.8} parent=42 // pred_check_branch
          %148 = sbr.rel (%p146) target = $region47
        $region46: #{cnn_forward.8} parent=42 // pred_region
          _
        $region47: #{cnn_forward.8} parent=42 // pred_fallthru
          _
        %s149 = sand.u32 %s20, 1
        %s150 = sand.u32 %s20, 1
        %s151 = smul.addr %s150, 128
        %s152 = scalar_lea.vmem [#allocation2], %s151
        %p153 = pneg %p33
        %p154 = pneg %p30
        %p155 = pneg %p59
        %p156 = pneg %p56
        %s157 = smul.u32 4, %s12
        %p158 = scmp.lt.s32.totalorder %s157, 7
        %s159 = scalar_select %p158, %s157, 7
        %s160 = smul.addr %s159, 2
        %s161 = scalar_lea.vmem %s1, %s160
        %s162 = smul.u32 4, %s12
        %s163 = smul.u32 4, %s12
        %p164 = scmp.lt.s32.totalorder %s163, 7
        %s165 = scalar_select %p164, %s163, 7
        %s166 = smul.addr %s165, 2
        %s167 = scalar_lea.vmem %s1, %s166
        %s168 = smul.u32 4, %s12
        %v169 = vld [vmem:[%s145] sm:$0xff]
        %v170 = vld [vmem:[%s145 + $0x8] sm:$0xff]
        %v171 = vld [vmem:[%s145 + $0x10] sm:$0xff]
        %v172 = vld [vmem:[%s145 + $0x18] sm:$0xff]
        %v173 = vld [vmem:[%s145 + $0x20] sm:$0x1]
        %v174 = vld [vmem:[%s145 + $0x28] sm:$0x1]
        %v175 = vld [vmem:[%s145 + $0x30] sm:$0x1]
        %v176 = vld [vmem:[%s145 + $0x38] sm:$0x1]
        %v177 = vld [vmem:[%s145 + $0x40] sm:$0xff]
        %v178 = vld [vmem:[%s145 + $0x48] sm:$0xff]
        %v179 = vld [vmem:[%s145 + $0x50] sm:$0xff]
        %v180 = vld [vmem:[%s145 + $0x58] sm:$0xff]
        %v181 = vld [vmem:[%s145 + $0x60] sm:$0x1]
        %v182 = vld [vmem:[%s145 + $0x68] sm:$0x1]
        %v183 = vld [vmem:[%s145 + $0x70] sm:$0x1]
        %v184 = vld [vmem:[%s145 + $0x78] sm:$0x1]
        %vm185 = vcmask 1040384
        %v186 = vsel %vm185, %v173, 0.0
        %v187 = vadd.f32 %v169, %v186
        %v188 = vrot.slane %v187, 4
        %v189 = vadd.f32 %v187, %v188
        %v190 = vrot.slane %v189, 2
        %v191 = vadd.f32 %v189, %v190
        %v192 = vrot.slane %v191, 1
        %v193 = vadd.f32 %v191, %v192
        %v194 = vsel %vm185, %v174, 0.0
        %v195 = vadd.f32 %v170, %v194
        %v196 = vrot.slane %v195, 4
        %v197 = vadd.f32 %v195, %v196
        %v198 = vrot.slane %v197, 2
        %v199 = vadd.f32 %v197, %v198
        %v200 = vrot.slane %v199, 1
        %v201 = vadd.f32 %v199, %v200
        %v202 = vsel %vm185, %v175, 0.0
        %v203 = vadd.f32 %v171, %v202
        %v204 = vrot.slane %v203, 4
        %v205 = vadd.f32 %v203, %v204
        %v206 = vrot.slane %v205, 2
        %v207 = vadd.f32 %v205, %v206
        %v208 = vrot.slane %v207, 1
        %v209 = vadd.f32 %v207, %v208
        %v210 = vsel %vm185, %v176, 0.0
        %v211 = vadd.f32 %v172, %v210
        %v212 = vrot.slane %v211, 4
        %v213 = vadd.f32 %v211, %v212
        %v214 = vrot.slane %v213, 2
        %v215 = vadd.f32 %v213, %v214
        %v216 = vrot.slane %v215, 1
        %v217 = vadd.f32 %v215, %v216
        %v218 = vsel %vm185, %v181, 0.0
        %v219 = vadd.f32 %v177, %v218
        %v220 = vrot.slane %v219, 4
        %v221 = vadd.f32 %v219, %v220
        %v222 = vrot.slane %v221, 2
        %v223 = vadd.f32 %v221, %v222
        %v224 = vrot.slane %v223, 1
        %v225 = vadd.f32 %v223, %v224
        %v226 = vsel %vm185, %v182, 0.0
        %v227 = vadd.f32 %v178, %v226
        %v228 = vrot.slane %v227, 4
        %v229 = vadd.f32 %v227, %v228
        %v230 = vrot.slane %v229, 2
        %v231 = vadd.f32 %v229, %v230
        %v232 = vrot.slane %v231, 1
        %v233 = vadd.f32 %v231, %v232
        %v234 = vsel %vm185, %v183, 0.0
        %v235 = vadd.f32 %v179, %v234
        %v236 = vrot.slane %v235, 4
        %v237 = vadd.f32 %v235, %v236
        %v238 = vrot.slane %v237, 2
        %v239 = vadd.f32 %v237, %v238
        %v240 = vrot.slane %v239, 1
        %v241 = vadd.f32 %v239, %v240
        %v242 = vsel %vm185, %v184, 0.0
        %v243 = vadd.f32 %v180, %v242
        %v244 = vrot.slane %v243, 4
        %v245 = vadd.f32 %v243, %v244
        %v246 = vrot.slane %v245, 2
        %v247 = vadd.f32 %v245, %v246
        %v248 = vrot.slane %v247, 1
        %v249 = vadd.f32 %v247, %v248
        %v250 = vrcp.pop 9.0
        %v251 = vmul.f32 %v193, %v250
        %v252 = vmul.f32 %v201, %v250
        %v253 = vmul.f32 %v209, %v250
        %v254 = vmul.f32 %v217, %v250
        %v255 = vmul.f32 %v225, %v250
        %v256 = vmul.f32 %v233, %v250
        %v257 = vmul.f32 %v241, %v250
        %v258 = vmul.f32 %v249, %v250
        %v267 = vcombine.low %v251, %v252
        %v268 = vcombine.low %v253, %v254
        %v270 = vunpack.c.l.s4 1983009808
        %v271 = vunpack.c.0.s8 %v270
        %v272 = vlaneseq
        %v273 = vshrl.u32 %v272, 7
        %v274 = vsub.s32 %v271, %v273
        %v275 = vrot.slane %v267, %v274
        %v277 = vunpack.c.l.s4 1983009808
        %v278 = vunpack.c.0.s8 %v277
        %v279 = vlaneseq
        %v280 = vshrl.u32 %v279, 7
        %v281 = vsub.s32 %v278, %v280
        %v282 = vrot.slane %v268, %v281
        %v283 = vcombine.low %v275, %v282
        %v284 = vcombine.low %v255, %v256
        %v285 = vcombine.low %v257, %v258
        %v287 = vunpack.c.l.s4 1983009808
        %v288 = vunpack.c.0.s8 %v287
        %v289 = vlaneseq
        %v290 = vshrl.u32 %v289, 7
        %v291 = vsub.s32 %v288, %v290
        %v292 = vrot.slane %v284, %v291
        %v294 = vunpack.c.l.s4 1983009808
        %v295 = vunpack.c.0.s8 %v294
        %v296 = vlaneseq
        %v297 = vshrl.u32 %v296, 7
        %v298 = vsub.s32 %v295, %v297
        %v299 = vrot.slane %v285, %v298
        %v300 = vcombine.low %v292, %v299
        %vm301 = vcmask 1044484
        %v302 = vsel %vm301, %v283, %v283
        %vm303 = vcmask 1046534
        %v304 = vsel %vm303, %v283, %v302
        %v305 = vrot.slane %v300, 7
        %vm306 = vcmask 1041409
        %v307 = vsel %vm306, %v305, %v304
        %vm308 = vcmask 1043459
        %v309 = vsel %vm308, %v305, %v307
        %vm310 = vcmask 1045509
        %v311 = vsel %vm310, %v305, %v309
        %vm312 = vcmask 1047559
        %v313 = vsel %vm312, %v305, %v311
        %315 = vst [vmem:[%s167] sm:$0xff] %v313
        %s316 = smul.u32 4, %s12
        %p317 = scmp.lt.s32.totalorder %s316, 7
        %s318 = scalar_select %p317, %s316, 7
        %s319 = smul.addr %s318, 2
        %s320 = scalar_lea.vmem %s1, %s319
        // Predicated region
        $region48: #{cnn_forward.8} parent=42 // pred_check
          %p321 = pneg %p56
        $region49: #{cnn_forward.8} parent=42 // pred_check_branch
          %323 = sbr.rel (%p321) target = $region51
        $region50: #{cnn_forward.8} parent=42 // pred_region
          %s324 = smul.u32 4, %s12
        $region51: #{cnn_forward.8} parent=42 // pred_fallthru
          _
      $region43: #{cnn_forward.8} parent=5 // pred_fallthru
        _
      %p325 = scmp.le.s32.totalorder 2, %s7
      // Predicated region
      $region52: #{cnn_forward.8} parent=5 // pred_check
        %p326 = pneg %p325
      $region53: #{cnn_forward.8} parent=5 // pred_check_branch
        %328 = sbr.rel (%p326) target = $region55
      $region54: #{cnn_forward.8} parent=5 // pred_region
        %s329 = ssub.s32 %s7, 2
        // Predicated region
        $region56: #{cnn_forward.8} parent=54 // pred_check
          %p330 = pneg %p62
        $region57: #{cnn_forward.8} parent=54 // pred_check_branch
          %332 = sbr.rel (%p330) target = $region59
        $region58: #{cnn_forward.8} parent=54 // pred_region
          %s333 = smul.u32 4, %s13
          %p334 = scmp.lt.s32.totalorder %s333, 7
          %s335 = scalar_select %p334, %s333, 7
          %s336 = smul.addr %s335, 2
          %s337 = scalar_lea.vmem %s1, %s336
        $region59: #{cnn_forward.8} parent=54 // pred_fallthru
          _
      $region55: #{cnn_forward.8} parent=5 // pred_fallthru
        _
    $region6: #{cnn_forward.8} parent=1 // loop_footer
      %s11 = sadd.s32 1, %s7
    $region7: #{cnn_forward.8} parent=1 // loop_footer_branch
      %6 = sbr.rel target = $region3
    $region8: #{cnn_forward.8} parent=1 // loop_exit
      _

// kernel: cnn_forward.9
$region0: #{cnn_forward.9}
  #allocation0 [shape = 'u32[]', space=smem, size = 0x4, offset = 0x4, fixed_abs, tag = 'smem constant byte address 0x4 - core index']
  #allocation1 [shape = 'u32[144,128]{1,0:T(1,128)}', space=vmem, size = 0x12000, scoped, tag = 'internal scratch']
  %s0 = inlined_call_operand.vmem [shape: bf16[16,1024], index: 0, kind: input, shape index: {}]
  %s1 = inlined_call_operand.vmem [shape: bf16[1024,128], index: 1, kind: input, shape index: {}]
  %s2 = inlined_call_operand.vmem [shape: f32[1,128], index: 2, kind: input, shape index: {}]
  %s3 = inlined_call_operand.vmem [shape: f32[16,128], index: 3, kind: output, shape index: {}]
  %s4 = sld [smem:[#allocation0]]
  $region76: #{cnn_forward.9} parent=0
    _
  %s6 = ssub.s32 1, %s4
  %s7 = scalar_select 0, %s6, %s4
  $region1: #{cnn_forward.9} parent=0
    #allocation2 [shape = 'u8[32768]{0}', space=vmem, size = 0x8000, scoped, tag = 'input window, operand 0']
    loop: start=0, step=1, limit=4
    $region2: #{cnn_forward.9} parent=1 // loop_pre_header
      _
    $region3: #{cnn_forward.9} parent=1 // loop_header
      %s9 = sphi 0, %s13
      %p10 = scmp.ge.s32.totalorder %s9, 4
      %s16 = sphi 0, %s35
      %s17 = sphi 0, %s31
      %s18 = sphi 0, %s27
      %s19 = sphi 0, %s16
      %s20 = sphi 0, %s17
      %s21 = sphi 0, %s18
      %s22 = sphi 0, %s19
      %s23 = sphi 0, %s20
      %s24 = sphi 0, %s21
      %s40 = sphi 0, %s42
      %s43 = sphi 0, %s40
      %s44 = sphi 0, %s43
      %s60 = sphi 0, %s44
      %s68 = sphi 0, %s70
      %s71 = sphi 0, %s68
      %s72 = sphi 0, %s71
      %s88 = sphi 0, %s72
      %s94 = sphi 0, %s96
      %s97 = sphi 0, %s94
      %s98 = sphi 0, %s97
      %s114 = sphi 0, %s98
      %s122 = sphi 0, %s124
      %s125 = sphi 0, %s122
      %s126 = sphi 0, %s125
      %s142 = sphi 0, %s126
    $region4: #{cnn_forward.9} parent=1 // loop_header_branch
      %12 = sbr.rel (%p10) target = $region8
    $region5: #{cnn_forward.9} parent=1 // loop_body
      %s14 = ssub.s32 %s9, 1
      %s15 = ssub.s32 %s9, 2
      %s25 = sadd.s32 1, %s18
      %p26 = scmp.ge.s32.totalorder %s25, 2
      %s27 = scalar_select %p26, 0, %s25
      %s28 = sadd.s32 1, %s17
      %s29 = scalar_select %p26, %s28, %s17
      %p30 = scmp.ge.s32.totalorder %s29, 1
      %s31 = scalar_select %p30, 0, %s29
      %s32 = sadd.s32 1, %s16
      %s33 = scalar_select %p30, %s32, %s16
      %p34 = scmp.ge.s32.totalorder %s33, 1
      %s35 = scalar_select %p34, 0, %s33
      %s36 = ssub.s32 %s16, %s35
      %s37 = ssub.s32 %s18, %s27
      %s38 = sor.u32 %s36, %s37
      %p39 = scmp.eq.s32.totalorder %s38, 0
      %s41 = sadd.s32 %s40, 1
      %s42 = scalar_select %p39, %s40, %s41
      %p45 = pneg %p39
      %p46 = scmp.eq.s32.totalorder %s9, 1
      %p47 = por %p45, %p46
      %p48 = scmp.ne.s32.totalorder %s40, %s43
      %p49 = scmp.eq.s32.totalorder %s9, 0
      %p50 = por %p48, %p49
      %p51 = scmp.ne.s32.totalorder %s40, %s43
      %p52 = scmp.eq.s32.totalorder %s14, 1
      %p53 = por %p51, %p52
      %p54 = scmp.ne.s32.totalorder %s43, %s44
      %p55 = scmp.eq.s32.totalorder %s14, 0
      %p56 = por %p54, %p55
      %p57 = scmp.ne.s32.totalorder %s43, %s44
      %p58 = scmp.eq.s32.totalorder %s15, 1
      %p59 = por %p57, %p58
      %p61 = scmp.ne.s32.totalorder %s44, %s60
      %p62 = scmp.eq.s32.totalorder %s15, 0
      %p63 = por %p61, %p62
      %s64 = ssub.s32 %s18, %s27
      %s65 = ssub.s32 %s17, %s31
      %s66 = sor.u32 %s64, %s65
      %p67 = scmp.eq.s32.totalorder %s66, 0
      %s69 = sadd.s32 %s68, 1
      %s70 = scalar_select %p67, %s68, %s69
      %p73 = pneg %p67
      %p74 = scmp.eq.s32.totalorder %s9, 1
      %p75 = por %p73, %p74
      %p76 = scmp.ne.s32.totalorder %s68, %s71
      %p77 = scmp.eq.s32.totalorder %s9, 0
      %p78 = por %p76, %p77
      %p79 = scmp.ne.s32.totalorder %s68, %s71
      %p80 = scmp.eq.s32.totalorder %s14, 1
      %p81 = por %p79, %p80
      %p82 = scmp.ne.s32.totalorder %s71, %s72
      %p83 = scmp.eq.s32.totalorder %s14, 0
      %p84 = por %p82, %p83
      %p85 = scmp.ne.s32.totalorder %s71, %s72
      %p86 = scmp.eq.s32.totalorder %s15, 1
      %p87 = por %p85, %p86
      %p89 = scmp.ne.s32.totalorder %s72, %s88
      %p90 = scmp.eq.s32.totalorder %s15, 0
      %p91 = por %p89, %p90
      %s92 = ssub.s32 %s17, %s31
      %p93 = scmp.eq.s32.totalorder %s92, 0
      %s95 = sadd.s32 %s94, 1
      %s96 = scalar_select %p93, %s94, %s95
      %p99 = pneg %p93
      %p100 = scmp.eq.s32.totalorder %s9, 1
      %p101 = por %p99, %p100
      %p102 = scmp.ne.s32.totalorder %s94, %s97
      %p103 = scmp.eq.s32.totalorder %s9, 0
      %p104 = por %p102, %p103
      %p105 = scmp.ne.s32.totalorder %s94, %s97
      %p106 = scmp.eq.s32.totalorder %s14, 1
      %p107 = por %p105, %p106
      %p108 = scmp.ne.s32.totalorder %s97, %s98
      %p109 = scmp.eq.s32.totalorder %s14, 0
      %p110 = por %p108, %p109
      %p111 = scmp.ne.s32.totalorder %s97, %s98
      %p112 = scmp.eq.s32.totalorder %s15, 1
      %p113 = por %p111, %p112
      %p115 = scmp.ne.s32.totalorder %s98, %s114
      %p116 = scmp.eq.s32.totalorder %s15, 0
      %p117 = por %p115, %p116
      %s118 = ssub.s32 %s16, %s35
      %s119 = ssub.s32 %s17, %s31
      %s120 = sor.u32 %s118, %s119
      %p121 = scmp.eq.s32.totalorder %s120, 0
      %s123 = sadd.s32 %s122, 1
      %s124 = scalar_select %p121, %s122, %s123
      %p127 = pneg %p121
      %p128 = scmp.eq.s32.totalorder %s9, 1
      %p129 = por %p127, %p128
      %p130 = scmp.ne.s32.totalorder %s122, %s125
      %p131 = scmp.eq.s32.totalorder %s9, 0
      %p132 = por %p130, %p131
      %p133 = scmp.ne.s32.totalorder %s122, %s125
      %p134 = scmp.eq.s32.totalorder %s14, 1
      %p135 = por %p133, %p134
      %p136 = scmp.ne.s32.totalorder %s125, %s126
      %p137 = scmp.eq.s32.totalorder %s14, 0
      %p138 = por %p136, %p137
      %p139 = scmp.ne.s32.totalorder %s125, %s126
      %p140 = scmp.eq.s32.totalorder %s15, 1
      %p141 = por %p139, %p140
      %p143 = scmp.ne.s32.totalorder %s126, %s142
      %p144 = scmp.eq.s32.totalorder %s15, 0
      %p145 = por %p143, %p144
      %p146 = scmp.le.s32.totalorder 1, %s9
      %p147 = scmp.lt.s32.totalorder %s9, 3
      %p148 = pnand %p146, %p147
      %p149 = pneg %p148
      // Predicated region
      $region9: #{cnn_forward.9} parent=5 // pred_check
        _
      $region10: #{cnn_forward.9} parent=5 // pred_check_branch
        %151 = sbr.rel (%p148) target = $region12
      $region11: #{cnn_forward.9} parent=5 // pred_region
        %s152 = ssub.s32 %s9, 1
        // Predicated region
        $region13: #{cnn_forward.9} parent=11 // pred_check
          %p153 = pneg %p110
        $region14: #{cnn_forward.9} parent=11 // pred_check_branch
          %155 = sbr.rel (%p153) target = $region16
        $region15: #{cnn_forward.9} parent=11 // pred_region
          %p156 = scmp.lt.s32.totalorder %s20, 0
          %s157 = scalar_select %p156, %s20, 0
          %s158 = scalar_lea.vmem %s2, %s157
        $region16: #{cnn_forward.9} parent=11 // pred_fallthru
          _
      $region12: #{cnn_forward.9} parent=5 // pred_fallthru
        _
      %p159 = scmp.lt.s32.totalorder %s9, 2
      // Predicated region
      $region17: #{cnn_forward.9} parent=5 // pred_check
        %p160 = pneg %p159
      $region18: #{cnn_forward.9} parent=5 // pred_check_branch
        %162 = sbr.rel (%p160) target = $region20
      $region19: #{cnn_forward.9} parent=5 // pred_region
        // Predicated region
        $region21: #{cnn_forward.9} parent=19 // pred_check
          %p163 = pneg %p50
        $region22: #{cnn_forward.9} parent=19 // pred_check_branch
          %165 = sbr.rel (%p163) target = $region24
        $region23: #{cnn_forward.9} parent=19 // pred_region
          %s166 = sand.u32 %s40, 1
          %s167 = sand.u32 %s40, 1
          %s168 = smul.addr %s167, 32
          %s169 = scalar_lea.vmem [#allocation2], %s168
          %s170 = smul.u32 2, %s16
          %s171 = smul.u32 4, %s18
          %s172 = smul.addr %s170, 8
          %s173 = sadd.s32 %s171, %s172
          %s174 = smul.addr %s173, 4
          %s175 = scalar_lea.vmem %s0, %s174
          // Predicated region
          $region25: #{cnn_forward.9} parent=23 // pred_check
            _
          $region26: #{cnn_forward.9} parent=23 // pred_check_branch
            %177 = sbr.rel (0) target = $region28
          $region27: #{cnn_forward.9} parent=23 // pred_region
            // Predicated region
            $region29: #{cnn_forward.9} parent=27 // pred_check
              _
            $region30: #{cnn_forward.9} parent=27 // pred_check_branch
              %179 = sbr.rel (0) target = $region32
            $region31: #{cnn_forward.9} parent=27 // pred_region
              loop: start=0, step=1, limit=1
              $region33: #{cnn_forward.9} parent=31 // loop_pre_header
                _
              $region34: #{cnn_forward.9} parent=31 // loop_header
                %s181 = sphi 0, %s185
                %p182 = scmp.ge.s32.totalorder %s181, 1
                %s186 = sphi %s175, %s175
                %s187 = sphi %s169, %s169
              $region35: #{cnn_forward.9} parent=31 // loop_header_branch
                %184 = sbr.rel (%p182) target = $region39
              $region36: #{cnn_forward.9} parent=31 // loop_body
                %v188 = vld [vmem:[%s186] sm:$0xff]
                %189 = vst [vmem:[%s187] sm:$0xff] %v188
                %v190 = vld [vmem:[%s186 + $0x8] sm:$0xff]
                %191 = vst [vmem:[%s187 + $0x8] sm:$0xff] %v190
                %v192 = vld [vmem:[%s186 + $0x20] sm:$0xff]
                %193 = vst [vmem:[%s187 + $0x10] sm:$0xff] %v192
                %v194 = vld [vmem:[%s186 + $0x28] sm:$0xff]
                %195 = vst [vmem:[%s187 + $0x18] sm:$0xff] %v194
              $region37: #{cnn_forward.9} parent=31 // loop_footer
                %s185 = sadd.s32 1, %s181
              $region38: #{cnn_forward.9} parent=31 // loop_footer_branch
                %180 = sbr.rel target = $region34
              $region39: #{cnn_forward.9} parent=31 // loop_exit
                _
            $region32: #{cnn_forward.9} parent=27 // pred_fallthru
              _
            // Predicated region
            $region40: #{cnn_forward.9} parent=27 // pred_check
              _
            $region41: #{cnn_forward.9} parent=27 // pred_check_branch
              %197 = sbr.rel target = $region43
            $region42: #{cnn_forward.9} parent=27 // pred_region
              _
            $region43: #{cnn_forward.9} parent=27 // pred_fallthru
              _
          $region28: #{cnn_forward.9} parent=23 // pred_fallthru
            _
          %198 = vnop
        $region24: #{cnn_forward.9} parent=19 // pred_fallthru
          _
        // Predicated region
        $region44: #{cnn_forward.9} parent=19 // pred_check
          %p199 = pneg %p78
        $region45: #{cnn_forward.9} parent=19 // pred_check_branch
          %201 = sbr.rel (%p199) target = $region47
        $region46: #{cnn_forward.9} parent=19 // pred_region
          %s202 = smul.u32 64, %s18
          %p203 = scmp.lt.s32.totalorder %s202, 127
          %s204 = scalar_select %p203, %s202, 127
          %p205 = scmp.lt.s32.totalorder %s17, 0
          %s206 = scalar_select %p205, %s17, 0
          %s207 = sadd.s32 %s206, %s204
          %s208 = smul.addr %s207, 4
          %s209 = scalar_lea.vmem %s1, %s208
          %s210 = smul.u32 64, %s18
        $region47: #{cnn_forward.9} parent=19 // pred_fallthru
          _
      $region20: #{cnn_forward.9} parent=5 // pred_fallthru
        _
      %p211 = scmp.le.s32.totalorder 1, %s9
      %p212 = scmp.lt.s32.totalorder %s9, 3
      %p213 = pnand %p211, %p212
      %p214 = pneg %p213
      // Predicated region
      $region48: #{cnn_forward.9} parent=5 // pred_check
        _
      $region49: #{cnn_forward.9} parent=5 // pred_check_branch
        %216 = sbr.rel (%p213) target = $region51
      $region50: #{cnn_forward.9} parent=5 // pred_region
        %s217 = ssub.s32 %s9, 1
        %s218 = sand.u32 %s43, 1
        %s219 = sand.u32 %s43, 1
        %s220 = smul.addr %s219, 32
        %s221 = scalar_lea.vmem [#allocation2], %s220
        // Predicated region
        $region52: #{cnn_forward.9} parent=50 // pred_check
          %p222 = pneg %p56
        $region53: #{cnn_forward.9} parent=50 // pred_check_branch
          %224 = sbr.rel (%p222) target = $region55
        $region54: #{cnn_forward.9} parent=50 // pred_region
          _
        $region55: #{cnn_forward.9} parent=50 // pred_fallthru
          _
        %s225 = sand.u32 %s43, 1
        %s226 = sand.u32 %s43, 1
        %s227 = smul.addr %s226, 32
        %s228 = scalar_lea.vmem [#allocation2], %s227
        %p229 = pneg %p56
        %p230 = pneg %p53
        %s231 = smul.u32 64, %s21
        %p232 = scmp.lt.s32.totalorder %s231, 127
        %s233 = scalar_select %p232, %s231, 127
        %p234 = scmp.lt.s32.totalorder %s20, 0
        %s235 = scalar_select %p234, %s20, 0
        %s236 = sadd.s32 %s235, %s233
        %s237 = smul.addr %s236, 4
        %s238 = scalar_lea.vmem %s1, %s237
        %p239 = pneg %p84
        %p240 = pneg %p81
        %p241 = scmp.lt.s32.totalorder %s20, 0
        %s242 = scalar_select %p241, %s20, 0
        %s243 = scalar_lea.vmem %s2, %s242
        %p244 = pneg %p110
        %p245 = pneg %p107
        %p246 = pneg %p138
        %p247 = pneg %p135
        %s248 = smul.u32 2, %s19
        %p249 = scmp.lt.s32.totalorder %s248, 1
        %s250 = scalar_select %p249, %s248, 1
        %p251 = scmp.lt.s32.totalorder %s20, 0
        %s252 = scalar_select %p251, %s20, 0
        %s253 = sadd.s32 %s252, %s250
        %s254 = smul.addr %s253, 8
        %s255 = scalar_lea.vmem %s3, %s254
        %s256 = smul.u32 2, %s19
        %s257 = smul.u32 4, %s21
        %s258 = smul.u32 64, %s21
        %p259 = scmp.lt.s32.totalorder %s258, 127
        %s260 = scalar_select %p259, %s258, 127
        %p261 = scmp.lt.s32.totalorder %s20, 0
        %s262 = scalar_select %p261, %s20, 0
        %s263 = sadd.s32 %s262, %s260
        %s264 = smul.addr %s263, 4
        %s265 = scalar_lea.vmem %s1, %s264
        %s266 = smul.u32 64, %s21
        %p267 = scmp.lt.s32.totalorder %s20, 0
        %s268 = scalar_select %p267, %s20, 0
        %s269 = scalar_lea.vmem %s2, %s268
        %s270 = smul.u32 2, %s19
        %p271 = scmp.lt.s32.totalorder %s270, 1
        %s272 = scalar_select %p271, %s270, 1
        %p273 = scmp.lt.s32.totalorder %s20, 0
        %s274 = scalar_select %p273, %s20, 0
        %s275 = sadd.s32 %s274, %s272
        %s276 = smul.addr %s275, 8
        %s277 = scalar_lea.vmem %s3, %s276
        %s278 = smul.u32 2, %s19
        %p280 = scmp.eq.s32.totalorder %s21, 0
        // Predicated region
        $region56: #{cnn_forward.9} parent=50 // pred_check
          %p281 = pneg %p280
        $region57: #{cnn_forward.9} parent=50 // pred_check_branch
          %283 = sbr.rel (%p281) target = $region59
        $region58: #{cnn_forward.9} parent=50 // pred_region
          %284 = vst [vmem:[%s277] sm:$0xff] 0.0
          %285 = vst [vmem:[%s277 + $0x8] sm:$0xff] 0.0
        $region59: #{cnn_forward.9} parent=50 // pred_fallthru
          _
        %v286 = vld [vmem:[%s277] sm:$0xff]
        %v287 = vld [vmem:[%s277 + $0x8] sm:$0xff]
        %v288 = vld [vmem:[%s221] sm:$0xff]
        %v289 = vld [vmem:[%s221 + $0x8] sm:$0xff]
        %v290 = vld [vmem:[%s221 + $0x10] sm:$0xff]
        %v291 = vld [vmem:[%s221 + $0x18] sm:$0xff]
        %v292 = vld [vmem:[%s265] sm:$0xf]
        %v293 = vld [vmem:[%s265 + $0x4] sm:$0xf]
        %v294 = vld [vmem:[%s265 + $0x8] sm:$0xf]
        %v295 = vld [vmem:[%s265 + $0xc] sm:$0xf]
        %v296 = vld [vmem:[%s265 + $0x10] sm:$0xf]
        %v297 = vld [vmem:[%s265 + $0x14] sm:$0xf]
        %v298 = vld [vmem:[%s265 + $0x18] sm:$0xf]
        %v299 = vld [vmem:[%s265 + $0x1c] sm:$0xf]
        %v300 = vld [vmem:[%s265 + $0x20] sm:$0xf]
        %v301 = vld [vmem:[%s265 + $0x24] sm:$0xf]
        %v302 = vld [vmem:[%s265 + $0x28] sm:$0xf]
        %v303 = vld [vmem:[%s265 + $0x2c] sm:$0xf]
        %v304 = vld [vmem:[%s265 + $0x30] sm:$0xf]
        %v305 = vld [vmem:[%s265 + $0x34] sm:$0xf]
        %v306 = vld [vmem:[%s265 + $0x38] sm:$0xf]
        %v307 = vld [vmem:[%s265 + $0x3c] sm:$0xf]
        %v308 = vld [vmem:[%s265 + $0x40] sm:$0xf]
        %v309 = vld [vmem:[%s265 + $0x44] sm:$0xf]
        %v310 = vld [vmem:[%s265 + $0x48] sm:$0xf]
        %v311 = vld [vmem:[%s265 + $0x4c] sm:$0xf]
        %v312 = vld [vmem:[%s265 + $0x50] sm:$0xf]
        %v313 = vld [vmem:[%s265 + $0x54] sm:$0xf]
        %v314 = vld [vmem:[%s265 + $0x58] sm:$0xf]
        %v315 = vld [vmem:[%s265 + $0x5c] sm:$0xf]
        %v316 = vld [vmem:[%s265 + $0x60] sm:$0xf]
        %v317 = vld [vmem:[%s265 + $0x64] sm:$0xf]
        %v318 = vld [vmem:[%s265 + $0x68] sm:$0xf]
        %v319 = vld [vmem:[%s265 + $0x6c] sm:$0xf]
        %v320 = vld [vmem:[%s265 + $0x70] sm:$0xf]
        %v321 = vld [vmem:[%s265 + $0x74] sm:$0xf]
        %v322 = vld [vmem:[%s265 + $0x78] sm:$0xf]
        %v323 = vld [vmem:[%s265 + $0x7c] sm:$0xf]
        %v324 = vld [vmem:[%s265 + $0x80] sm:$0xf]
        %v325 = vld [vmem:[%s265 + $0x84] sm:$0xf]
        %v326 = vld [vmem:[%s265 + $0x88] sm:$0xf]
        %v327 = vld [vmem:[%s265 + $0x8c] sm:$0xf]
        %v328 = vld [vmem:[%s265 + $0x90] sm:$0xf]
        %v329 = vld [vmem:[%s265 + $0x94] sm:$0xf]
        %v330 = vld [vmem:[%s265 + $0x98] sm:$0xf]
        %v331 = vld [vmem:[%s265 + $0x9c] sm:$0xf]
        %v332 = vld [vmem:[%s265 + $0xa0] sm:$0xf]
        %v333 = vld [vmem:[%s265 + $0xa4] sm:$0xf]
        %v334 = vld [vmem:[%s265 + $0xa8] sm:$0xf]
        %v335 = vld [vmem:[%s265 + $0xac] sm:$0xf]
        %v336 = vld [vmem:[%s265 + $0xb0] sm:$0xf]
        %v337 = vld [vmem:[%s265 + $0xb4] sm:$0xf]
        %v338 = vld [vmem:[%s265 + $0xb8] sm:$0xf]
        %v339 = vld [vmem:[%s265 + $0xbc] sm:$0xf]
        %v340 = vld [vmem:[%s265 + $0xc0] sm:$0xf]
        %v341 = vld [vmem:[%s265 + $0xc4] sm:$0xf]
        %v342 = vld [vmem:[%s265 + $0xc8] sm:$0xf]
        %v343 = vld [vmem:[%s265 + $0xcc] sm:$0xf]
        %v344 = vld [vmem:[%s265 + $0xd0] sm:$0xf]
        %v345 = vld [vmem:[%s265 + $0xd4] sm:$0xf]
        %v346 = vld [vmem:[%s265 + $0xd8] sm:$0xf]
        %v347 = vld [vmem:[%s265 + $0xdc] sm:$0xf]
        %v348 = vld [vmem:[%s265 + $0xe0] sm:$0xf]
        %v349 = vld [vmem:[%s265 + $0xe4] sm:$0xf]
        %v350 = vld [vmem:[%s265 + $0xe8] sm:$0xf]
        %v351 = vld [vmem:[%s265 + $0xec] sm:$0xf]
        %v352 = vld [vmem:[%s265 + $0xf0] sm:$0xf]
        %v353 = vld [vmem:[%s265 + $0xf4] sm:$0xf]
        %v354 = vld [vmem:[%s265 + $0xf8] sm:$0xf]
        %v355 = vld [vmem:[%s265 + $0xfc] sm:$0xf]
        %v360 = vunpack.c.l.b16 %v288
        %v361 = vunpack.c.h.b16 %v288
        %v362 = vunpack.c.l.b16 %v289
        %v363 = vunpack.c.h.b16 %v289
        %v364 = vunpack.c.l.b16 %v290
        %v365 = vunpack.c.h.b16 %v290
        %v366 = vunpack.c.l.b16 %v291
        %v367 = vunpack.c.h.b16 %v291
        %v368 = vpack.c.b16 %v364, %v360
        %v369 = vpack.c.b16 %v365, %v361
        %v370 = vpack.c.b16 %v366, %v362
        %v371 = vpack.c.b16 %v367, %v363
        %v440 = vunpack.c.l.b16 %v292
        %v441 = vunpack.c.l.b16 %v293
        %v442 = vunpack.c.l.b16 %v294
        %v443 = vunpack.c.l.b16 %v295
        %v444 = vunpack.c.l.b16 %v296
        %v445 = vunpack.c.l.b16 %v297
        %v446 = vunpack.c.l.b16 %v298
        %v447 = vunpack.c.l.b16 %v299
        %v448 = vunpack.c.l.b16 %v300
        %v449 = vunpack.c.l.b16 %v301
        %v450 = vunpack.c.l.b16 %v302
        %v451 = vunpack.c.l.b16 %v303
        %v452 = vunpack.c.l.b16 %v304
        %v453 = vunpack.c.l.b16 %v305
        %v454 = vunpack.c.l.b16 %v306
        %v455 = vunpack.c.l.b16 %v307
        %v456 = vunpack.c.l.b16 %v308
        %v457 = vunpack.c.l.b16 %v309
        %v458 = vunpack.c.l.b16 %v310
        %v459 = vunpack.c.l.b16 %v311
        %v460 = vunpack.c.l.b16 %v312
        %v461 = vunpack.c.l.b16 %v313
        %v462 = vunpack.c.l.b16 %v314
        %v463 = vunpack.c.l.b16 %v315
        %v464 = vunpack.c.l.b16 %v316
        %v465 = vunpack.c.l.b16 %v317
        %v466 = vunpack.c.l.b16 %v318
        %v467 = vunpack.c.l.b16 %v319
        %v468 = vunpack.c.l.b16 %v320
        %v469 = vunpack.c.l.b16 %v321
        %v470 = vunpack.c.l.b16 %v322
        %v471 = vunpack.c.l.b16 %v323
        %v472 = vunpack.c.l.b16 %v324
        %v473 = vunpack.c.l.b16 %v325
        %v474 = vunpack.c.l.b16 %v326
        %v475 = vunpack.c.l.b16 %v327
        %v476 = vunpack.c.l.b16 %v328
        %v477 = vunpack.c.l.b16 %v329
        %v478 = vunpack.c.l.b16 %v330
        %v479 = vunpack.c.l.b16 %v331
        %v480 = vunpack.c.l.b16 %v332
        %v481 = vunpack.c.l.b16 %v333
        %v482 = vunpack.c.l.b16 %v334
        %v483 = vunpack.c.l.b16 %v335
        %v484 = vunpack.c.l.b16 %v336
        %v485 = vunpack.c.l.b16 %v337
        %v486 = vunpack.c.l.b16 %v338
        %v487 = vunpack.c.l.b16 %v339
        %v488 = vunpack.c.l.b16 %v340
        %v489 = vunpack.c.l.b16 %v341
        %v490 = vunpack.c.l.b16 %v342
        %v491 = vunpack.c.l.b16 %v343
        %v492 = vunpack.c.l.b16 %v344
        %v493 = vunpack.c.l.b16 %v345
        %v494 = vunpack.c.l.b16 %v346
        %v495 = vunpack.c.l.b16 %v347
        %v496 = vunpack.c.l.b16 %v348
        %v497 = vunpack.c.l.b16 %v349
        %v498 = vunpack.c.l.b16 %v350
        %v499 = vunpack.c.l.b16 %v351
        %v500 = vunpack.c.l.b16 %v352
        %v501 = vunpack.c.l.b16 %v353
        %v502 = vunpack.c.l.b16 %v354
        %v503 = vunpack.c.l.b16 %v355
        %v504 = vpack.c.b16 %v441, %v440
        %v505 = vpack.c.b16 %v443, %v442
        %v506 = vpack.c.b16 %v445, %v444
        %v507 = vpack.c.b16 %v447, %v446
        %v508 = vpack.c.b16 %v449, %v448
        %v509 = vpack.c.b16 %v451, %v450
        %v510 = vpack.c.b16 %v453, %v452
        %v511 = vpack.c.b16 %v455, %v454
        %v512 = vpack.c.b16 %v457, %v456
        %v513 = vpack.c.b16 %v459, %v458
        %v514 = vpack.c.b16 %v461, %v460
        %v515 = vpack.c.b16 %v463, %v462
        %v516 = vpack.c.b16 %v465, %v464
        %v517 = vpack.c.b16 %v467, %v466
        %v518 = vpack.c.b16 %v469, %v468
        %v519 = vpack.c.b16 %v471, %v470
        %v520 = vpack.c.b16 %v473, %v472
        %v521 = vpack.c.b16 %v475, %v474
        %v522 = vpack.c.b16 %v477, %v476
        %v523 = vpack.c.b16 %v479, %v478
        %v524 = vpack.c.b16 %v481, %v480
        %v525 = vpack.c.b16 %v483, %v482
        %v526 = vpack.c.b16 %v485, %v484
        %v527 = vpack.c.b16 %v487, %v486
        %v528 = vpack.c.b16 %v489, %v488
        %v529 = vpack.c.b16 %v491, %v490
        %v530 = vpack.c.b16 %v493, %v492
        %v531 = vpack.c.b16 %v495, %v494
        %v532 = vpack.c.b16 %v497, %v496
        %v533 = vpack.c.b16 %v499, %v498
        %v534 = vpack.c.b16 %v501, %v500
        %v535 = vpack.c.b16 %v503, %v502
        %568 = vmatprep.subr.bf16.mxu0 0
        %569 = vmatpush1.bf16.msra.mxu0 %v504
        %570 = vmatprep.subr.bf16.mxu0 0
        %571 = vmatpush1.bf16.msra.mxu0 %v505
        %572 = vmatprep.subr.bf16.mxu0 0
        %573 = vmatpush1.bf16.msra.mxu0 %v506
        %574 = vmatprep.subr.bf16.mxu0 0
        %575 = vmatpush1.bf16.msra.mxu0 %v507
        %576 = vmatprep.subr.bf16.mxu0 0
        %577 = vmatpush1.bf16.msra.mxu0 %v508
        %578 = vmatprep.subr.bf16.mxu0 0
        %579 = vmatpush1.bf16.msra.mxu0 %v509
        %580 = vmatprep.subr.bf16.mxu0 0
        %581 = vmatpush1.bf16.msra.mxu0 %v510
        %582 = vmatprep.subr.bf16.mxu0 0
        %583 = vmatpush1.bf16.msra.mxu0 %v511
        %584 = vmatprep.subr.bf16.mxu0 0
        %585 = vmatpush1.bf16.msra.mxu0 %v512
        %586 = vmatprep.subr.bf16.mxu0 0
        %587 = vmatpush1.bf16.msra.mxu0 %v513
        %588 = vmatprep.subr.bf16.mxu0 0
        %589 = vmatpush1.bf16.msra.mxu0 %v514
        %590 = vmatprep.subr.bf16.mxu0 0
        %591 = vmatpush1.bf16.msra.mxu0 %v515
        %592 = vmatprep.subr.bf16.mxu0 0
        %593 = vmatpush1.bf16.msra.mxu0 %v516
        %594 = vmatprep.subr.bf16.mxu0 0
        %595 = vmatpush1.bf16.msra.mxu0 %v517
        %596 = vmatprep.subr.bf16.mxu0 0
        %597 = vmatpush1.bf16.msra.mxu0 %v518
        %598 = vmatprep.subr.bf16.mxu0 0
        %599 = vmatpush1.bf16.msra.mxu0 %v519
        %600 = vmatprep.mubr.bf16.mxu0 %v369
        %601 = vmatmul.mubr.bf16.gmra.mrb[0].mxu0 %v368
        %v602 = vpop.f32.mrb[0].mxu0
        %v603 = vadd.f32 0.0, %v602
        %v604 = vpop.f32.mrb[0].mxu0
        %v605 = vpop.f32.mrb[0].mxu0
        %v606 = vadd.f32 0.0, %v605
        %v607 = vpop.f32.mrb[0].mxu0
        %608 = vdwg.mxu0
        %609 = vmatprep.subr.bf16.mxu0 0
        %610 = vmatpush1.bf16.msra.mxu0 %v520
        %611 = vmatprep.subr.bf16.mxu0 0
        %612 = vmatpush1.bf16.msra.mxu0 %v521
        %613 = vmatprep.subr.bf16.mxu0 0
        %614 = vmatpush1.bf16.msra.mxu0 %v522
        %615 = vmatprep.subr.bf16.mxu0 0
        %616 = vmatpush1.bf16.msra.mxu0 %v523
        %617 = vmatprep.subr.bf16.mxu0 0
        %618 = vmatpush1.bf16.msra.mxu0 %v524
        %619 = vmatprep.subr.bf16.mxu0 0
        %620 = vmatpush1.bf16.msra.mxu0 %v525
        %621 = vmatprep.subr.bf16.mxu0 0
        %622 = vmatpush1.bf16.msra.mxu0 %v526
        %623 = vmatprep.subr.bf16.mxu0 0
        %624 = vmatpush1.bf16.msra.mxu0 %v527
        %625 = vmatprep.subr.bf16.mxu0 0
        %626 = vmatpush1.bf16.msra.mxu0 %v528
        %627 = vmatprep.subr.bf16.mxu0 0
        %628 = vmatpush1.bf16.msra.mxu0 %v529
        %629 = vmatprep.subr.bf16.mxu0 0
        %630 = vmatpush1.bf16.msra.mxu0 %v530
        %631 = vmatprep.subr.bf16.mxu0 0
        %632 = vmatpush1.bf16.msra.mxu0 %v531
        %633 = vmatprep.subr.bf16.mxu0 0
        %634 = vmatpush1.bf16.msra.mxu0 %v532
        %635 = vmatprep.subr.bf16.mxu0 0
        %636 = vmatpush1.bf16.msra.mxu0 %v533
        %637 = vmatprep.subr.bf16.mxu0 0
        %638 = vmatpush1.bf16.msra.mxu0 %v534
        %639 = vmatprep.subr.bf16.mxu0 0
        %640 = vmatpush1.bf16.msra.mxu0 %v535
        %641 = vmatprep.mubr.bf16.mxu0 %v371
        %642 = vmatmul.mubr.bf16.gmra.mrb[0].mxu0 %v370
        %v643 = vpop.f32.mrb[0].mxu0
        %v644 = vadd.f32 %v603, %v643
        %v645 = vpop.f32.mrb[0].mxu0
        %v646 = vpop.f32.mrb[0].mxu0
        %v647 = vadd.f32 %v606, %v646
        %v648 = vpop.f32.mrb[0].mxu0
        %649 = vdwg.mxu0
        %v650 = vadd.f32 %v286, %v644
        %v651 = vadd.f32 %v287, %v647
        %652 = vst [vmem:[%s277] sm:$0xff] %v650
        %653 = vst [vmem:[%s277 + $0x8] sm:$0xff] %v651
        %p654 = scmp.eq.s32.totalorder %s21, 1
        // Predicated region
        $region60: #{cnn_forward.9} parent=50 // pred_check
          %p655 = pneg %p654
        $region61: #{cnn_forward.9} parent=50 // pred_check_branch
          %657 = sbr.rel (%p655) target = $region63
        $region62: #{cnn_forward.9} parent=50 // pred_region
          %v658 = vld [vmem:[%s277] sm:$0xff]
          %v659 = vld [vmem:[%s277 + $0x8] sm:$0xff]
          %v660 = vld [vmem:[%s269] sm:$0x1]
          %v662 = vlaneseq
          %v663 = vshrl.u32 %v662, 7
          %v664 = vsub.s32 0, %v663
          %v665 = vrot.slane %v660, %v664
          %v667 = vadd.f32 %v658, %v665
          %v668 = vadd.f32 %v659, %v665
          %669 = vst [vmem:[%s277] sm:$0xff] %v667
          %670 = vst [vmem:[%s277 + $0x8] sm:$0xff] %v668
        $region63: #{cnn_forward.9} parent=50 // pred_fallthru
          _
        %s671 = smul.u32 2, %s19
        %p672 = scmp.lt.s32.totalorder %s671, 1
        %s673 = scalar_select %p672, %s671, 1
        %p674 = scmp.lt.s32.totalorder %s20, 0
        %s675 = scalar_select %p674, %s20, 0
        %s676 = sadd.s32 %s675, %s673
        %s677 = smul.addr %s676, 8
        %s678 = scalar_lea.vmem %s3, %s677
        // Predicated region
        $region64: #{cnn_forward.9} parent=50 // pred_check
          %p679 = pneg %p135
        $region65: #{cnn_forward.9} parent=50 // pred_check_branch
          %681 = sbr.rel (%p679) target = $region67
        $region66: #{cnn_forward.9} parent=50 // pred_region
          %s682 = smul.u32 2, %s19
        $region67: #{cnn_forward.9} parent=50 // pred_fallthru
          _
        // Predicated region
        $region68: #{cnn_forward.9} parent=50 // pred_check
          %p683 = pneg %p135
        $region69: #{cnn_forward.9} parent=50 // pred_check_branch
          %685 = sbr.rel (%p683) target = $region71
        $region70: #{cnn_forward.9} parent=50 // pred_region
          %s686 = smul.u32 2, %s19
          %p687 = scmp.lt.s32.totalorder %s686, 1
          %s688 = scalar_select %p687, %s686, 1
          %p689 = scmp.lt.s32.totalorder %s20, 0
          %s690 = scalar_select %p689, %s20, 0
          %s691 = sadd.s32 %s690, %s688
          %s692 = smul.addr %s691, 8
          %s693 = scalar_lea.vmem %s3, %s692
        $region71: #{cnn_forward.9} parent=50 // pred_fallthru
          _
      $region51: #{cnn_forward.9} parent=5 // pred_fallthru
        _
      %p694 = scmp.le.s32.totalorder 2, %s9
      // Predicated region
      $region72: #{cnn_forward.9} parent=5 // pred_check
        %p695 = pneg %p694
      $region73: #{cnn_forward.9} parent=5 // pred_check_branch
        %697 = sbr.rel (%p695) target = $region75
      $region74: #{cnn_forward.9} parent=5 // pred_region
        %s698 = ssub.s32 %s9, 2
      $region75: #{cnn_forward.9} parent=5 // pred_fallthru
        _
    $region6: #{cnn_forward.9} parent=1 // loop_footer
      %s13 = sadd.s32 1, %s9
    $region7: #{cnn_forward.9} parent=1 // loop_footer_branch
      %8 = sbr.rel target = $region3
    $region8: #{cnn_forward.9} parent=1 // loop_exit
      _

</llo_original>
